<compile_context>
chip_gen: v6e
topology: v6e:2x2x1
jax: 0.10.0
libtpu: 0.0.40
codegen_flags: <defaults>
</compile_context>

<pallas_src>
import jax
import jax.numpy as jnp
from jax.experimental import pallas as pl
from jax.experimental.pallas import tpu as pltpu


def hin2vec_kernel(nei_ids_ref, end_ids_ref, path_ids_ref,
                   nei_tbl_ref, end_tbl_ref, path_tbl_ref, bcomb_ref, out_ref):
    # nei_ids_ref : (TB, E*K) int32  neighbor ids, pre-offset by e*NSp
    # end_ids_ref : (TB, 1)   int32  end-node ids
    # path_ids_ref: (TB, 1)   int32  path ids
    # nei_tbl_ref : (E*NSp, D) f32   folded (1/K)*embeds_start @ W1.T @ W2_e.T (resident)
    # end_tbl_ref : (NSp, D)   f32   end-node embedding table (resident)
    # path_tbl_ref: (PSp, D)   f32   path embedding table (resident)
    # bcomb_ref   : (1, D)     f32   folded bias  tile(b1, E) @ W2.T + b2
    # out_ref     : (1, TB)    f32   sigmoid(sum_d(z * end * sigmoid(path)))
    tb, ek = nei_ids_ref.shape
    e_nsp, d = nei_tbl_ref.shape
    nsp = end_tbl_ref.shape[0]
    psp = path_tbl_ref.shape[0]

    # ---- fused neighbor gather + mean-over-K + trans1 + trans2 -------------
    # Count matrix: counts[b, e*NSp + n] = #{k : nei_id[b,e,k] == n}; the /K mean
    # and both linear layers are folded into nei_tbl, so z = counts @ F + b_comb.
    ids = nei_ids_ref[...]                                            # (TB, E*K)
    iota_nei = jax.lax.broadcasted_iota(jnp.int32, (tb, e_nsp), 1)
    counts = (ids[:, 0:1] == iota_nei).astype(jnp.float32)
    for j in range(1, ek):                                            # E*K small -> unrolled
        counts = counts + (ids[:, j:j + 1] == iota_nei).astype(jnp.float32)
    z = jnp.dot(counts, nei_tbl_ref[...],
                preferred_element_type=jnp.float32) + bcomb_ref[...]  # (TB, D)

    # ---- fused end-node / path gathers (one-hot @ resident table) ----------
    iota_end = jax.lax.broadcasted_iota(jnp.int32, (tb, nsp), 1)
    oh_end = (end_ids_ref[...] == iota_end).astype(jnp.float32)
    end_e = jnp.dot(oh_end, end_tbl_ref[...],
                    preferred_element_type=jnp.float32)               # (TB, D)

    iota_path = jax.lax.broadcasted_iota(jnp.int32, (tb, psp), 1)
    oh_path = (path_ids_ref[...] == iota_path).astype(jnp.float32)
    path_e = jnp.dot(oh_path, path_tbl_ref[...],
                     preferred_element_type=jnp.float32)              # (TB, D)

    agg = z * end_e * jax.nn.sigmoid(path_e)                          # (TB, D) f32

    # Row reduction over D as ones(1,D) @ agg^T -> (1, TB) lands lane-major
    # (unmasked lane-dense store).  Possible XLU transpose accepted (slack).
    ones_row = jnp.ones((1, d), jnp.float32)
    row = jax.lax.dot_general(ones_row, agg, (((1,), (1,)), ((), ())),
                              preferred_element_type=jnp.float32)     # (1, TB)
    out_ref[...] = jax.nn.sigmoid(row)


def _pick_block(batch, requested):
    """Pick the batch tile: as large as requested, but keep >=2 grid steps when
    the batch allows it so the 'parallel' axis can shard across v7x's two
    TensorCores (no effect on single-TC v5e/v6e)."""
    tb = max(128, (requested // 128) * 128)
    while tb > 128 and pl.cdiv(batch, tb) < 2:
        tb = max(128, ((tb // 2) // 128) * 128)
    return tb


def hin2vec_forward(nei_tbl, start_node, end_node, path,
                    embeds_start, embeds_end, embeds_path,
                    w1, b1, w2, b2, *, block_b=512):
    """HIN2vec forward (sigmoid regularizer).

    nei_tbl     : (NS, E, K) int32 dense neighbor table: K sampled neighbor ids
                  per node per edge type (fixed-K padding of neighbors[n][e]).
    start_node  : (B,) int32     end_node : (B,) int32     path : (B,) int32
    embeds_start: (NS, D) f32    embeds_end: (NS, D) f32   embeds_path: (PS, D) f32
    w1, b1      : trans1 params (nn.Linear: y = x @ w1.T + b1)
    w2, b2      : trans2 params (input dim = E * D)
    returns     : (B,) sigmoid(sum_d(trans2(concat_e(trans1(mean_k(nei)))) * end * sigmoid(path)))
    """
    NS, E, K = nei_tbl.shape
    D = embeds_start.shape[1]
    PS = embeds_path.shape[0]
    EK = E * K

    # Lane-friendly table row counts (cheap one-time padding of tiny tables).
    NSp = max(128, ((NS + 127) // 128) * 128)
    PSp = max(128, ((PS + 127) // 128) * 128)
    ENSp = E * NSp

    # ---- one-time parameter/table folding (f32, tiny, VMEM-resident) -------
    # W2_e = w2[:, e*D:(e+1)*D];  F_e = (embeds_start @ w1.T @ W2_e.T) / K
    f_blocks = []
    for e in range(E):
        wc_e = w1.T @ w2[:, e * D:(e + 1) * D].T                    # (D, D)
        f_e = (embeds_start @ wc_e) / K                             # (NS, D)
        f_blocks.append(jnp.pad(f_e, ((0, NSp - NS), (0, 0))))
    nei_table = jnp.concatenate(f_blocks, axis=0).astype(jnp.float32)   # (E*NSp, D)
    b_comb = (jnp.tile(b1, E) @ w2.T + b2).reshape(1, D).astype(jnp.float32)
    end_table = jnp.pad(embeds_end, ((0, NSp - NS), (0, 0))).astype(jnp.float32)
    path_table = jnp.pad(embeds_path, ((0, PSp - PS), (0, 0))).astype(jnp.float32)

    # ---- batch tiling: pad the cheap id arrays BEFORE any gather -----------
    B = start_node.shape[0]
    tb = _pick_block(B, block_b)
    b_pad = pl.cdiv(B, tb) * tb
    pad = b_pad - B
    if pad:
        start_node = jnp.pad(start_node, (0, pad))   # id 0 is a valid row
        end_node = jnp.pad(end_node, (0, pad))
        path = jnp.pad(path, (0, pad))

    # Id-level neighbor lookup (int32, ~32 B/row) — the only per-row gather
    # left outside the kernel.
    nei_ids = nei_tbl[start_node].reshape(b_pad, EK).astype(jnp.int32)   # (b_pad, E*K)
    offs = jnp.repeat(jnp.arange(E, dtype=jnp.int32) * NSp, K).reshape(1, EK)
    nei_ids_off = nei_ids + offs
    end_ids = end_node.reshape(b_pad, 1).astype(jnp.int32)
    path_ids = path.reshape(b_pad, 1).astype(jnp.int32)

    grid = (b_pad // tb,)
    bytes_accessed = ((nei_ids_off.size + end_ids.size + path_ids.size) * 4
                      + (nei_table.size + end_table.size + path_table.size
                         + b_comb.size) * 4
                      + b_pad * 4)

    out = pl.pallas_call(
        hin2vec_kernel,
        out_shape=jax.ShapeDtypeStruct((1, b_pad), jnp.float32),
        grid_spec=pltpu.PrefetchScalarGridSpec(
            num_scalar_prefetch=0,
            grid=grid,
            in_specs=[
                pl.BlockSpec((tb, EK), lambda i: (i, 0)),    # neighbor ids (pipelined)
                pl.BlockSpec((tb, 1), lambda i: (i, 0)),     # end ids
                pl.BlockSpec((tb, 1), lambda i: (i, 0)),     # path ids
                pl.BlockSpec((ENSp, D), lambda i: (0, 0)),   # folded neighbor table: resident
                pl.BlockSpec((NSp, D), lambda i: (0, 0)),    # end-embedding table: resident
                pl.BlockSpec((PSp, D), lambda i: (0, 0)),    # path-embedding table: resident
                pl.BlockSpec((1, D), lambda i: (0, 0)),      # folded bias: resident
            ],
            out_specs=pl.BlockSpec((1, tb), lambda i: (0, i)),   # lane-dense output row
        ),
        compiler_params=pltpu.CompilerParams(
            dimension_semantics=("parallel",),
            vmem_limit_bytes=32 * 1024 * 1024,   # safe on v7x (64 MiB physical)
        ),
        cost_estimate=pl.CostEstimate(
            flops=(2 * b_pad * D * (ENSp + NSp + PSp)      # gather matmuls
                   + 2 * b_pad * EK * ENSp                 # one-hot/count build
                   + 5 * b_pad * D),                       # elementwise
            transcendentals=b_pad * (D + 1),
            bytes_accessed=bytes_accessed,
        ),
    )(nei_ids_off, end_ids, path_ids, nei_table, end_table, path_table, b_comb)
    return out[0, :B]


if __name__ == "__main__":
    key = jax.random.PRNGKey(0)

    # Small shapes consistent with the module.
    node_size = 50
    path_size = 6
    embed_dim = 32          # D
    num_edge_types = 2      # E == num_sample_nei
    K = 4                   # neighbors sampled per edge type (fixed, padded)
    B = 500                 # batch (exercises index padding + 2-step grid)

    keys = jax.random.split(key, 10)
    embeds_start = jax.random.normal(keys[0], (node_size, embed_dim), jnp.float32)
    embeds_end   = jax.random.normal(keys[1], (node_size, embed_dim), jnp.float32)
    embeds_path  = jax.random.normal(keys[2], (path_size, embed_dim), jnp.float32)
    w1 = jax.random.normal(keys[3], (embed_dim, embed_dim), jnp.float32) * 0.1
    b1 = jax.random.normal(keys[4], (embed_dim,), jnp.float32) * 0.1
    w2 = jax.random.normal(keys[5], (embed_dim, embed_dim * num_edge_types),
                           jnp.float32) * 0.1
    b2 = jax.random.normal(keys[6], (embed_dim,), jnp.float32) * 0.1

    # Dense neighbor table: neighbors[node][edge_type] -> K node ids.
    nei_tbl = jax.random.randint(keys[7], (node_size, num_edge_types, K),
                                 0, node_size, jnp.int32)
    start_node = jax.random.randint(keys[8], (B,), 0, node_size, jnp.int32)
    end_node   = jax.random.randint(keys[9], (B,), 0, node_size, jnp.int32)
    path       = jnp.arange(B, dtype=jnp.int32) % path_size

    out = hin2vec_forward(nei_tbl, start_node, end_node, path,
                          embeds_start, embeds_end, embeds_path,
                          w1, b1, w2, b2)
    out = jax.block_until_ready(out)

    # Pure-JAX f32 reference (mirrors the PyTorch forward exactly).
    nei_ids = nei_tbl[start_node]                                     # (B, E, K)
    nei_emb = embeds_start[nei_ids]                                   # (B, E, K, D)
    mean = jnp.mean(nei_emb, axis=2)                                  # (B, E, D)
    y = mean @ w1.T + b1                                              # (B, E, D)
    ycat = y.reshape(B, num_edge_types * embed_dim)                   # concat over e
    z = ycat @ w2.T + b2                                              # (B, D)
    ref = jax.nn.sigmoid(
        jnp.sum(z * embeds_end[end_node] * jax.nn.sigmoid(embeds_path[path]),
                axis=1))                                              # (B,)

    assert out.shape == (B,)
    assert bool(jnp.all(jnp.isfinite(out)))
    assert jnp.allclose(out, ref, atol=1e-2, rtol=1e-2), (
        float(jnp.max(jnp.abs(out - ref))))
    print("KERNEL_OK")
</pallas_src>

<mosaic_0001>
module attributes {stable_mosaic.version = 11 : i64} {
  func.func @hin2vec_kernel(%arg0: i32, %arg1: memref<256x8xi32, #tpu.memory_space<vmem>>, %arg2: memref<256x1xi32, #tpu.memory_space<vmem>>, %arg3: memref<256x1xi32, #tpu.memory_space<vmem>>, %arg4: memref<256x32xf32, #tpu.memory_space<vmem>>, %arg5: memref<128x32xf32, #tpu.memory_space<vmem>>, %arg6: memref<128x32xf32, #tpu.memory_space<vmem>>, %arg7: memref<1x32xf32, #tpu.memory_space<vmem>>, %arg8: memref<1x256xf32, #tpu.memory_space<vmem>>) attributes {dimension_semantics = [#tpu.dimension_semantics<parallel>], iteration_bounds = array<i64: 2>, scalar_prefetch = 0 : i64, scratch_operands = 0 : i64, tpu.core_type = #tpu.core_type<tc>, window_params = [{transform_indices = @transform_0, window_bounds = array<i64: 256, 8>}, {transform_indices = @transform_1, window_bounds = array<i64: 256, 1>}, {transform_indices = @transform_2, window_bounds = array<i64: 256, 1>}, {pipeline_mode = #tpu.pipeline_mode<synchronous>, transform_indices = @transform_3, window_bounds = array<i64: 256, 32>}, {pipeline_mode = #tpu.pipeline_mode<synchronous>, transform_indices = @transform_4, window_bounds = array<i64: 128, 32>}, {pipeline_mode = #tpu.pipeline_mode<synchronous>, transform_indices = @transform_5, window_bounds = array<i64: 128, 32>}, {pipeline_mode = #tpu.pipeline_mode<synchronous>, transform_indices = @transform_6, window_bounds = array<i64: 1, 32>}, {transform_indices = @transform_7, window_bounds = array<i64: 1, 256>}]} {
    %c0 = arith.constant 0 : index
    %c0_0 = arith.constant 0 : index
    %0 = vector.load %arg1[%c0, %c0_0] : memref<256x8xi32, #tpu.memory_space<vmem>>, vector<256x8xi32>
    %1 = tpu.iota {dimensions = array<i32: 1>} : vector<256x256xi32>
    %2 = vector.extract_strided_slice %0 {offsets = [0, 0], sizes = [256, 1], strides = [1, 1]} : vector<256x8xi32> to vector<256x1xi32>
    %3 = vector.broadcast %2 : vector<256x1xi32> to vector<256x256xi32>
    %4 = arith.cmpi eq, %3, %1 : vector<256x256xi32>
    %5 = arith.extui %4 : vector<256x256xi1> to vector<256x256xi32>
    %6 = arith.sitofp %5 : vector<256x256xi32> to vector<256x256xf32>
    %7 = vector.extract_strided_slice %0 {offsets = [0, 1], sizes = [256, 1], strides = [1, 1]} : vector<256x8xi32> to vector<256x1xi32>
    %8 = vector.broadcast %7 : vector<256x1xi32> to vector<256x256xi32>
    %9 = arith.cmpi eq, %8, %1 : vector<256x256xi32>
    %10 = arith.extui %9 : vector<256x256xi1> to vector<256x256xi32>
    %11 = arith.sitofp %10 : vector<256x256xi32> to vector<256x256xf32>
    %12 = arith.addf %6, %11 : vector<256x256xf32>
    %13 = vector.extract_strided_slice %0 {offsets = [0, 2], sizes = [256, 1], strides = [1, 1]} : vector<256x8xi32> to vector<256x1xi32>
    %14 = vector.broadcast %13 : vector<256x1xi32> to vector<256x256xi32>
    %15 = arith.cmpi eq, %14, %1 : vector<256x256xi32>
    %16 = arith.extui %15 : vector<256x256xi1> to vector<256x256xi32>
    %17 = arith.sitofp %16 : vector<256x256xi32> to vector<256x256xf32>
    %18 = arith.addf %12, %17 : vector<256x256xf32>
    %19 = vector.extract_strided_slice %0 {offsets = [0, 3], sizes = [256, 1], strides = [1, 1]} : vector<256x8xi32> to vector<256x1xi32>
    %20 = vector.broadcast %19 : vector<256x1xi32> to vector<256x256xi32>
    %21 = arith.cmpi eq, %20, %1 : vector<256x256xi32>
    %22 = arith.extui %21 : vector<256x256xi1> to vector<256x256xi32>
    %23 = arith.sitofp %22 : vector<256x256xi32> to vector<256x256xf32>
    %24 = arith.addf %18, %23 : vector<256x256xf32>
    %25 = vector.extract_strided_slice %0 {offsets = [0, 4], sizes = [256, 1], strides = [1, 1]} : vector<256x8xi32> to vector<256x1xi32>
    %26 = vector.broadcast %25 : vector<256x1xi32> to vector<256x256xi32>
    %27 = arith.cmpi eq, %26, %1 : vector<256x256xi32>
    %28 = arith.extui %27 : vector<256x256xi1> to vector<256x256xi32>
    %29 = arith.sitofp %28 : vector<256x256xi32> to vector<256x256xf32>
    %30 = arith.addf %24, %29 : vector<256x256xf32>
    %31 = vector.extract_strided_slice %0 {offsets = [0, 5], sizes = [256, 1], strides = [1, 1]} : vector<256x8xi32> to vector<256x1xi32>
    %32 = vector.broadcast %31 : vector<256x1xi32> to vector<256x256xi32>
    %33 = arith.cmpi eq, %32, %1 : vector<256x256xi32>
    %34 = arith.extui %33 : vector<256x256xi1> to vector<256x256xi32>
    %35 = arith.sitofp %34 : vector<256x256xi32> to vector<256x256xf32>
    %36 = arith.addf %30, %35 : vector<256x256xf32>
    %37 = vector.extract_strided_slice %0 {offsets = [0, 6], sizes = [256, 1], strides = [1, 1]} : vector<256x8xi32> to vector<256x1xi32>
    %38 = vector.broadcast %37 : vector<256x1xi32> to vector<256x256xi32>
    %39 = arith.cmpi eq, %38, %1 : vector<256x256xi32>
    %40 = arith.extui %39 : vector<256x256xi1> to vector<256x256xi32>
    %41 = arith.sitofp %40 : vector<256x256xi32> to vector<256x256xf32>
    %42 = arith.addf %36, %41 : vector<256x256xf32>
    %43 = vector.extract_strided_slice %0 {offsets = [0, 7], sizes = [256, 1], strides = [1, 1]} : vector<256x8xi32> to vector<256x1xi32>
    %44 = vector.broadcast %43 : vector<256x1xi32> to vector<256x256xi32>
    %45 = arith.cmpi eq, %44, %1 : vector<256x256xi32>
    %46 = arith.extui %45 : vector<256x256xi1> to vector<256x256xi32>
    %47 = arith.sitofp %46 : vector<256x256xi32> to vector<256x256xf32>
    %48 = arith.addf %42, %47 : vector<256x256xf32>
    %c0_1 = arith.constant 0 : index
    %c0_2 = arith.constant 0 : index
    %49 = vector.load %arg4[%c0_1, %c0_2] : memref<256x32xf32, #tpu.memory_space<vmem>>, vector<256x32xf32>
    %cst = arith.constant dense<0.000000e+00> : vector<256x32xf32>
    %50 = tpu.matmul %48, %49, %cst {dimension_numbers = #tpu.dot_dimension_numbers<[1], [0], [0], [1], [0, 0, 1, 1], [], []>} : vector<256x256xf32>, vector<256x32xf32>, vector<256x32xf32> -> vector<256x32xf32>
    %c0_3 = arith.constant 0 : index
    %c0_4 = arith.constant 0 : index
    %51 = vector.load %arg7[%c0_3, %c0_4] : memref<1x32xf32, #tpu.memory_space<vmem>>, vector<1x32xf32>
    %52 = vector.broadcast %51 : vector<1x32xf32> to vector<256x32xf32>
    %53 = arith.addf %50, %52 : vector<256x32xf32>
    %54 = tpu.iota {dimensions = array<i32: 1>} : vector<256x128xi32>
    %c0_5 = arith.constant 0 : index
    %c0_6 = arith.constant 0 : index
    %55 = vector.load %arg2[%c0_5, %c0_6] : memref<256x1xi32, #tpu.memory_space<vmem>>, vector<256x1xi32>
    %56 = vector.broadcast %55 : vector<256x1xi32> to vector<256x128xi32>
    %57 = arith.cmpi eq, %56, %54 : vector<256x128xi32>
    %58 = arith.extui %57 : vector<256x128xi1> to vector<256x128xi32>
    %59 = arith.sitofp %58 : vector<256x128xi32> to vector<256x128xf32>
    %c0_7 = arith.constant 0 : index
    %c0_8 = arith.constant 0 : index
    %60 = vector.load %arg5[%c0_7, %c0_8] : memref<128x32xf32, #tpu.memory_space<vmem>>, vector<128x32xf32>
    %cst_9 = arith.constant dense<0.000000e+00> : vector<256x32xf32>
    %61 = tpu.matmul %59, %60, %cst_9 {dimension_numbers = #tpu.dot_dimension_numbers<[1], [0], [0], [1], [0, 0, 1, 1], [], []>} : vector<256x128xf32>, vector<128x32xf32>, vector<256x32xf32> -> vector<256x32xf32>
    %62 = tpu.iota {dimensions = array<i32: 1>} : vector<256x128xi32>
    %c0_10 = arith.constant 0 : index
    %c0_11 = arith.constant 0 : index
    %63 = vector.load %arg3[%c0_10, %c0_11] : memref<256x1xi32, #tpu.memory_space<vmem>>, vector<256x1xi32>
    %64 = vector.broadcast %63 : vector<256x1xi32> to vector<256x128xi32>
    %65 = arith.cmpi eq, %64, %62 : vector<256x128xi32>
    %66 = arith.extui %65 : vector<256x128xi1> to vector<256x128xi32>
    %67 = arith.sitofp %66 : vector<256x128xi32> to vector<256x128xf32>
    %c0_12 = arith.constant 0 : index
    %c0_13 = arith.constant 0 : index
    %68 = vector.load %arg6[%c0_12, %c0_13] : memref<128x32xf32, #tpu.memory_space<vmem>>, vector<128x32xf32>
    %cst_14 = arith.constant dense<0.000000e+00> : vector<256x32xf32>
    %69 = tpu.matmul %67, %68, %cst_14 {dimension_numbers = #tpu.dot_dimension_numbers<[1], [0], [0], [1], [0, 0, 1, 1], [], []>} : vector<256x128xf32>, vector<128x32xf32>, vector<256x32xf32> -> vector<256x32xf32>
    %70 = arith.mulf %53, %61 : vector<256x32xf32>
    %71 = arith.negf %69 : vector<256x32xf32>
    %72 = math.exp %71 : vector<256x32xf32>
    %cst_15 = arith.constant 1.000000e+00 : f32
    %73 = vector.broadcast %cst_15 : f32 to vector<256x32xf32>
    %74 = arith.addf %73, %72 : vector<256x32xf32>
    %75 = arith.divf %73, %74 : vector<256x32xf32>
    %76 = arith.mulf %70, %75 : vector<256x32xf32>
    %cst_16 = arith.constant 1.000000e+00 : f32
    %77 = vector.broadcast %cst_16 : f32 to vector<1x32xf32>
    %cst_17 = arith.constant dense<0.000000e+00> : vector<1x256xf32>
    %78 = tpu.matmul %77, %76, %cst_17 {dimension_numbers = #tpu.dot_dimension_numbers<[1], [1], [0], [0], [0, 0, 1, 0], [], []>} : vector<1x32xf32>, vector<256x32xf32>, vector<1x256xf32> -> vector<1x256xf32>
    %79 = arith.negf %78 : vector<1x256xf32>
    %80 = math.exp %79 : vector<1x256xf32>
    %cst_18 = arith.constant 1.000000e+00 : f32
    %81 = vector.broadcast %cst_18 : f32 to vector<1x256xf32>
    %82 = arith.addf %81, %80 : vector<1x256xf32>
    %83 = arith.divf %81, %82 : vector<1x256xf32>
    %c0_19 = arith.constant 0 : index
    %c0_20 = arith.constant 0 : index
    %84 = vector.load %arg8[%c0_19, %c0_20] : memref<1x256xf32, #tpu.memory_space<vmem>>, vector<1x256xf32>
    tpu.vector_store %arg8[%c0_19, %c0_20], %83 {strides = array<i32>} : memref<1x256xf32, #tpu.memory_space<vmem>>, vector<1x256xf32>,
    return
  }
  func.func @transform_0(%arg0: i32) -> (i32, i32) {
    %c0_i32 = arith.constant 0 : i32
    %c0_i32_0 = arith.constant 0 : i32
    return %arg0, %c0_i32 : i32, i32
  }
  func.func @transform_1(%arg0: i32) -> (i32, i32) {
    %c0_i32 = arith.constant 0 : i32
    %c0_i32_0 = arith.constant 0 : i32
    return %arg0, %c0_i32 : i32, i32
  }
  func.func @transform_2(%arg0: i32) -> (i32, i32) {
    %c0_i32 = arith.constant 0 : i32
    %c0_i32_0 = arith.constant 0 : i32
    return %arg0, %c0_i32 : i32, i32
  }
  func.func @transform_3(%arg0: i32) -> (i32, i32) {
    %c0_i32 = arith.constant 0 : i32
    %c0_i32_0 = arith.constant 0 : i32
    %c0_i32_1 = arith.constant 0 : i32
    return %c0_i32, %c0_i32_0 : i32, i32
  }
  func.func @transform_4(%arg0: i32) -> (i32, i32) {
    %c0_i32 = arith.constant 0 : i32
    %c0_i32_0 = arith.constant 0 : i32
    %c0_i32_1 = arith.constant 0 : i32
    return %c0_i32, %c0_i32_0 : i32, i32
  }
  func.func @transform_5(%arg0: i32) -> (i32, i32) {
    %c0_i32 = arith.constant 0 : i32
    %c0_i32_0 = arith.constant 0 : i32
    %c0_i32_1 = arith.constant 0 : i32
    return %c0_i32, %c0_i32_0 : i32, i32
  }
  func.func @transform_6(%arg0: i32) -> (i32, i32) {
    %c0_i32 = arith.constant 0 : i32
    %c0_i32_0 = arith.constant 0 : i32
    %c0_i32_1 = arith.constant 0 : i32
    return %c0_i32, %c0_i32_0 : i32, i32
  }
  func.func @transform_7(%arg0: i32) -> (i32, i32) {
    %c0_i32 = arith.constant 0 : i32
    %c0_i32_0 = arith.constant 0 : i32
    return %c0_i32, %arg0 : i32, i32
  }
}

</mosaic_0001>

<llo_original>
// kernel: tpu_custom_call.1
$region0: #{tpu_custom_call.1}
  #allocation0 [shape = 'u32[]', space=smem, size = 0x4, offset = 0x4, fixed_abs, tag = 'smem constant byte address 0x4 - core index']
  #allocation1 [shape = 'u32[144,128]{1,0:T(1,128)}', space=vmem, size = 0x12000, scoped, tag = 'internal scratch']
  %s0 = inlined_call_operand.vmem [shape: s32[512,8], index: 0, kind: input, shape index: {}]
  %s1 = inlined_call_operand.vmem [shape: s32[512,1], index: 1, kind: input, shape index: {}]
  %s2 = inlined_call_operand.vmem [shape: s32[512,1], index: 2, kind: input, shape index: {}]
  %s3 = inlined_call_operand.vmem [shape: f32[256,32], index: 3, kind: input, shape index: {}]
  %s4 = inlined_call_operand.vmem [shape: f32[128,32], index: 4, kind: input, shape index: {}]
  %s5 = inlined_call_operand.vmem [shape: f32[128,32], index: 5, kind: input, shape index: {}]
  %s6 = inlined_call_operand.vmem [shape: f32[1,32], index: 6, kind: input, shape index: {}]
  %s7 = inlined_call_operand.hbm [shape: f32[1,512], index: 7, kind: output, shape index: {}]
  %s8 = sld [smem:[#allocation0]]
  $region61: #{tpu_custom_call.1} parent=0
    _
  %s10 = ssub.s32 1, %s8
  %s11 = scalar_select 0, %s10, %s8
  $region1: #{tpu_custom_call.1} parent=0
    #allocation2 [shape = 'u8[2048]{0}', space=vmem, size = 0x800, scoped, tag = 'output window, operand 0']
    #allocation3 [shape = 's32[2]{0}', space=sflag, size = 0x8, scoped, tag = 'scoped memory for tpu_custom_call.1']
    %12 = vsyncpa [#allocation3], 0
    %s13 = scalar_lea.sflag [#allocation3], 1
    %14 = vsyncpa %s13, 0
    loop: start=0, step=1, limit=4
    $region2: #{tpu_custom_call.1} parent=1 // loop_pre_header
      _
    $region3: #{tpu_custom_call.1} parent=1 // loop_header
      %s16 = sphi 0, %s20
      %p17 = scmp.ge.s32.totalorder %s16, 4
      %s26 = sphi 0, %s28
      %s29 = sphi 0, %s26
      %s30 = sphi 0, %s29
      %s46 = sphi 0, %s30
      %s52 = sphi 0, %s54
      %s55 = sphi 0, %s52
      %s56 = sphi 0, %s55
      %s72 = sphi 0, %s56
      %s78 = sphi 0, %s80
      %s81 = sphi 0, %s78
      %s82 = sphi 0, %s81
      %s98 = sphi 0, %s82
      %s102 = sphi 0, %s102
      %s104 = sphi 0, %s102
      %s105 = sphi 0, %s104
      %s119 = sphi 0, %s105
      %s123 = sphi 0, %s123
      %s125 = sphi 0, %s123
      %s126 = sphi 0, %s125
      %s140 = sphi 0, %s126
      %s144 = sphi 0, %s144
      %s146 = sphi 0, %s144
      %s147 = sphi 0, %s146
      %s161 = sphi 0, %s147
      %s165 = sphi 0, %s165
      %s167 = sphi 0, %s165
      %s168 = sphi 0, %s167
      %s182 = sphi 0, %s168
      %s188 = sphi 0, %s190
      %s191 = sphi 0, %s188
      %s192 = sphi 0, %s191
      %s208 = sphi 0, %s192
    $region4: #{tpu_custom_call.1} parent=1 // loop_header_branch
      %19 = sbr.rel (%p17) target = $region8
    $region5: #{tpu_custom_call.1} parent=1 // loop_body
      %s21 = ssub.s32 %s16, 1
      %s22 = ssub.s32 %s16, 2
      %s23 = sadd.s32 %s16, 1
      %s24 = ssub.s32 %s16, %s23
      %p25 = scmp.eq.s32.totalorder %s24, 0
      %s27 = sadd.s32 %s26, 1
      %s28 = scalar_select %p25, %s26, %s27
      %p31 = pneg %p25
      %p32 = scmp.eq.s32.totalorder %s16, 1
      %p33 = por %p31, %p32
      %p34 = scmp.ne.s32.totalorder %s26, %s29
      %p35 = scmp.eq.s32.totalorder %s16, 0
      %p36 = por %p34, %p35
      %p37 = scmp.ne.s32.totalorder %s26, %s29
      %p38 = scmp.eq.s32.totalorder %s21, 1
      %p39 = por %p37, %p38
      %p40 = scmp.ne.s32.totalorder %s29, %s30
      %p41 = scmp.eq.s32.totalorder %s21, 0
      %p42 = por %p40, %p41
      %p43 = scmp.ne.s32.totalorder %s29, %s30
      %p44 = scmp.eq.s32.totalorder %s22, 1
      %p45 = por %p43, %p44
      %p47 = scmp.ne.s32.totalorder %s30, %s46
      %p48 = scmp.eq.s32.totalorder %s22, 0
      %p49 = por %p47, %p48
      %s50 = ssub.s32 %s16, %s23
      %p51 = scmp.eq.s32.totalorder %s50, 0
      %s53 = sadd.s32 %s52, 1
      %s54 = scalar_select %p51, %s52, %s53
      %p57 = pneg %p51
      %p58 = scmp.eq.s32.totalorder %s16, 1
      %p59 = por %p57, %p58
      %p60 = scmp.ne.s32.totalorder %s52, %s55
      %p61 = scmp.eq.s32.totalorder %s16, 0
      %p62 = por %p60, %p61
      %p63 = scmp.ne.s32.totalorder %s52, %s55
      %p64 = scmp.eq.s32.totalorder %s21, 1
      %p65 = por %p63, %p64
      %p66 = scmp.ne.s32.totalorder %s55, %s56
      %p67 = scmp.eq.s32.totalorder %s21, 0
      %p68 = por %p66, %p67
      %p69 = scmp.ne.s32.totalorder %s55, %s56
      %p70 = scmp.eq.s32.totalorder %s22, 1
      %p71 = por %p69, %p70
      %p73 = scmp.ne.s32.totalorder %s56, %s72
      %p74 = scmp.eq.s32.totalorder %s22, 0
      %p75 = por %p73, %p74
      %s76 = ssub.s32 %s16, %s23
      %p77 = scmp.eq.s32.totalorder %s76, 0
      %s79 = sadd.s32 %s78, 1
      %s80 = scalar_select %p77, %s78, %s79
      %p83 = pneg %p77
      %p84 = scmp.eq.s32.totalorder %s16, 1
      %p85 = por %p83, %p84
      %p86 = scmp.ne.s32.totalorder %s78, %s81
      %p87 = scmp.eq.s32.totalorder %s16, 0
      %p88 = por %p86, %p87
      %p89 = scmp.ne.s32.totalorder %s78, %s81
      %p90 = scmp.eq.s32.totalorder %s21, 1
      %p91 = por %p89, %p90
      %p92 = scmp.ne.s32.totalorder %s81, %s82
      %p93 = scmp.eq.s32.totalorder %s21, 0
      %p94 = por %p92, %p93
      %p95 = scmp.ne.s32.totalorder %s81, %s82
      %p96 = scmp.eq.s32.totalorder %s22, 1
      %p97 = por %p95, %p96
      %p99 = scmp.ne.s32.totalorder %s82, %s98
      %p100 = scmp.eq.s32.totalorder %s22, 0
      %p101 = por %p99, %p100
      %s103 = sadd.s32 %s102, 1
      %p106 = scmp.eq.s32.totalorder %s16, 1
      %p107 = scmp.ne.s32.totalorder %s102, %s104
      %p108 = scmp.eq.s32.totalorder %s16, 0
      %p109 = por %p107, %p108
      %p110 = scmp.ne.s32.totalorder %s102, %s104
      %p111 = scmp.eq.s32.totalorder %s21, 1
      %p112 = por %p110, %p111
      %p113 = scmp.ne.s32.totalorder %s104, %s105
      %p114 = scmp.eq.s32.totalorder %s21, 0
      %p115 = por %p113, %p114
      %p116 = scmp.ne.s32.totalorder %s104, %s105
      %p117 = scmp.eq.s32.totalorder %s22, 1
      %p118 = por %p116, %p117
      %p120 = scmp.ne.s32.totalorder %s105, %s119
      %p121 = scmp.eq.s32.totalorder %s22, 0
      %p122 = por %p120, %p121
      %s124 = sadd.s32 %s123, 1
      %p127 = scmp.eq.s32.totalorder %s16, 1
      %p128 = scmp.ne.s32.totalorder %s123, %s125
      %p129 = scmp.eq.s32.totalorder %s16, 0
      %p130 = por %p128, %p129
      %p131 = scmp.ne.s32.totalorder %s123, %s125
      %p132 = scmp.eq.s32.totalorder %s21, 1
      %p133 = por %p131, %p132
      %p134 = scmp.ne.s32.totalorder %s125, %s126
      %p135 = scmp.eq.s32.totalorder %s21, 0
      %p136 = por %p134, %p135
      %p137 = scmp.ne.s32.totalorder %s125, %s126
      %p138 = scmp.eq.s32.totalorder %s22, 1
      %p139 = por %p137, %p138
      %p141 = scmp.ne.s32.totalorder %s126, %s140
      %p142 = scmp.eq.s32.totalorder %s22, 0
      %p143 = por %p141, %p142
      %s145 = sadd.s32 %s144, 1
      %p148 = scmp.eq.s32.totalorder %s16, 1
      %p149 = scmp.ne.s32.totalorder %s144, %s146
      %p150 = scmp.eq.s32.totalorder %s16, 0
      %p151 = por %p149, %p150
      %p152 = scmp.ne.s32.totalorder %s144, %s146
      %p153 = scmp.eq.s32.totalorder %s21, 1
      %p154 = por %p152, %p153
      %p155 = scmp.ne.s32.totalorder %s146, %s147
      %p156 = scmp.eq.s32.totalorder %s21, 0
      %p157 = por %p155, %p156
      %p158 = scmp.ne.s32.totalorder %s146, %s147
      %p159 = scmp.eq.s32.totalorder %s22, 1
      %p160 = por %p158, %p159
      %p162 = scmp.ne.s32.totalorder %s147, %s161
      %p163 = scmp.eq.s32.totalorder %s22, 0
      %p164 = por %p162, %p163
      %s166 = sadd.s32 %s165, 1
      %p169 = scmp.eq.s32.totalorder %s16, 1
      %p170 = scmp.ne.s32.totalorder %s165, %s167
      %p171 = scmp.eq.s32.totalorder %s16, 0
      %p172 = por %p170, %p171
      %p173 = scmp.ne.s32.totalorder %s165, %s167
      %p174 = scmp.eq.s32.totalorder %s21, 1
      %p175 = por %p173, %p174
      %p176 = scmp.ne.s32.totalorder %s167, %s168
      %p177 = scmp.eq.s32.totalorder %s21, 0
      %p178 = por %p176, %p177
      %p179 = scmp.ne.s32.totalorder %s167, %s168
      %p180 = scmp.eq.s32.totalorder %s22, 1
      %p181 = por %p179, %p180
      %p183 = scmp.ne.s32.totalorder %s168, %s182
      %p184 = scmp.eq.s32.totalorder %s22, 0
      %p185 = por %p183, %p184
      %s186 = ssub.s32 %s16, %s23
      %p187 = scmp.eq.s32.totalorder %s186, 0
      %s189 = sadd.s32 %s188, 1
      %s190 = scalar_select %p187, %s188, %s189
      %p193 = pneg %p187
      %p194 = scmp.eq.s32.totalorder %s16, 1
      %p195 = por %p193, %p194
      %p196 = scmp.ne.s32.totalorder %s188, %s191
      %p197 = scmp.eq.s32.totalorder %s16, 0
      %p198 = por %p196, %p197
      %p199 = scmp.ne.s32.totalorder %s188, %s191
      %p200 = scmp.eq.s32.totalorder %s21, 1
      %p201 = por %p199, %p200
      %p202 = scmp.ne.s32.totalorder %s191, %s192
      %p203 = scmp.eq.s32.totalorder %s21, 0
      %p204 = por %p202, %p203
      %p205 = scmp.ne.s32.totalorder %s191, %s192
      %p206 = scmp.eq.s32.totalorder %s22, 1
      %p207 = por %p205, %p206
      %p209 = scmp.ne.s32.totalorder %s192, %s208
      %p210 = scmp.eq.s32.totalorder %s22, 0
      %p211 = por %p209, %p210
      %p212 = scmp.le.s32.totalorder 1, %s16
      %p213 = scmp.lt.s32.totalorder %s16, 3
      %p214 = pnand %p212, %p213
      %p215 = pneg %p214
      // Predicated region
      $region9: #{tpu_custom_call.1} parent=5 // pred_check
        _
      $region10: #{tpu_custom_call.1} parent=5 // pred_check_branch
        %217 = sbr.rel (%p214) target = $region12
      $region11: #{tpu_custom_call.1} parent=5 // pred_region
        %s218 = ssub.s32 %s16, 1
        // Predicated region
        $region13: #{tpu_custom_call.1} parent=11 // pred_check
          %p219 = pneg %p115
        $region14: #{tpu_custom_call.1} parent=11 // pred_check_branch
          %221 = sbr.rel (%p219) target = $region16
        $region15: #{tpu_custom_call.1} parent=11 // pred_region
          _
        $region16: #{tpu_custom_call.1} parent=11 // pred_fallthru
          _
        // Predicated region
        $region17: #{tpu_custom_call.1} parent=11 // pred_check
          %p222 = pneg %p136
        $region18: #{tpu_custom_call.1} parent=11 // pred_check_branch
          %224 = sbr.rel (%p222) target = $region20
        $region19: #{tpu_custom_call.1} parent=11 // pred_region
          _
        $region20: #{tpu_custom_call.1} parent=11 // pred_fallthru
          _
        // Predicated region
        $region21: #{tpu_custom_call.1} parent=11 // pred_check
          %p225 = pneg %p157
        $region22: #{tpu_custom_call.1} parent=11 // pred_check_branch
          %227 = sbr.rel (%p225) target = $region24
        $region23: #{tpu_custom_call.1} parent=11 // pred_region
          _
        $region24: #{tpu_custom_call.1} parent=11 // pred_fallthru
          _
        // Predicated region
        $region25: #{tpu_custom_call.1} parent=11 // pred_check
          %p228 = pneg %p178
        $region26: #{tpu_custom_call.1} parent=11 // pred_check_branch
          %230 = sbr.rel (%p228) target = $region28
        $region27: #{tpu_custom_call.1} parent=11 // pred_region
          _
        $region28: #{tpu_custom_call.1} parent=11 // pred_fallthru
          _
      $region12: #{tpu_custom_call.1} parent=5 // pred_fallthru
        _
      %p231 = scmp.lt.s32.totalorder %s16, 2
      // Predicated region
      $region29: #{tpu_custom_call.1} parent=5 // pred_check
        %p232 = pneg %p231
      $region30: #{tpu_custom_call.1} parent=5 // pred_check_branch
        %234 = sbr.rel (%p232) target = $region32
      $region31: #{tpu_custom_call.1} parent=5 // pred_region
        // Predicated region
        $region33: #{tpu_custom_call.1} parent=31 // pred_check
          %p235 = pneg %p36
        $region34: #{tpu_custom_call.1} parent=31 // pred_check_branch
          %237 = sbr.rel (%p235) target = $region36
        $region35: #{tpu_custom_call.1} parent=31 // pred_region
          %s238 = smul.u32 32, %s16
          %p239 = scmp.lt.s32.totalorder %s238, 63
          %s240 = scalar_select %p239, %s238, 63
          %s241 = smul.addr %s240, 8
          %s242 = scalar_lea.vmem %s0, %s241
          %s243 = smul.u32 32, %s16
        $region36: #{tpu_custom_call.1} parent=31 // pred_fallthru
          _
        // Predicated region
        $region37: #{tpu_custom_call.1} parent=31 // pred_check
          %p244 = pneg %p62
        $region38: #{tpu_custom_call.1} parent=31 // pred_check_branch
          %246 = sbr.rel (%p244) target = $region40
        $region39: #{tpu_custom_call.1} parent=31 // pred_region
          %s247 = smul.u32 32, %s16
          %p248 = scmp.lt.s32.totalorder %s247, 63
          %s249 = scalar_select %p248, %s247, 63
          %s250 = smul.addr %s249, 8
          %s251 = scalar_lea.vmem %s1, %s250
          %s252 = smul.u32 32, %s16
        $region40: #{tpu_custom_call.1} parent=31 // pred_fallthru
          _
        // Predicated region
        $region41: #{tpu_custom_call.1} parent=31 // pred_check
          %p253 = pneg %p88
        $region42: #{tpu_custom_call.1} parent=31 // pred_check_branch
          %255 = sbr.rel (%p253) target = $region44
        $region43: #{tpu_custom_call.1} parent=31 // pred_region
          %s256 = smul.u32 32, %s16
          %p257 = scmp.lt.s32.totalorder %s256, 63
          %s258 = scalar_select %p257, %s256, 63
          %s259 = smul.addr %s258, 8
          %s260 = scalar_lea.vmem %s2, %s259
          %s261 = smul.u32 32, %s16
        $region44: #{tpu_custom_call.1} parent=31 // pred_fallthru
          _
      $region32: #{tpu_custom_call.1} parent=5 // pred_fallthru
        _
      %p262 = scmp.le.s32.totalorder 1, %s16
      %p263 = scmp.lt.s32.totalorder %s16, 3
      %p264 = pnand %p262, %p263
      %p265 = pneg %p264
      // Predicated region
      $region45: #{tpu_custom_call.1} parent=5 // pred_check
        _
      $region46: #{tpu_custom_call.1} parent=5 // pred_check_branch
        %267 = sbr.rel (%p264) target = $region48
      $region47: #{tpu_custom_call.1} parent=5 // pred_region
        %s268 = ssub.s32 %s16, 1
        %s269 = smul.u32 32, %s21
        %p270 = scmp.lt.s32.totalorder %s269, 63
        %s271 = scalar_select %p270, %s269, 63
        %s272 = smul.addr %s271, 8
        %s273 = scalar_lea.vmem %s0, %s272
        %p274 = pneg %p42
        %p275 = pneg %p39
        %s276 = smul.u32 32, %s21
        %p277 = scmp.lt.s32.totalorder %s276, 63
        %s278 = scalar_select %p277, %s276, 63
        %s279 = smul.addr %s278, 8
        %s280 = scalar_lea.vmem %s1, %s279
        %p281 = pneg %p68
        %p282 = pneg %p65
        %s283 = smul.u32 32, %s21
        %p284 = scmp.lt.s32.totalorder %s283, 63
        %s285 = scalar_select %p284, %s283, 63
        %s286 = smul.addr %s285, 8
        %s287 = scalar_lea.vmem %s2, %s286
        %p288 = pneg %p94
        %p289 = pneg %p91
        %p290 = pneg %p115
        %p291 = pneg %p112
        %p292 = pneg %p136
        %p293 = pneg %p133
        %p294 = pneg %p157
        %p295 = pneg %p154
        %p296 = pneg %p178
        %p297 = pneg %p175
        %p298 = pneg %p204
        %p299 = pneg %p201
        %s300 = sand.u32 %s191, 1
        %s301 = scalar_lea.sflag [#allocation3], %s300
        %s302 = sand.u32 %s191, 1
        %s303 = smul.addr %s302, 2
        %s304 = scalar_lea.vmem [#allocation2], %s303
        %s305 = smul.u32 32, %s21
        %p306 = scmp.lt.s32.totalorder %s305, 63
        %s307 = scalar_select %p306, %s305, 63
        %s308 = smul.addr %s307, 8
        %s309 = scalar_lea.vmem %s0, %s308
        %s310 = smul.u32 32, %s21
        %s311 = smul.u32 32, %s21
        %p312 = scmp.lt.s32.totalorder %s311, 63
        %s313 = scalar_select %p312, %s311, 63
        %s314 = smul.addr %s313, 8
        %s315 = scalar_lea.vmem %s1, %s314
        %s316 = smul.u32 32, %s21
        %s317 = smul.u32 32, %s21
        %p318 = scmp.lt.s32.totalorder %s317, 63
        %s319 = scalar_select %p318, %s317, 63
        %s320 = smul.addr %s319, 8
        %s321 = scalar_lea.vmem %s2, %s320
        %s322 = smul.u32 32, %s21
        %s323 = smul.u32 2, %s21
        %v324 = vld [vmem:[%s309] sm:$0xff]
        %v325 = vld [vmem:[%s309 + $0x8] sm:$0xff]
        %v326 = vld [vmem:[%s309 + $0x10] sm:$0xff]
        %v327 = vld [vmem:[%s309 + $0x18] sm:$0xff]
        %v328 = vld [vmem:[%s309 + $0x20] sm:$0xff]
        %v329 = vld [vmem:[%s309 + $0x28] sm:$0xff]
        %v330 = vld [vmem:[%s309 + $0x30] sm:$0xff]
        %v331 = vld [vmem:[%s309 + $0x38] sm:$0xff]
        %v332 = vld [vmem:[%s309 + $0x40] sm:$0xff]
        %v333 = vld [vmem:[%s309 + $0x48] sm:$0xff]
        %v334 = vld [vmem:[%s309 + $0x50] sm:$0xff]
        %v335 = vld [vmem:[%s309 + $0x58] sm:$0xff]
        %v336 = vld [vmem:[%s309 + $0x60] sm:$0xff]
        %v337 = vld [vmem:[%s309 + $0x68] sm:$0xff]
        %v338 = vld [vmem:[%s309 + $0x70] sm:$0xff]
        %v339 = vld [vmem:[%s309 + $0x78] sm:$0xff]
        %v340 = vld [vmem:[%s309 + $0x80] sm:$0xff]
        %v341 = vld [vmem:[%s309 + $0x88] sm:$0xff]
        %v342 = vld [vmem:[%s309 + $0x90] sm:$0xff]
        %v343 = vld [vmem:[%s309 + $0x98] sm:$0xff]
        %v344 = vld [vmem:[%s309 + $0xa0] sm:$0xff]
        %v345 = vld [vmem:[%s309 + $0xa8] sm:$0xff]
        %v346 = vld [vmem:[%s309 + $0xb0] sm:$0xff]
        %v347 = vld [vmem:[%s309 + $0xb8] sm:$0xff]
        %v348 = vld [vmem:[%s309 + $0xc0] sm:$0xff]
        %v349 = vld [vmem:[%s309 + $0xc8] sm:$0xff]
        %v350 = vld [vmem:[%s309 + $0xd0] sm:$0xff]
        %v351 = vld [vmem:[%s309 + $0xd8] sm:$0xff]
        %v352 = vld [vmem:[%s309 + $0xe0] sm:$0xff]
        %v353 = vld [vmem:[%s309 + $0xe8] sm:$0xff]
        %v354 = vld [vmem:[%s309 + $0xf0] sm:$0xff]
        %v355 = vld [vmem:[%s309 + $0xf8] sm:$0xff]
        %v356 = vlaneseq
        %v357 = vand.u32 %v356, 127
        %v358 = vadd.s32 %v357, 128
        %359 = vset.pattern.permute.xlu0 0
        %360 = vperm.xlu0 %359, %v324
        %v361 = vpop.permute.xlu0 %360
        %362 = vset.pattern.permute.xlu0 0
        %363 = vperm.xlu0 %362, %v325
        %v364 = vpop.permute.xlu0 %363
        %365 = vset.pattern.permute.xlu0 0
        %366 = vperm.xlu0 %365, %v326
        %v367 = vpop.permute.xlu0 %366
        %368 = vset.pattern.permute.xlu0 0
        %369 = vperm.xlu0 %368, %v327
        %v370 = vpop.permute.xlu0 %369
        %371 = vset.pattern.permute.xlu0 0
        %372 = vperm.xlu0 %371, %v328
        %v373 = vpop.permute.xlu0 %372
        %374 = vset.pattern.permute.xlu0 0
        %375 = vperm.xlu0 %374, %v329
        %v376 = vpop.permute.xlu0 %375
        %377 = vset.pattern.permute.xlu0 0
        %378 = vperm.xlu0 %377, %v330
        %v379 = vpop.permute.xlu0 %378
        %380 = vset.pattern.permute.xlu0 0
        %381 = vperm.xlu0 %380, %v331
        %v382 = vpop.permute.xlu0 %381
        %383 = vset.pattern.permute.xlu0 0
        %384 = vperm.xlu0 %383, %v332
        %v385 = vpop.permute.xlu0 %384
        %386 = vset.pattern.permute.xlu0 0
        %387 = vperm.xlu0 %386, %v333
        %v388 = vpop.permute.xlu0 %387
        %389 = vset.pattern.permute.xlu0 0
        %390 = vperm.xlu0 %389, %v334
        %v391 = vpop.permute.xlu0 %390
        %392 = vset.pattern.permute.xlu0 0
        %393 = vperm.xlu0 %392, %v335
        %v394 = vpop.permute.xlu0 %393
        %395 = vset.pattern.permute.xlu0 0
        %396 = vperm.xlu0 %395, %v336
        %v397 = vpop.permute.xlu0 %396
        %398 = vset.pattern.permute.xlu0 0
        %399 = vperm.xlu0 %398, %v337
        %v400 = vpop.permute.xlu0 %399
        %401 = vset.pattern.permute.xlu0 0
        %402 = vperm.xlu0 %401, %v338
        %v403 = vpop.permute.xlu0 %402
        %404 = vset.pattern.permute.xlu0 0
        %405 = vperm.xlu0 %404, %v339
        %v406 = vpop.permute.xlu0 %405
        %407 = vset.pattern.permute.xlu0 0
        %408 = vperm.xlu0 %407, %v340
        %v409 = vpop.permute.xlu0 %408
        %410 = vset.pattern.permute.xlu0 0
        %411 = vperm.xlu0 %410, %v341
        %v412 = vpop.permute.xlu0 %411
        %413 = vset.pattern.permute.xlu0 0
        %414 = vperm.xlu0 %413, %v342
        %v415 = vpop.permute.xlu0 %414
        %416 = vset.pattern.permute.xlu0 0
        %417 = vperm.xlu0 %416, %v343
        %v418 = vpop.permute.xlu0 %417
        %419 = vset.pattern.permute.xlu0 0
        %420 = vperm.xlu0 %419, %v344
        %v421 = vpop.permute.xlu0 %420
        %422 = vset.pattern.permute.xlu0 0
        %423 = vperm.xlu0 %422, %v345
        %v424 = vpop.permute.xlu0 %423
        %425 = vset.pattern.permute.xlu0 0
        %426 = vperm.xlu0 %425, %v346
        %v427 = vpop.permute.xlu0 %426
        %428 = vset.pattern.permute.xlu0 0
        %429 = vperm.xlu0 %428, %v347
        %v430 = vpop.permute.xlu0 %429
        %431 = vset.pattern.permute.xlu0 0
        %432 = vperm.xlu0 %431, %v348
        %v433 = vpop.permute.xlu0 %432
        %434 = vset.pattern.permute.xlu0 0
        %435 = vperm.xlu0 %434, %v349
        %v436 = vpop.permute.xlu0 %435
        %437 = vset.pattern.permute.xlu0 0
        %438 = vperm.xlu0 %437, %v350
        %v439 = vpop.permute.xlu0 %438
        %440 = vset.pattern.permute.xlu0 0
        %441 = vperm.xlu0 %440, %v351
        %v442 = vpop.permute.xlu0 %441
        %443 = vset.pattern.permute.xlu0 0
        %444 = vperm.xlu0 %443, %v352
        %v445 = vpop.permute.xlu0 %444
        %446 = vset.pattern.permute.xlu0 0
        %447 = vperm.xlu0 %446, %v353
        %v448 = vpop.permute.xlu0 %447
        %449 = vset.pattern.permute.xlu0 0
        %450 = vperm.xlu0 %449, %v354
        %v451 = vpop.permute.xlu0 %450
        %452 = vset.pattern.permute.xlu0 0
        %453 = vperm.xlu0 %452, %v355
        %v454 = vpop.permute.xlu0 %453
        %vm455 = vcmp.eq.s32.totalorder %v361, %v357
        %vm456 = vcmp.eq.s32.totalorder %v361, %v358
        %vm457 = vcmp.eq.s32.totalorder %v364, %v357
        %vm458 = vcmp.eq.s32.totalorder %v364, %v358
        %vm459 = vcmp.eq.s32.totalorder %v367, %v357
        %vm460 = vcmp.eq.s32.totalorder %v367, %v358
        %vm461 = vcmp.eq.s32.totalorder %v370, %v357
        %vm462 = vcmp.eq.s32.totalorder %v370, %v358
        %vm463 = vcmp.eq.s32.totalorder %v373, %v357
        %vm464 = vcmp.eq.s32.totalorder %v373, %v358
        %vm465 = vcmp.eq.s32.totalorder %v376, %v357
        %vm466 = vcmp.eq.s32.totalorder %v376, %v358
        %vm467 = vcmp.eq.s32.totalorder %v379, %v357
        %vm468 = vcmp.eq.s32.totalorder %v379, %v358
        %vm469 = vcmp.eq.s32.totalorder %v382, %v357
        %vm470 = vcmp.eq.s32.totalorder %v382, %v358
        %vm471 = vcmp.eq.s32.totalorder %v385, %v357
        %vm472 = vcmp.eq.s32.totalorder %v385, %v358
        %vm473 = vcmp.eq.s32.totalorder %v388, %v357
        %vm474 = vcmp.eq.s32.totalorder %v388, %v358
        %vm475 = vcmp.eq.s32.totalorder %v391, %v357
        %vm476 = vcmp.eq.s32.totalorder %v391, %v358
        %vm477 = vcmp.eq.s32.totalorder %v394, %v357
        %vm478 = vcmp.eq.s32.totalorder %v394, %v358
        %vm479 = vcmp.eq.s32.totalorder %v397, %v357
        %vm480 = vcmp.eq.s32.totalorder %v397, %v358
        %vm481 = vcmp.eq.s32.totalorder %v400, %v357
        %vm482 = vcmp.eq.s32.totalorder %v400, %v358
        %vm483 = vcmp.eq.s32.totalorder %v403, %v357
        %vm484 = vcmp.eq.s32.totalorder %v403, %v358
        %vm485 = vcmp.eq.s32.totalorder %v406, %v357
        %vm486 = vcmp.eq.s32.totalorder %v406, %v358
        %vm487 = vcmp.eq.s32.totalorder %v409, %v357
        %vm488 = vcmp.eq.s32.totalorder %v409, %v358
        %vm489 = vcmp.eq.s32.totalorder %v412, %v357
        %vm490 = vcmp.eq.s32.totalorder %v412, %v358
        %vm491 = vcmp.eq.s32.totalorder %v415, %v357
        %vm492 = vcmp.eq.s32.totalorder %v415, %v358
        %vm493 = vcmp.eq.s32.totalorder %v418, %v357
        %vm494 = vcmp.eq.s32.totalorder %v418, %v358
        %vm495 = vcmp.eq.s32.totalorder %v421, %v357
        %vm496 = vcmp.eq.s32.totalorder %v421, %v358
        %vm497 = vcmp.eq.s32.totalorder %v424, %v357
        %vm498 = vcmp.eq.s32.totalorder %v424, %v358
        %vm499 = vcmp.eq.s32.totalorder %v427, %v357
        %vm500 = vcmp.eq.s32.totalorder %v427, %v358
        %vm501 = vcmp.eq.s32.totalorder %v430, %v357
        %vm502 = vcmp.eq.s32.totalorder %v430, %v358
        %vm503 = vcmp.eq.s32.totalorder %v433, %v357
        %vm504 = vcmp.eq.s32.totalorder %v433, %v358
        %vm505 = vcmp.eq.s32.totalorder %v436, %v357
        %vm506 = vcmp.eq.s32.totalorder %v436, %v358
        %vm507 = vcmp.eq.s32.totalorder %v439, %v357
        %vm508 = vcmp.eq.s32.totalorder %v439, %v358
        %vm509 = vcmp.eq.s32.totalorder %v442, %v357
        %vm510 = vcmp.eq.s32.totalorder %v442, %v358
        %vm511 = vcmp.eq.s32.totalorder %v445, %v357
        %vm512 = vcmp.eq.s32.totalorder %v445, %v358
        %vm513 = vcmp.eq.s32.totalorder %v448, %v357
        %vm514 = vcmp.eq.s32.totalorder %v448, %v358
        %vm515 = vcmp.eq.s32.totalorder %v451, %v357
        %vm516 = vcmp.eq.s32.totalorder %v451, %v358
        %vm517 = vcmp.eq.s32.totalorder %v454, %v357
        %vm518 = vcmp.eq.s32.totalorder %v454, %v358
        %v519 = vsel %vm455, 1, 0
        %v520 = vsel %vm456, 1, 0
        %v521 = vsel %vm457, 1, 0
        %v522 = vsel %vm458, 1, 0
        %v523 = vsel %vm459, 1, 0
        %v524 = vsel %vm460, 1, 0
        %v525 = vsel %vm461, 1, 0
        %v526 = vsel %vm462, 1, 0
        %v527 = vsel %vm463, 1, 0
        %v528 = vsel %vm464, 1, 0
        %v529 = vsel %vm465, 1, 0
        %v530 = vsel %vm466, 1, 0
        %v531 = vsel %vm467, 1, 0
        %v532 = vsel %vm468, 1, 0
        %v533 = vsel %vm469, 1, 0
        %v534 = vsel %vm470, 1, 0
        %v535 = vsel %vm471, 1, 0
        %v536 = vsel %vm472, 1, 0
        %v537 = vsel %vm473, 1, 0
        %v538 = vsel %vm474, 1, 0
        %v539 = vsel %vm475, 1, 0
        %v540 = vsel %vm476, 1, 0
        %v541 = vsel %vm477, 1, 0
        %v542 = vsel %vm478, 1, 0
        %v543 = vsel %vm479, 1, 0
        %v544 = vsel %vm480, 1, 0
        %v545 = vsel %vm481, 1, 0
        %v546 = vsel %vm482, 1, 0
        %v547 = vsel %vm483, 1, 0
        %v548 = vsel %vm484, 1, 0
        %v549 = vsel %vm485, 1, 0
        %v550 = vsel %vm486, 1, 0
        %v551 = vsel %vm487, 1, 0
        %v552 = vsel %vm488, 1, 0
        %v553 = vsel %vm489, 1, 0
        %v554 = vsel %vm490, 1, 0
        %v555 = vsel %vm491, 1, 0
        %v556 = vsel %vm492, 1, 0
        %v557 = vsel %vm493, 1, 0
        %v558 = vsel %vm494, 1, 0
        %v559 = vsel %vm495, 1, 0
        %v560 = vsel %vm496, 1, 0
        %v561 = vsel %vm497, 1, 0
        %v562 = vsel %vm498, 1, 0
        %v563 = vsel %vm499, 1, 0
        %v564 = vsel %vm500, 1, 0
        %v565 = vsel %vm501, 1, 0
        %v566 = vsel %vm502, 1, 0
        %v567 = vsel %vm503, 1, 0
        %v568 = vsel %vm504, 1, 0
        %v569 = vsel %vm505, 1, 0
        %v570 = vsel %vm506, 1, 0
        %v571 = vsel %vm507, 1, 0
        %v572 = vsel %vm508, 1, 0
        %v573 = vsel %vm509, 1, 0
        %v574 = vsel %vm510, 1, 0
        %v575 = vsel %vm511, 1, 0
        %v576 = vsel %vm512, 1, 0
        %v577 = vsel %vm513, 1, 0
        %v578 = vsel %vm514, 1, 0
        %v579 = vsel %vm515, 1, 0
        %v580 = vsel %vm516, 1, 0
        %v581 = vsel %vm517, 1, 0
        %v582 = vsel %vm518, 1, 0
        %v583 = vcvt.s32.f32 %v519
        %v584 = vcvt.s32.f32 %v520
        %v585 = vcvt.s32.f32 %v521
        %v586 = vcvt.s32.f32 %v522
        %v587 = vcvt.s32.f32 %v523
        %v588 = vcvt.s32.f32 %v524
        %v589 = vcvt.s32.f32 %v525
        %v590 = vcvt.s32.f32 %v526
        %v591 = vcvt.s32.f32 %v527
        %v592 = vcvt.s32.f32 %v528
        %v593 = vcvt.s32.f32 %v529
        %v594 = vcvt.s32.f32 %v530
        %v595 = vcvt.s32.f32 %v531
        %v596 = vcvt.s32.f32 %v532
        %v597 = vcvt.s32.f32 %v533
        %v598 = vcvt.s32.f32 %v534
        %v599 = vcvt.s32.f32 %v535
        %v600 = vcvt.s32.f32 %v536
        %v601 = vcvt.s32.f32 %v537
        %v602 = vcvt.s32.f32 %v538
        %v603 = vcvt.s32.f32 %v539
        %v604 = vcvt.s32.f32 %v540
        %v605 = vcvt.s32.f32 %v541
        %v606 = vcvt.s32.f32 %v542
        %v607 = vcvt.s32.f32 %v543
        %v608 = vcvt.s32.f32 %v544
        %v609 = vcvt.s32.f32 %v545
        %v610 = vcvt.s32.f32 %v546
        %v611 = vcvt.s32.f32 %v547
        %v612 = vcvt.s32.f32 %v548
        %v613 = vcvt.s32.f32 %v549
        %v614 = vcvt.s32.f32 %v550
        %v615 = vcvt.s32.f32 %v551
        %v616 = vcvt.s32.f32 %v552
        %v617 = vcvt.s32.f32 %v553
        %v618 = vcvt.s32.f32 %v554
        %v619 = vcvt.s32.f32 %v555
        %v620 = vcvt.s32.f32 %v556
        %v621 = vcvt.s32.f32 %v557
        %v622 = vcvt.s32.f32 %v558
        %v623 = vcvt.s32.f32 %v559
        %v624 = vcvt.s32.f32 %v560
        %v625 = vcvt.s32.f32 %v561
        %v626 = vcvt.s32.f32 %v562
        %v627 = vcvt.s32.f32 %v563
        %v628 = vcvt.s32.f32 %v564
        %v629 = vcvt.s32.f32 %v565
        %v630 = vcvt.s32.f32 %v566
        %v631 = vcvt.s32.f32 %v567
        %v632 = vcvt.s32.f32 %v568
        %v633 = vcvt.s32.f32 %v569
        %v634 = vcvt.s32.f32 %v570
        %v635 = vcvt.s32.f32 %v571
        %v636 = vcvt.s32.f32 %v572
        %v637 = vcvt.s32.f32 %v573
        %v638 = vcvt.s32.f32 %v574
        %v639 = vcvt.s32.f32 %v575
        %v640 = vcvt.s32.f32 %v576
        %v641 = vcvt.s32.f32 %v577
        %v642 = vcvt.s32.f32 %v578
        %v643 = vcvt.s32.f32 %v579
        %v644 = vcvt.s32.f32 %v580
        %v645 = vcvt.s32.f32 %v581
        %v646 = vcvt.s32.f32 %v582
        %647 = vset.pattern.permute.xlu0 1
        %648 = vperm.xlu0 %647, %v324
        %v649 = vpop.permute.xlu0 %648
        %650 = vset.pattern.permute.xlu0 1
        %651 = vperm.xlu0 %650, %v325
        %v652 = vpop.permute.xlu0 %651
        %653 = vset.pattern.permute.xlu0 1
        %654 = vperm.xlu0 %653, %v326
        %v655 = vpop.permute.xlu0 %654
        %656 = vset.pattern.permute.xlu0 1
        %657 = vperm.xlu0 %656, %v327
        %v658 = vpop.permute.xlu0 %657
        %659 = vset.pattern.permute.xlu0 1
        %660 = vperm.xlu0 %659, %v328
        %v661 = vpop.permute.xlu0 %660
        %662 = vset.pattern.permute.xlu0 1
        %663 = vperm.xlu0 %662, %v329
        %v664 = vpop.permute.xlu0 %663
        %665 = vset.pattern.permute.xlu0 1
        %666 = vperm.xlu0 %665, %v330
        %v667 = vpop.permute.xlu0 %666
        %668 = vset.pattern.permute.xlu0 1
        %669 = vperm.xlu0 %668, %v331
        %v670 = vpop.permute.xlu0 %669
        %671 = vset.pattern.permute.xlu0 1
        %672 = vperm.xlu0 %671, %v332
        %v673 = vpop.permute.xlu0 %672
        %674 = vset.pattern.permute.xlu0 1
        %675 = vperm.xlu0 %674, %v333
        %v676 = vpop.permute.xlu0 %675
        %677 = vset.pattern.permute.xlu0 1
        %678 = vperm.xlu0 %677, %v334
        %v679 = vpop.permute.xlu0 %678
        %680 = vset.pattern.permute.xlu0 1
        %681 = vperm.xlu0 %680, %v335
        %v682 = vpop.permute.xlu0 %681
        %683 = vset.pattern.permute.xlu0 1
        %684 = vperm.xlu0 %683, %v336
        %v685 = vpop.permute.xlu0 %684
        %686 = vset.pattern.permute.xlu0 1
        %687 = vperm.xlu0 %686, %v337
        %v688 = vpop.permute.xlu0 %687
        %689 = vset.pattern.permute.xlu0 1
        %690 = vperm.xlu0 %689, %v338
        %v691 = vpop.permute.xlu0 %690
        %692 = vset.pattern.permute.xlu0 1
        %693 = vperm.xlu0 %692, %v339
        %v694 = vpop.permute.xlu0 %693
        %695 = vset.pattern.permute.xlu0 1
        %696 = vperm.xlu0 %695, %v340
        %v697 = vpop.permute.xlu0 %696
        %698 = vset.pattern.permute.xlu0 1
        %699 = vperm.xlu0 %698, %v341
        %v700 = vpop.permute.xlu0 %699
        %701 = vset.pattern.permute.xlu0 1
        %702 = vperm.xlu0 %701, %v342
        %v703 = vpop.permute.xlu0 %702
        %704 = vset.pattern.permute.xlu0 1
        %705 = vperm.xlu0 %704, %v343
        %v706 = vpop.permute.xlu0 %705
        %707 = vset.pattern.permute.xlu0 1
        %708 = vperm.xlu0 %707, %v344
        %v709 = vpop.permute.xlu0 %708
        %710 = vset.pattern.permute.xlu0 1
        %711 = vperm.xlu0 %710, %v345
        %v712 = vpop.permute.xlu0 %711
        %713 = vset.pattern.permute.xlu0 1
        %714 = vperm.xlu0 %713, %v346
        %v715 = vpop.permute.xlu0 %714
        %716 = vset.pattern.permute.xlu0 1
        %717 = vperm.xlu0 %716, %v347
        %v718 = vpop.permute.xlu0 %717
        %719 = vset.pattern.permute.xlu0 1
        %720 = vperm.xlu0 %719, %v348
        %v721 = vpop.permute.xlu0 %720
        %722 = vset.pattern.permute.xlu0 1
        %723 = vperm.xlu0 %722, %v349
        %v724 = vpop.permute.xlu0 %723
        %725 = vset.pattern.permute.xlu0 1
        %726 = vperm.xlu0 %725, %v350
        %v727 = vpop.permute.xlu0 %726
        %728 = vset.pattern.permute.xlu0 1
        %729 = vperm.xlu0 %728, %v351
        %v730 = vpop.permute.xlu0 %729
        %731 = vset.pattern.permute.xlu0 1
        %732 = vperm.xlu0 %731, %v352
        %v733 = vpop.permute.xlu0 %732
        %734 = vset.pattern.permute.xlu0 1
        %735 = vperm.xlu0 %734, %v353
        %v736 = vpop.permute.xlu0 %735
        %737 = vset.pattern.permute.xlu0 1
        %738 = vperm.xlu0 %737, %v354
        %v739 = vpop.permute.xlu0 %738
        %740 = vset.pattern.permute.xlu0 1
        %741 = vperm.xlu0 %740, %v355
        %v742 = vpop.permute.xlu0 %741
        %vm743 = vcmp.eq.s32.totalorder %v649, %v357
        %vm744 = vcmp.eq.s32.totalorder %v649, %v358
        %vm745 = vcmp.eq.s32.totalorder %v652, %v357
        %vm746 = vcmp.eq.s32.totalorder %v652, %v358
        %vm747 = vcmp.eq.s32.totalorder %v655, %v357
        %vm748 = vcmp.eq.s32.totalorder %v655, %v358
        %vm749 = vcmp.eq.s32.totalorder %v658, %v357
        %vm750 = vcmp.eq.s32.totalorder %v658, %v358
        %vm751 = vcmp.eq.s32.totalorder %v661, %v357
        %vm752 = vcmp.eq.s32.totalorder %v661, %v358
        %vm753 = vcmp.eq.s32.totalorder %v664, %v357
        %vm754 = vcmp.eq.s32.totalorder %v664, %v358
        %vm755 = vcmp.eq.s32.totalorder %v667, %v357
        %vm756 = vcmp.eq.s32.totalorder %v667, %v358
        %vm757 = vcmp.eq.s32.totalorder %v670, %v357
        %vm758 = vcmp.eq.s32.totalorder %v670, %v358
        %vm759 = vcmp.eq.s32.totalorder %v673, %v357
        %vm760 = vcmp.eq.s32.totalorder %v673, %v358
        %vm761 = vcmp.eq.s32.totalorder %v676, %v357
        %vm762 = vcmp.eq.s32.totalorder %v676, %v358
        %vm763 = vcmp.eq.s32.totalorder %v679, %v357
        %vm764 = vcmp.eq.s32.totalorder %v679, %v358
        %vm765 = vcmp.eq.s32.totalorder %v682, %v357
        %vm766 = vcmp.eq.s32.totalorder %v682, %v358
        %vm767 = vcmp.eq.s32.totalorder %v685, %v357
        %vm768 = vcmp.eq.s32.totalorder %v685, %v358
        %vm769 = vcmp.eq.s32.totalorder %v688, %v357
        %vm770 = vcmp.eq.s32.totalorder %v688, %v358
        %vm771 = vcmp.eq.s32.totalorder %v691, %v357
        %vm772 = vcmp.eq.s32.totalorder %v691, %v358
        %vm773 = vcmp.eq.s32.totalorder %v694, %v357
        %vm774 = vcmp.eq.s32.totalorder %v694, %v358
        %vm775 = vcmp.eq.s32.totalorder %v697, %v357
        %vm776 = vcmp.eq.s32.totalorder %v697, %v358
        %vm777 = vcmp.eq.s32.totalorder %v700, %v357
        %vm778 = vcmp.eq.s32.totalorder %v700, %v358
        %vm779 = vcmp.eq.s32.totalorder %v703, %v357
        %vm780 = vcmp.eq.s32.totalorder %v703, %v358
        %vm781 = vcmp.eq.s32.totalorder %v706, %v357
        %vm782 = vcmp.eq.s32.totalorder %v706, %v358
        %vm783 = vcmp.eq.s32.totalorder %v709, %v357
        %vm784 = vcmp.eq.s32.totalorder %v709, %v358
        %vm785 = vcmp.eq.s32.totalorder %v712, %v357
        %vm786 = vcmp.eq.s32.totalorder %v712, %v358
        %vm787 = vcmp.eq.s32.totalorder %v715, %v357
        %vm788 = vcmp.eq.s32.totalorder %v715, %v358
        %vm789 = vcmp.eq.s32.totalorder %v718, %v357
        %vm790 = vcmp.eq.s32.totalorder %v718, %v358
        %vm791 = vcmp.eq.s32.totalorder %v721, %v357
        %vm792 = vcmp.eq.s32.totalorder %v721, %v358
        %vm793 = vcmp.eq.s32.totalorder %v724, %v357
        %vm794 = vcmp.eq.s32.totalorder %v724, %v358
        %vm795 = vcmp.eq.s32.totalorder %v727, %v357
        %vm796 = vcmp.eq.s32.totalorder %v727, %v358
        %vm797 = vcmp.eq.s32.totalorder %v730, %v357
        %vm798 = vcmp.eq.s32.totalorder %v730, %v358
        %vm799 = vcmp.eq.s32.totalorder %v733, %v357
        %vm800 = vcmp.eq.s32.totalorder %v733, %v358
        %vm801 = vcmp.eq.s32.totalorder %v736, %v357
        %vm802 = vcmp.eq.s32.totalorder %v736, %v358
        %vm803 = vcmp.eq.s32.totalorder %v739, %v357
        %vm804 = vcmp.eq.s32.totalorder %v739, %v358
        %vm805 = vcmp.eq.s32.totalorder %v742, %v357
        %vm806 = vcmp.eq.s32.totalorder %v742, %v358
        %v807 = vsel %vm743, 1, 0
        %v808 = vsel %vm744, 1, 0
        %v809 = vsel %vm745, 1, 0
        %v810 = vsel %vm746, 1, 0
        %v811 = vsel %vm747, 1, 0
        %v812 = vsel %vm748, 1, 0
        %v813 = vsel %vm749, 1, 0
        %v814 = vsel %vm750, 1, 0
        %v815 = vsel %vm751, 1, 0
        %v816 = vsel %vm752, 1, 0
        %v817 = vsel %vm753, 1, 0
        %v818 = vsel %vm754, 1, 0
        %v819 = vsel %vm755, 1, 0
        %v820 = vsel %vm756, 1, 0
        %v821 = vsel %vm757, 1, 0
        %v822 = vsel %vm758, 1, 0
        %v823 = vsel %vm759, 1, 0
        %v824 = vsel %vm760, 1, 0
        %v825 = vsel %vm761, 1, 0
        %v826 = vsel %vm762, 1, 0
        %v827 = vsel %vm763, 1, 0
        %v828 = vsel %vm764, 1, 0
        %v829 = vsel %vm765, 1, 0
        %v830 = vsel %vm766, 1, 0
        %v831 = vsel %vm767, 1, 0
        %v832 = vsel %vm768, 1, 0
        %v833 = vsel %vm769, 1, 0
        %v834 = vsel %vm770, 1, 0
        %v835 = vsel %vm771, 1, 0
        %v836 = vsel %vm772, 1, 0
        %v837 = vsel %vm773, 1, 0
        %v838 = vsel %vm774, 1, 0
        %v839 = vsel %vm775, 1, 0
        %v840 = vsel %vm776, 1, 0
        %v841 = vsel %vm777, 1, 0
        %v842 = vsel %vm778, 1, 0
        %v843 = vsel %vm779, 1, 0
        %v844 = vsel %vm780, 1, 0
        %v845 = vsel %vm781, 1, 0
        %v846 = vsel %vm782, 1, 0
        %v847 = vsel %vm783, 1, 0
        %v848 = vsel %vm784, 1, 0
        %v849 = vsel %vm785, 1, 0
        %v850 = vsel %vm786, 1, 0
        %v851 = vsel %vm787, 1, 0
        %v852 = vsel %vm788, 1, 0
        %v853 = vsel %vm789, 1, 0
        %v854 = vsel %vm790, 1, 0
        %v855 = vsel %vm791, 1, 0
        %v856 = vsel %vm792, 1, 0
        %v857 = vsel %vm793, 1, 0
        %v858 = vsel %vm794, 1, 0
        %v859 = vsel %vm795, 1, 0
        %v860 = vsel %vm796, 1, 0
        %v861 = vsel %vm797, 1, 0
        %v862 = vsel %vm798, 1, 0
        %v863 = vsel %vm799, 1, 0
        %v864 = vsel %vm800, 1, 0
        %v865 = vsel %vm801, 1, 0
        %v866 = vsel %vm802, 1, 0
        %v867 = vsel %vm803, 1, 0
        %v868 = vsel %vm804, 1, 0
        %v869 = vsel %vm805, 1, 0
        %v870 = vsel %vm806, 1, 0
        %v871 = vcvt.s32.f32 %v807
        %v872 = vcvt.s32.f32 %v808
        %v873 = vcvt.s32.f32 %v809
        %v874 = vcvt.s32.f32 %v810
        %v875 = vcvt.s32.f32 %v811
        %v876 = vcvt.s32.f32 %v812
        %v877 = vcvt.s32.f32 %v813
        %v878 = vcvt.s32.f32 %v814
        %v879 = vcvt.s32.f32 %v815
        %v880 = vcvt.s32.f32 %v816
        %v881 = vcvt.s32.f32 %v817
        %v882 = vcvt.s32.f32 %v818
        %v883 = vcvt.s32.f32 %v819
        %v884 = vcvt.s32.f32 %v820
        %v885 = vcvt.s32.f32 %v821
        %v886 = vcvt.s32.f32 %v822
        %v887 = vcvt.s32.f32 %v823
        %v888 = vcvt.s32.f32 %v824
        %v889 = vcvt.s32.f32 %v825
        %v890 = vcvt.s32.f32 %v826
        %v891 = vcvt.s32.f32 %v827
        %v892 = vcvt.s32.f32 %v828
        %v893 = vcvt.s32.f32 %v829
        %v894 = vcvt.s32.f32 %v830
        %v895 = vcvt.s32.f32 %v831
        %v896 = vcvt.s32.f32 %v832
        %v897 = vcvt.s32.f32 %v833
        %v898 = vcvt.s32.f32 %v834
        %v899 = vcvt.s32.f32 %v835
        %v900 = vcvt.s32.f32 %v836
        %v901 = vcvt.s32.f32 %v837
        %v902 = vcvt.s32.f32 %v838
        %v903 = vcvt.s32.f32 %v839
        %v904 = vcvt.s32.f32 %v840
        %v905 = vcvt.s32.f32 %v841
        %v906 = vcvt.s32.f32 %v842
        %v907 = vcvt.s32.f32 %v843
        %v908 = vcvt.s32.f32 %v844
        %v909 = vcvt.s32.f32 %v845
        %v910 = vcvt.s32.f32 %v846
        %v911 = vcvt.s32.f32 %v847
        %v912 = vcvt.s32.f32 %v848
        %v913 = vcvt.s32.f32 %v849
        %v914 = vcvt.s32.f32 %v850
        %v915 = vcvt.s32.f32 %v851
        %v916 = vcvt.s32.f32 %v852
        %v917 = vcvt.s32.f32 %v853
        %v918 = vcvt.s32.f32 %v854
        %v919 = vcvt.s32.f32 %v855
        %v920 = vcvt.s32.f32 %v856
        %v921 = vcvt.s32.f32 %v857
        %v922 = vcvt.s32.f32 %v858
        %v923 = vcvt.s32.f32 %v859
        %v924 = vcvt.s32.f32 %v860
        %v925 = vcvt.s32.f32 %v861
        %v926 = vcvt.s32.f32 %v862
        %v927 = vcvt.s32.f32 %v863
        %v928 = vcvt.s32.f32 %v864
        %v929 = vcvt.s32.f32 %v865
        %v930 = vcvt.s32.f32 %v866
        %v931 = vcvt.s32.f32 %v867
        %v932 = vcvt.s32.f32 %v868
        %v933 = vcvt.s32.f32 %v869
        %v934 = vcvt.s32.f32 %v870
        %v935 = vadd.f32 %v583, %v871
        %v936 = vadd.f32 %v584, %v872
        %v937 = vadd.f32 %v585, %v873
        %v938 = vadd.f32 %v586, %v874
        %v939 = vadd.f32 %v587, %v875
        %v940 = vadd.f32 %v588, %v876
        %v941 = vadd.f32 %v589, %v877
        %v942 = vadd.f32 %v590, %v878
        %v943 = vadd.f32 %v591, %v879
        %v944 = vadd.f32 %v592, %v880
        %v945 = vadd.f32 %v593, %v881
        %v946 = vadd.f32 %v594, %v882
        %v947 = vadd.f32 %v595, %v883
        %v948 = vadd.f32 %v596, %v884
        %v949 = vadd.f32 %v597, %v885
        %v950 = vadd.f32 %v598, %v886
        %v951 = vadd.f32 %v599, %v887
        %v952 = vadd.f32 %v600, %v888
        %v953 = vadd.f32 %v601, %v889
        %v954 = vadd.f32 %v602, %v890
        %v955 = vadd.f32 %v603, %v891
        %v956 = vadd.f32 %v604, %v892
        %v957 = vadd.f32 %v605, %v893
        %v958 = vadd.f32 %v606, %v894
        %v959 = vadd.f32 %v607, %v895
        %v960 = vadd.f32 %v608, %v896
        %v961 = vadd.f32 %v609, %v897
        %v962 = vadd.f32 %v610, %v898
        %v963 = vadd.f32 %v611, %v899
        %v964 = vadd.f32 %v612, %v900
        %v965 = vadd.f32 %v613, %v901
        %v966 = vadd.f32 %v614, %v902
        %v967 = vadd.f32 %v615, %v903
        %v968 = vadd.f32 %v616, %v904
        %v969 = vadd.f32 %v617, %v905
        %v970 = vadd.f32 %v618, %v906
        %v971 = vadd.f32 %v619, %v907
        %v972 = vadd.f32 %v620, %v908
        %v973 = vadd.f32 %v621, %v909
        %v974 = vadd.f32 %v622, %v910
        %v975 = vadd.f32 %v623, %v911
        %v976 = vadd.f32 %v624, %v912
        %v977 = vadd.f32 %v625, %v913
        %v978 = vadd.f32 %v626, %v914
        %v979 = vadd.f32 %v627, %v915
        %v980 = vadd.f32 %v628, %v916
        %v981 = vadd.f32 %v629, %v917
        %v982 = vadd.f32 %v630, %v918
        %v983 = vadd.f32 %v631, %v919
        %v984 = vadd.f32 %v632, %v920
        %v985 = vadd.f32 %v633, %v921
        %v986 = vadd.f32 %v634, %v922
        %v987 = vadd.f32 %v635, %v923
        %v988 = vadd.f32 %v636, %v924
        %v989 = vadd.f32 %v637, %v925
        %v990 = vadd.f32 %v638, %v926
        %v991 = vadd.f32 %v639, %v927
        %v992 = vadd.f32 %v640, %v928
        %v993 = vadd.f32 %v641, %v929
        %v994 = vadd.f32 %v642, %v930
        %v995 = vadd.f32 %v643, %v931
        %v996 = vadd.f32 %v644, %v932
        %v997 = vadd.f32 %v645, %v933
        %v998 = vadd.f32 %v646, %v934
        %999 = vset.pattern.permute.xlu0 2
        %1000 = vperm.xlu0 %999, %v324
        %v1001 = vpop.permute.xlu0 %1000
        %1002 = vset.pattern.permute.xlu0 2
        %1003 = vperm.xlu0 %1002, %v325
        %v1004 = vpop.permute.xlu0 %1003
        %1005 = vset.pattern.permute.xlu0 2
        %1006 = vperm.xlu0 %1005, %v326
        %v1007 = vpop.permute.xlu0 %1006
        %1008 = vset.pattern.permute.xlu0 2
        %1009 = vperm.xlu0 %1008, %v327
        %v1010 = vpop.permute.xlu0 %1009
        %1011 = vset.pattern.permute.xlu0 2
        %1012 = vperm.xlu0 %1011, %v328
        %v1013 = vpop.permute.xlu0 %1012
        %1014 = vset.pattern.permute.xlu0 2
        %1015 = vperm.xlu0 %1014, %v329
        %v1016 = vpop.permute.xlu0 %1015
        %1017 = vset.pattern.permute.xlu0 2
        %1018 = vperm.xlu0 %1017, %v330
        %v1019 = vpop.permute.xlu0 %1018
        %1020 = vset.pattern.permute.xlu0 2
        %1021 = vperm.xlu0 %1020, %v331
        %v1022 = vpop.permute.xlu0 %1021
        %1023 = vset.pattern.permute.xlu0 2
        %1024 = vperm.xlu0 %1023, %v332
        %v1025 = vpop.permute.xlu0 %1024
        %1026 = vset.pattern.permute.xlu0 2
        %1027 = vperm.xlu0 %1026, %v333
        %v1028 = vpop.permute.xlu0 %1027
        %1029 = vset.pattern.permute.xlu0 2
        %1030 = vperm.xlu0 %1029, %v334
        %v1031 = vpop.permute.xlu0 %1030
        %1032 = vset.pattern.permute.xlu0 2
        %1033 = vperm.xlu0 %1032, %v335
        %v1034 = vpop.permute.xlu0 %1033
        %1035 = vset.pattern.permute.xlu0 2
        %1036 = vperm.xlu0 %1035, %v336
        %v1037 = vpop.permute.xlu0 %1036
        %1038 = vset.pattern.permute.xlu0 2
        %1039 = vperm.xlu0 %1038, %v337
        %v1040 = vpop.permute.xlu0 %1039
        %1041 = vset.pattern.permute.xlu0 2
        %1042 = vperm.xlu0 %1041, %v338
        %v1043 = vpop.permute.xlu0 %1042
        %1044 = vset.pattern.permute.xlu0 2
        %1045 = vperm.xlu0 %1044, %v339
        %v1046 = vpop.permute.xlu0 %1045
        %1047 = vset.pattern.permute.xlu0 2
        %1048 = vperm.xlu0 %1047, %v340
        %v1049 = vpop.permute.xlu0 %1048
        %1050 = vset.pattern.permute.xlu0 2
        %1051 = vperm.xlu0 %1050, %v341
        %v1052 = vpop.permute.xlu0 %1051
        %1053 = vset.pattern.permute.xlu0 2
        %1054 = vperm.xlu0 %1053, %v342
        %v1055 = vpop.permute.xlu0 %1054
        %1056 = vset.pattern.permute.xlu0 2
        %1057 = vperm.xlu0 %1056, %v343
        %v1058 = vpop.permute.xlu0 %1057
        %1059 = vset.pattern.permute.xlu0 2
        %1060 = vperm.xlu0 %1059, %v344
        %v1061 = vpop.permute.xlu0 %1060
        %1062 = vset.pattern.permute.xlu0 2
        %1063 = vperm.xlu0 %1062, %v345
        %v1064 = vpop.permute.xlu0 %1063
        %1065 = vset.pattern.permute.xlu0 2
        %1066 = vperm.xlu0 %1065, %v346
        %v1067 = vpop.permute.xlu0 %1066
        %1068 = vset.pattern.permute.xlu0 2
        %1069 = vperm.xlu0 %1068, %v347
        %v1070 = vpop.permute.xlu0 %1069
        %1071 = vset.pattern.permute.xlu0 2
        %1072 = vperm.xlu0 %1071, %v348
        %v1073 = vpop.permute.xlu0 %1072
        %1074 = vset.pattern.permute.xlu0 2
        %1075 = vperm.xlu0 %1074, %v349
        %v1076 = vpop.permute.xlu0 %1075
        %1077 = vset.pattern.permute.xlu0 2
        %1078 = vperm.xlu0 %1077, %v350
        %v1079 = vpop.permute.xlu0 %1078
        %1080 = vset.pattern.permute.xlu0 2
        %1081 = vperm.xlu0 %1080, %v351
        %v1082 = vpop.permute.xlu0 %1081
        %1083 = vset.pattern.permute.xlu0 2
        %1084 = vperm.xlu0 %1083, %v352
        %v1085 = vpop.permute.xlu0 %1084
        %1086 = vset.pattern.permute.xlu0 2
        %1087 = vperm.xlu0 %1086, %v353
        %v1088 = vpop.permute.xlu0 %1087
        %1089 = vset.pattern.permute.xlu0 2
        %1090 = vperm.xlu0 %1089, %v354
        %v1091 = vpop.permute.xlu0 %1090
        %1092 = vset.pattern.permute.xlu0 2
        %1093 = vperm.xlu0 %1092, %v355
        %v1094 = vpop.permute.xlu0 %1093
        %vm1095 = vcmp.eq.s32.totalorder %v1001, %v357
        %vm1096 = vcmp.eq.s32.totalorder %v1001, %v358
        %vm1097 = vcmp.eq.s32.totalorder %v1004, %v357
        %vm1098 = vcmp.eq.s32.totalorder %v1004, %v358
        %vm1099 = vcmp.eq.s32.totalorder %v1007, %v357
        %vm1100 = vcmp.eq.s32.totalorder %v1007, %v358
        %vm1101 = vcmp.eq.s32.totalorder %v1010, %v357
        %vm1102 = vcmp.eq.s32.totalorder %v1010, %v358
        %vm1103 = vcmp.eq.s32.totalorder %v1013, %v357
        %vm1104 = vcmp.eq.s32.totalorder %v1013, %v358
        %vm1105 = vcmp.eq.s32.totalorder %v1016, %v357
        %vm1106 = vcmp.eq.s32.totalorder %v1016, %v358
        %vm1107 = vcmp.eq.s32.totalorder %v1019, %v357
        %vm1108 = vcmp.eq.s32.totalorder %v1019, %v358
        %vm1109 = vcmp.eq.s32.totalorder %v1022, %v357
        %vm1110 = vcmp.eq.s32.totalorder %v1022, %v358
        %vm1111 = vcmp.eq.s32.totalorder %v1025, %v357
        %vm1112 = vcmp.eq.s32.totalorder %v1025, %v358
        %vm1113 = vcmp.eq.s32.totalorder %v1028, %v357
        %vm1114 = vcmp.eq.s32.totalorder %v1028, %v358
        %vm1115 = vcmp.eq.s32.totalorder %v1031, %v357
        %vm1116 = vcmp.eq.s32.totalorder %v1031, %v358
        %vm1117 = vcmp.eq.s32.totalorder %v1034, %v357
        %vm1118 = vcmp.eq.s32.totalorder %v1034, %v358
        %vm1119 = vcmp.eq.s32.totalorder %v1037, %v357
        %vm1120 = vcmp.eq.s32.totalorder %v1037, %v358
        %vm1121 = vcmp.eq.s32.totalorder %v1040, %v357
        %vm1122 = vcmp.eq.s32.totalorder %v1040, %v358
        %vm1123 = vcmp.eq.s32.totalorder %v1043, %v357
        %vm1124 = vcmp.eq.s32.totalorder %v1043, %v358
        %vm1125 = vcmp.eq.s32.totalorder %v1046, %v357
        %vm1126 = vcmp.eq.s32.totalorder %v1046, %v358
        %vm1127 = vcmp.eq.s32.totalorder %v1049, %v357
        %vm1128 = vcmp.eq.s32.totalorder %v1049, %v358
        %vm1129 = vcmp.eq.s32.totalorder %v1052, %v357
        %vm1130 = vcmp.eq.s32.totalorder %v1052, %v358
        %vm1131 = vcmp.eq.s32.totalorder %v1055, %v357
        %vm1132 = vcmp.eq.s32.totalorder %v1055, %v358
        %vm1133 = vcmp.eq.s32.totalorder %v1058, %v357
        %vm1134 = vcmp.eq.s32.totalorder %v1058, %v358
        %vm1135 = vcmp.eq.s32.totalorder %v1061, %v357
        %vm1136 = vcmp.eq.s32.totalorder %v1061, %v358
        %vm1137 = vcmp.eq.s32.totalorder %v1064, %v357
        %vm1138 = vcmp.eq.s32.totalorder %v1064, %v358
        %vm1139 = vcmp.eq.s32.totalorder %v1067, %v357
        %vm1140 = vcmp.eq.s32.totalorder %v1067, %v358
        %vm1141 = vcmp.eq.s32.totalorder %v1070, %v357
        %vm1142 = vcmp.eq.s32.totalorder %v1070, %v358
        %vm1143 = vcmp.eq.s32.totalorder %v1073, %v357
        %vm1144 = vcmp.eq.s32.totalorder %v1073, %v358
        %vm1145 = vcmp.eq.s32.totalorder %v1076, %v357
        %vm1146 = vcmp.eq.s32.totalorder %v1076, %v358
        %vm1147 = vcmp.eq.s32.totalorder %v1079, %v357
        %vm1148 = vcmp.eq.s32.totalorder %v1079, %v358
        %vm1149 = vcmp.eq.s32.totalorder %v1082, %v357
        %vm1150 = vcmp.eq.s32.totalorder %v1082, %v358
        %vm1151 = vcmp.eq.s32.totalorder %v1085, %v357
        %vm1152 = vcmp.eq.s32.totalorder %v1085, %v358
        %vm1153 = vcmp.eq.s32.totalorder %v1088, %v357
        %vm1154 = vcmp.eq.s32.totalorder %v1088, %v358
        %vm1155 = vcmp.eq.s32.totalorder %v1091, %v357
        %vm1156 = vcmp.eq.s32.totalorder %v1091, %v358
        %vm1157 = vcmp.eq.s32.totalorder %v1094, %v357
        %vm1158 = vcmp.eq.s32.totalorder %v1094, %v358
        %v1159 = vsel %vm1095, 1, 0
        %v1160 = vsel %vm1096, 1, 0
        %v1161 = vsel %vm1097, 1, 0
        %v1162 = vsel %vm1098, 1, 0
        %v1163 = vsel %vm1099, 1, 0
        %v1164 = vsel %vm1100, 1, 0
        %v1165 = vsel %vm1101, 1, 0
        %v1166 = vsel %vm1102, 1, 0
        %v1167 = vsel %vm1103, 1, 0
        %v1168 = vsel %vm1104, 1, 0
        %v1169 = vsel %vm1105, 1, 0
        %v1170 = vsel %vm1106, 1, 0
        %v1171 = vsel %vm1107, 1, 0
        %v1172 = vsel %vm1108, 1, 0
        %v1173 = vsel %vm1109, 1, 0
        %v1174 = vsel %vm1110, 1, 0
        %v1175 = vsel %vm1111, 1, 0
        %v1176 = vsel %vm1112, 1, 0
        %v1177 = vsel %vm1113, 1, 0
        %v1178 = vsel %vm1114, 1, 0
        %v1179 = vsel %vm1115, 1, 0
        %v1180 = vsel %vm1116, 1, 0
        %v1181 = vsel %vm1117, 1, 0
        %v1182 = vsel %vm1118, 1, 0
        %v1183 = vsel %vm1119, 1, 0
        %v1184 = vsel %vm1120, 1, 0
        %v1185 = vsel %vm1121, 1, 0
        %v1186 = vsel %vm1122, 1, 0
        %v1187 = vsel %vm1123, 1, 0
        %v1188 = vsel %vm1124, 1, 0
        %v1189 = vsel %vm1125, 1, 0
        %v1190 = vsel %vm1126, 1, 0
        %v1191 = vsel %vm1127, 1, 0
        %v1192 = vsel %vm1128, 1, 0
        %v1193 = vsel %vm1129, 1, 0
        %v1194 = vsel %vm1130, 1, 0
        %v1195 = vsel %vm1131, 1, 0
        %v1196 = vsel %vm1132, 1, 0
        %v1197 = vsel %vm1133, 1, 0
        %v1198 = vsel %vm1134, 1, 0
        %v1199 = vsel %vm1135, 1, 0
        %v1200 = vsel %vm1136, 1, 0
        %v1201 = vsel %vm1137, 1, 0
        %v1202 = vsel %vm1138, 1, 0
        %v1203 = vsel %vm1139, 1, 0
        %v1204 = vsel %vm1140, 1, 0
        %v1205 = vsel %vm1141, 1, 0
        %v1206 = vsel %vm1142, 1, 0
        %v1207 = vsel %vm1143, 1, 0
        %v1208 = vsel %vm1144, 1, 0
        %v1209 = vsel %vm1145, 1, 0
        %v1210 = vsel %vm1146, 1, 0
        %v1211 = vsel %vm1147, 1, 0
        %v1212 = vsel %vm1148, 1, 0
        %v1213 = vsel %vm1149, 1, 0
        %v1214 = vsel %vm1150, 1, 0
        %v1215 = vsel %vm1151, 1, 0
        %v1216 = vsel %vm1152, 1, 0
        %v1217 = vsel %vm1153, 1, 0
        %v1218 = vsel %vm1154, 1, 0
        %v1219 = vsel %vm1155, 1, 0
        %v1220 = vsel %vm1156, 1, 0
        %v1221 = vsel %vm1157, 1, 0
        %v1222 = vsel %vm1158, 1, 0
        %v1223 = vcvt.s32.f32 %v1159
        %v1224 = vcvt.s32.f32 %v1160
        %v1225 = vcvt.s32.f32 %v1161
        %v1226 = vcvt.s32.f32 %v1162
        %v1227 = vcvt.s32.f32 %v1163
        %v1228 = vcvt.s32.f32 %v1164
        %v1229 = vcvt.s32.f32 %v1165
        %v1230 = vcvt.s32.f32 %v1166
        %v1231 = vcvt.s32.f32 %v1167
        %v1232 = vcvt.s32.f32 %v1168
        %v1233 = vcvt.s32.f32 %v1169
        %v1234 = vcvt.s32.f32 %v1170
        %v1235 = vcvt.s32.f32 %v1171
        %v1236 = vcvt.s32.f32 %v1172
        %v1237 = vcvt.s32.f32 %v1173
        %v1238 = vcvt.s32.f32 %v1174
        %v1239 = vcvt.s32.f32 %v1175
        %v1240 = vcvt.s32.f32 %v1176
        %v1241 = vcvt.s32.f32 %v1177
        %v1242 = vcvt.s32.f32 %v1178
        %v1243 = vcvt.s32.f32 %v1179
        %v1244 = vcvt.s32.f32 %v1180
        %v1245 = vcvt.s32.f32 %v1181
        %v1246 = vcvt.s32.f32 %v1182
        %v1247 = vcvt.s32.f32 %v1183
        %v1248 = vcvt.s32.f32 %v1184
        %v1249 = vcvt.s32.f32 %v1185
        %v1250 = vcvt.s32.f32 %v1186
        %v1251 = vcvt.s32.f32 %v1187
        %v1252 = vcvt.s32.f32 %v1188
        %v1253 = vcvt.s32.f32 %v1189
        %v1254 = vcvt.s32.f32 %v1190
        %v1255 = vcvt.s32.f32 %v1191
        %v1256 = vcvt.s32.f32 %v1192
        %v1257 = vcvt.s32.f32 %v1193
        %v1258 = vcvt.s32.f32 %v1194
        %v1259 = vcvt.s32.f32 %v1195
        %v1260 = vcvt.s32.f32 %v1196
        %v1261 = vcvt.s32.f32 %v1197
        %v1262 = vcvt.s32.f32 %v1198
        %v1263 = vcvt.s32.f32 %v1199
        %v1264 = vcvt.s32.f32 %v1200
        %v1265 = vcvt.s32.f32 %v1201
        %v1266 = vcvt.s32.f32 %v1202
        %v1267 = vcvt.s32.f32 %v1203
        %v1268 = vcvt.s32.f32 %v1204
        %v1269 = vcvt.s32.f32 %v1205
        %v1270 = vcvt.s32.f32 %v1206
        %v1271 = vcvt.s32.f32 %v1207
        %v1272 = vcvt.s32.f32 %v1208
        %v1273 = vcvt.s32.f32 %v1209
        %v1274 = vcvt.s32.f32 %v1210
        %v1275 = vcvt.s32.f32 %v1211
        %v1276 = vcvt.s32.f32 %v1212
        %v1277 = vcvt.s32.f32 %v1213
        %v1278 = vcvt.s32.f32 %v1214
        %v1279 = vcvt.s32.f32 %v1215
        %v1280 = vcvt.s32.f32 %v1216
        %v1281 = vcvt.s32.f32 %v1217
        %v1282 = vcvt.s32.f32 %v1218
        %v1283 = vcvt.s32.f32 %v1219
        %v1284 = vcvt.s32.f32 %v1220
        %v1285 = vcvt.s32.f32 %v1221
        %v1286 = vcvt.s32.f32 %v1222
        %v1287 = vadd.f32 %v935, %v1223
        %v1288 = vadd.f32 %v936, %v1224
        %v1289 = vadd.f32 %v937, %v1225
        %v1290 = vadd.f32 %v938, %v1226
        %v1291 = vadd.f32 %v939, %v1227
        %v1292 = vadd.f32 %v940, %v1228
        %v1293 = vadd.f32 %v941, %v1229
        %v1294 = vadd.f32 %v942, %v1230
        %v1295 = vadd.f32 %v943, %v1231
        %v1296 = vadd.f32 %v944, %v1232
        %v1297 = vadd.f32 %v945, %v1233
        %v1298 = vadd.f32 %v946, %v1234
        %v1299 = vadd.f32 %v947, %v1235
        %v1300 = vadd.f32 %v948, %v1236
        %v1301 = vadd.f32 %v949, %v1237
        %v1302 = vadd.f32 %v950, %v1238
        %v1303 = vadd.f32 %v951, %v1239
        %v1304 = vadd.f32 %v952, %v1240
        %v1305 = vadd.f32 %v953, %v1241
        %v1306 = vadd.f32 %v954, %v1242
        %v1307 = vadd.f32 %v955, %v1243
        %v1308 = vadd.f32 %v956, %v1244
        %v1309 = vadd.f32 %v957, %v1245
        %v1310 = vadd.f32 %v958, %v1246
        %v1311 = vadd.f32 %v959, %v1247
        %v1312 = vadd.f32 %v960, %v1248
        %v1313 = vadd.f32 %v961, %v1249
        %v1314 = vadd.f32 %v962, %v1250
        %v1315 = vadd.f32 %v963, %v1251
        %v1316 = vadd.f32 %v964, %v1252
        %v1317 = vadd.f32 %v965, %v1253
        %v1318 = vadd.f32 %v966, %v1254
        %v1319 = vadd.f32 %v967, %v1255
        %v1320 = vadd.f32 %v968, %v1256
        %v1321 = vadd.f32 %v969, %v1257
        %v1322 = vadd.f32 %v970, %v1258
        %v1323 = vadd.f32 %v971, %v1259
        %v1324 = vadd.f32 %v972, %v1260
        %v1325 = vadd.f32 %v973, %v1261
        %v1326 = vadd.f32 %v974, %v1262
        %v1327 = vadd.f32 %v975, %v1263
        %v1328 = vadd.f32 %v976, %v1264
        %v1329 = vadd.f32 %v977, %v1265
        %v1330 = vadd.f32 %v978, %v1266
        %v1331 = vadd.f32 %v979, %v1267
        %v1332 = vadd.f32 %v980, %v1268
        %v1333 = vadd.f32 %v981, %v1269
        %v1334 = vadd.f32 %v982, %v1270
        %v1335 = vadd.f32 %v983, %v1271
        %v1336 = vadd.f32 %v984, %v1272
        %v1337 = vadd.f32 %v985, %v1273
        %v1338 = vadd.f32 %v986, %v1274
        %v1339 = vadd.f32 %v987, %v1275
        %v1340 = vadd.f32 %v988, %v1276
        %v1341 = vadd.f32 %v989, %v1277
        %v1342 = vadd.f32 %v990, %v1278
        %v1343 = vadd.f32 %v991, %v1279
        %v1344 = vadd.f32 %v992, %v1280
        %v1345 = vadd.f32 %v993, %v1281
        %v1346 = vadd.f32 %v994, %v1282
        %v1347 = vadd.f32 %v995, %v1283
        %v1348 = vadd.f32 %v996, %v1284
        %v1349 = vadd.f32 %v997, %v1285
        %v1350 = vadd.f32 %v998, %v1286
        %1351 = vset.pattern.permute.xlu0 3
        %1352 = vperm.xlu0 %1351, %v324
        %v1353 = vpop.permute.xlu0 %1352
        %1354 = vset.pattern.permute.xlu0 3
        %1355 = vperm.xlu0 %1354, %v325
        %v1356 = vpop.permute.xlu0 %1355
        %1357 = vset.pattern.permute.xlu0 3
        %1358 = vperm.xlu0 %1357, %v326
        %v1359 = vpop.permute.xlu0 %1358
        %1360 = vset.pattern.permute.xlu0 3
        %1361 = vperm.xlu0 %1360, %v327
        %v1362 = vpop.permute.xlu0 %1361
        %1363 = vset.pattern.permute.xlu0 3
        %1364 = vperm.xlu0 %1363, %v328
        %v1365 = vpop.permute.xlu0 %1364
        %1366 = vset.pattern.permute.xlu0 3
        %1367 = vperm.xlu0 %1366, %v329
        %v1368 = vpop.permute.xlu0 %1367
        %1369 = vset.pattern.permute.xlu0 3
        %1370 = vperm.xlu0 %1369, %v330
        %v1371 = vpop.permute.xlu0 %1370
        %1372 = vset.pattern.permute.xlu0 3
        %1373 = vperm.xlu0 %1372, %v331
        %v1374 = vpop.permute.xlu0 %1373
        %1375 = vset.pattern.permute.xlu0 3
        %1376 = vperm.xlu0 %1375, %v332
        %v1377 = vpop.permute.xlu0 %1376
        %1378 = vset.pattern.permute.xlu0 3
        %1379 = vperm.xlu0 %1378, %v333
        %v1380 = vpop.permute.xlu0 %1379
        %1381 = vset.pattern.permute.xlu0 3
        %1382 = vperm.xlu0 %1381, %v334
        %v1383 = vpop.permute.xlu0 %1382
        %1384 = vset.pattern.permute.xlu0 3
        %1385 = vperm.xlu0 %1384, %v335
        %v1386 = vpop.permute.xlu0 %1385
        %1387 = vset.pattern.permute.xlu0 3
        %1388 = vperm.xlu0 %1387, %v336
        %v1389 = vpop.permute.xlu0 %1388
        %1390 = vset.pattern.permute.xlu0 3
        %1391 = vperm.xlu0 %1390, %v337
        %v1392 = vpop.permute.xlu0 %1391
        %1393 = vset.pattern.permute.xlu0 3
        %1394 = vperm.xlu0 %1393, %v338
        %v1395 = vpop.permute.xlu0 %1394
        %1396 = vset.pattern.permute.xlu0 3
        %1397 = vperm.xlu0 %1396, %v339
        %v1398 = vpop.permute.xlu0 %1397
        %1399 = vset.pattern.permute.xlu0 3
        %1400 = vperm.xlu0 %1399, %v340
        %v1401 = vpop.permute.xlu0 %1400
        %1402 = vset.pattern.permute.xlu0 3
        %1403 = vperm.xlu0 %1402, %v341
        %v1404 = vpop.permute.xlu0 %1403
        %1405 = vset.pattern.permute.xlu0 3
        %1406 = vperm.xlu0 %1405, %v342
        %v1407 = vpop.permute.xlu0 %1406
        %1408 = vset.pattern.permute.xlu0 3
        %1409 = vperm.xlu0 %1408, %v343
        %v1410 = vpop.permute.xlu0 %1409
        %1411 = vset.pattern.permute.xlu0 3
        %1412 = vperm.xlu0 %1411, %v344
        %v1413 = vpop.permute.xlu0 %1412
        %1414 = vset.pattern.permute.xlu0 3
        %1415 = vperm.xlu0 %1414, %v345
        %v1416 = vpop.permute.xlu0 %1415
        %1417 = vset.pattern.permute.xlu0 3
        %1418 = vperm.xlu0 %1417, %v346
        %v1419 = vpop.permute.xlu0 %1418
        %1420 = vset.pattern.permute.xlu0 3
        %1421 = vperm.xlu0 %1420, %v347
        %v1422 = vpop.permute.xlu0 %1421
        %1423 = vset.pattern.permute.xlu0 3
        %1424 = vperm.xlu0 %1423, %v348
        %v1425 = vpop.permute.xlu0 %1424
        %1426 = vset.pattern.permute.xlu0 3
        %1427 = vperm.xlu0 %1426, %v349
        %v1428 = vpop.permute.xlu0 %1427
        %1429 = vset.pattern.permute.xlu0 3
        %1430 = vperm.xlu0 %1429, %v350
        %v1431 = vpop.permute.xlu0 %1430
        %1432 = vset.pattern.permute.xlu0 3
        %1433 = vperm.xlu0 %1432, %v351
        %v1434 = vpop.permute.xlu0 %1433
        %1435 = vset.pattern.permute.xlu0 3
        %1436 = vperm.xlu0 %1435, %v352
        %v1437 = vpop.permute.xlu0 %1436
        %1438 = vset.pattern.permute.xlu0 3
        %1439 = vperm.xlu0 %1438, %v353
        %v1440 = vpop.permute.xlu0 %1439
        %1441 = vset.pattern.permute.xlu0 3
        %1442 = vperm.xlu0 %1441, %v354
        %v1443 = vpop.permute.xlu0 %1442
        %1444 = vset.pattern.permute.xlu0 3
        %1445 = vperm.xlu0 %1444, %v355
        %v1446 = vpop.permute.xlu0 %1445
        %vm1447 = vcmp.eq.s32.totalorder %v1353, %v357
        %vm1448 = vcmp.eq.s32.totalorder %v1353, %v358
        %vm1449 = vcmp.eq.s32.totalorder %v1356, %v357
        %vm1450 = vcmp.eq.s32.totalorder %v1356, %v358
        %vm1451 = vcmp.eq.s32.totalorder %v1359, %v357
        %vm1452 = vcmp.eq.s32.totalorder %v1359, %v358
        %vm1453 = vcmp.eq.s32.totalorder %v1362, %v357
        %vm1454 = vcmp.eq.s32.totalorder %v1362, %v358
        %vm1455 = vcmp.eq.s32.totalorder %v1365, %v357
        %vm1456 = vcmp.eq.s32.totalorder %v1365, %v358
        %vm1457 = vcmp.eq.s32.totalorder %v1368, %v357
        %vm1458 = vcmp.eq.s32.totalorder %v1368, %v358
        %vm1459 = vcmp.eq.s32.totalorder %v1371, %v357
        %vm1460 = vcmp.eq.s32.totalorder %v1371, %v358
        %vm1461 = vcmp.eq.s32.totalorder %v1374, %v357
        %vm1462 = vcmp.eq.s32.totalorder %v1374, %v358
        %vm1463 = vcmp.eq.s32.totalorder %v1377, %v357
        %vm1464 = vcmp.eq.s32.totalorder %v1377, %v358
        %vm1465 = vcmp.eq.s32.totalorder %v1380, %v357
        %vm1466 = vcmp.eq.s32.totalorder %v1380, %v358
        %vm1467 = vcmp.eq.s32.totalorder %v1383, %v357
        %vm1468 = vcmp.eq.s32.totalorder %v1383, %v358
        %vm1469 = vcmp.eq.s32.totalorder %v1386, %v357
        %vm1470 = vcmp.eq.s32.totalorder %v1386, %v358
        %vm1471 = vcmp.eq.s32.totalorder %v1389, %v357
        %vm1472 = vcmp.eq.s32.totalorder %v1389, %v358
        %vm1473 = vcmp.eq.s32.totalorder %v1392, %v357
        %vm1474 = vcmp.eq.s32.totalorder %v1392, %v358
        %vm1475 = vcmp.eq.s32.totalorder %v1395, %v357
        %vm1476 = vcmp.eq.s32.totalorder %v1395, %v358
        %vm1477 = vcmp.eq.s32.totalorder %v1398, %v357
        %vm1478 = vcmp.eq.s32.totalorder %v1398, %v358
        %vm1479 = vcmp.eq.s32.totalorder %v1401, %v357
        %vm1480 = vcmp.eq.s32.totalorder %v1401, %v358
        %vm1481 = vcmp.eq.s32.totalorder %v1404, %v357
        %vm1482 = vcmp.eq.s32.totalorder %v1404, %v358
        %vm1483 = vcmp.eq.s32.totalorder %v1407, %v357
        %vm1484 = vcmp.eq.s32.totalorder %v1407, %v358
        %vm1485 = vcmp.eq.s32.totalorder %v1410, %v357
        %vm1486 = vcmp.eq.s32.totalorder %v1410, %v358
        %vm1487 = vcmp.eq.s32.totalorder %v1413, %v357
        %vm1488 = vcmp.eq.s32.totalorder %v1413, %v358
        %vm1489 = vcmp.eq.s32.totalorder %v1416, %v357
        %vm1490 = vcmp.eq.s32.totalorder %v1416, %v358
        %vm1491 = vcmp.eq.s32.totalorder %v1419, %v357
        %vm1492 = vcmp.eq.s32.totalorder %v1419, %v358
        %vm1493 = vcmp.eq.s32.totalorder %v1422, %v357
        %vm1494 = vcmp.eq.s32.totalorder %v1422, %v358
        %vm1495 = vcmp.eq.s32.totalorder %v1425, %v357
        %vm1496 = vcmp.eq.s32.totalorder %v1425, %v358
        %vm1497 = vcmp.eq.s32.totalorder %v1428, %v357
        %vm1498 = vcmp.eq.s32.totalorder %v1428, %v358
        %vm1499 = vcmp.eq.s32.totalorder %v1431, %v357
        %vm1500 = vcmp.eq.s32.totalorder %v1431, %v358
        %vm1501 = vcmp.eq.s32.totalorder %v1434, %v357
        %vm1502 = vcmp.eq.s32.totalorder %v1434, %v358
        %vm1503 = vcmp.eq.s32.totalorder %v1437, %v357
        %vm1504 = vcmp.eq.s32.totalorder %v1437, %v358
        %vm1505 = vcmp.eq.s32.totalorder %v1440, %v357
        %vm1506 = vcmp.eq.s32.totalorder %v1440, %v358
        %vm1507 = vcmp.eq.s32.totalorder %v1443, %v357
        %vm1508 = vcmp.eq.s32.totalorder %v1443, %v358
        %vm1509 = vcmp.eq.s32.totalorder %v1446, %v357
        %vm1510 = vcmp.eq.s32.totalorder %v1446, %v358
        %v1511 = vsel %vm1447, 1, 0
        %v1512 = vsel %vm1448, 1, 0
        %v1513 = vsel %vm1449, 1, 0
        %v1514 = vsel %vm1450, 1, 0
        %v1515 = vsel %vm1451, 1, 0
        %v1516 = vsel %vm1452, 1, 0
        %v1517 = vsel %vm1453, 1, 0
        %v1518 = vsel %vm1454, 1, 0
        %v1519 = vsel %vm1455, 1, 0
        %v1520 = vsel %vm1456, 1, 0
        %v1521 = vsel %vm1457, 1, 0
        %v1522 = vsel %vm1458, 1, 0
        %v1523 = vsel %vm1459, 1, 0
        %v1524 = vsel %vm1460, 1, 0
        %v1525 = vsel %vm1461, 1, 0
        %v1526 = vsel %vm1462, 1, 0
        %v1527 = vsel %vm1463, 1, 0
        %v1528 = vsel %vm1464, 1, 0
        %v1529 = vsel %vm1465, 1, 0
        %v1530 = vsel %vm1466, 1, 0
        %v1531 = vsel %vm1467, 1, 0
        %v1532 = vsel %vm1468, 1, 0
        %v1533 = vsel %vm1469, 1, 0
        %v1534 = vsel %vm1470, 1, 0
        %v1535 = vsel %vm1471, 1, 0
        %v1536 = vsel %vm1472, 1, 0
        %v1537 = vsel %vm1473, 1, 0
        %v1538 = vsel %vm1474, 1, 0
        %v1539 = vsel %vm1475, 1, 0
        %v1540 = vsel %vm1476, 1, 0
        %v1541 = vsel %vm1477, 1, 0
        %v1542 = vsel %vm1478, 1, 0
        %v1543 = vsel %vm1479, 1, 0
        %v1544 = vsel %vm1480, 1, 0
        %v1545 = vsel %vm1481, 1, 0
        %v1546 = vsel %vm1482, 1, 0
        %v1547 = vsel %vm1483, 1, 0
        %v1548 = vsel %vm1484, 1, 0
        %v1549 = vsel %vm1485, 1, 0
        %v1550 = vsel %vm1486, 1, 0
        %v1551 = vsel %vm1487, 1, 0
        %v1552 = vsel %vm1488, 1, 0
        %v1553 = vsel %vm1489, 1, 0
        %v1554 = vsel %vm1490, 1, 0
        %v1555 = vsel %vm1491, 1, 0
        %v1556 = vsel %vm1492, 1, 0
        %v1557 = vsel %vm1493, 1, 0
        %v1558 = vsel %vm1494, 1, 0
        %v1559 = vsel %vm1495, 1, 0
        %v1560 = vsel %vm1496, 1, 0
        %v1561 = vsel %vm1497, 1, 0
        %v1562 = vsel %vm1498, 1, 0
        %v1563 = vsel %vm1499, 1, 0
        %v1564 = vsel %vm1500, 1, 0
        %v1565 = vsel %vm1501, 1, 0
        %v1566 = vsel %vm1502, 1, 0
        %v1567 = vsel %vm1503, 1, 0
        %v1568 = vsel %vm1504, 1, 0
        %v1569 = vsel %vm1505, 1, 0
        %v1570 = vsel %vm1506, 1, 0
        %v1571 = vsel %vm1507, 1, 0
        %v1572 = vsel %vm1508, 1, 0
        %v1573 = vsel %vm1509, 1, 0
        %v1574 = vsel %vm1510, 1, 0
        %v1575 = vcvt.s32.f32 %v1511
        %v1576 = vcvt.s32.f32 %v1512
        %v1577 = vcvt.s32.f32 %v1513
        %v1578 = vcvt.s32.f32 %v1514
        %v1579 = vcvt.s32.f32 %v1515
        %v1580 = vcvt.s32.f32 %v1516
        %v1581 = vcvt.s32.f32 %v1517
        %v1582 = vcvt.s32.f32 %v1518
        %v1583 = vcvt.s32.f32 %v1519
        %v1584 = vcvt.s32.f32 %v1520
        %v1585 = vcvt.s32.f32 %v1521
        %v1586 = vcvt.s32.f32 %v1522
        %v1587 = vcvt.s32.f32 %v1523
        %v1588 = vcvt.s32.f32 %v1524
        %v1589 = vcvt.s32.f32 %v1525
        %v1590 = vcvt.s32.f32 %v1526
        %v1591 = vcvt.s32.f32 %v1527
        %v1592 = vcvt.s32.f32 %v1528
        %v1593 = vcvt.s32.f32 %v1529
        %v1594 = vcvt.s32.f32 %v1530
        %v1595 = vcvt.s32.f32 %v1531
        %v1596 = vcvt.s32.f32 %v1532
        %v1597 = vcvt.s32.f32 %v1533
        %v1598 = vcvt.s32.f32 %v1534
        %v1599 = vcvt.s32.f32 %v1535
        %v1600 = vcvt.s32.f32 %v1536
        %v1601 = vcvt.s32.f32 %v1537
        %v1602 = vcvt.s32.f32 %v1538
        %v1603 = vcvt.s32.f32 %v1539
        %v1604 = vcvt.s32.f32 %v1540
        %v1605 = vcvt.s32.f32 %v1541
        %v1606 = vcvt.s32.f32 %v1542
        %v1607 = vcvt.s32.f32 %v1543
        %v1608 = vcvt.s32.f32 %v1544
        %v1609 = vcvt.s32.f32 %v1545
        %v1610 = vcvt.s32.f32 %v1546
        %v1611 = vcvt.s32.f32 %v1547
        %v1612 = vcvt.s32.f32 %v1548
        %v1613 = vcvt.s32.f32 %v1549
        %v1614 = vcvt.s32.f32 %v1550
        %v1615 = vcvt.s32.f32 %v1551
        %v1616 = vcvt.s32.f32 %v1552
        %v1617 = vcvt.s32.f32 %v1553
        %v1618 = vcvt.s32.f32 %v1554
        %v1619 = vcvt.s32.f32 %v1555
        %v1620 = vcvt.s32.f32 %v1556
        %v1621 = vcvt.s32.f32 %v1557
        %v1622 = vcvt.s32.f32 %v1558
        %v1623 = vcvt.s32.f32 %v1559
        %v1624 = vcvt.s32.f32 %v1560
        %v1625 = vcvt.s32.f32 %v1561
        %v1626 = vcvt.s32.f32 %v1562
        %v1627 = vcvt.s32.f32 %v1563
        %v1628 = vcvt.s32.f32 %v1564
        %v1629 = vcvt.s32.f32 %v1565
        %v1630 = vcvt.s32.f32 %v1566
        %v1631 = vcvt.s32.f32 %v1567
        %v1632 = vcvt.s32.f32 %v1568
        %v1633 = vcvt.s32.f32 %v1569
        %v1634 = vcvt.s32.f32 %v1570
        %v1635 = vcvt.s32.f32 %v1571
        %v1636 = vcvt.s32.f32 %v1572
        %v1637 = vcvt.s32.f32 %v1573
        %v1638 = vcvt.s32.f32 %v1574
        %v1639 = vadd.f32 %v1287, %v1575
        %v1640 = vadd.f32 %v1288, %v1576
        %v1641 = vadd.f32 %v1289, %v1577
        %v1642 = vadd.f32 %v1290, %v1578
        %v1643 = vadd.f32 %v1291, %v1579
        %v1644 = vadd.f32 %v1292, %v1580
        %v1645 = vadd.f32 %v1293, %v1581
        %v1646 = vadd.f32 %v1294, %v1582
        %v1647 = vadd.f32 %v1295, %v1583
        %v1648 = vadd.f32 %v1296, %v1584
        %v1649 = vadd.f32 %v1297, %v1585
        %v1650 = vadd.f32 %v1298, %v1586
        %v1651 = vadd.f32 %v1299, %v1587
        %v1652 = vadd.f32 %v1300, %v1588
        %v1653 = vadd.f32 %v1301, %v1589
        %v1654 = vadd.f32 %v1302, %v1590
        %v1655 = vadd.f32 %v1303, %v1591
        %v1656 = vadd.f32 %v1304, %v1592
        %v1657 = vadd.f32 %v1305, %v1593
        %v1658 = vadd.f32 %v1306, %v1594
        %v1659 = vadd.f32 %v1307, %v1595
        %v1660 = vadd.f32 %v1308, %v1596
        %v1661 = vadd.f32 %v1309, %v1597
        %v1662 = vadd.f32 %v1310, %v1598
        %v1663 = vadd.f32 %v1311, %v1599
        %v1664 = vadd.f32 %v1312, %v1600
        %v1665 = vadd.f32 %v1313, %v1601
        %v1666 = vadd.f32 %v1314, %v1602
        %v1667 = vadd.f32 %v1315, %v1603
        %v1668 = vadd.f32 %v1316, %v1604
        %v1669 = vadd.f32 %v1317, %v1605
        %v1670 = vadd.f32 %v1318, %v1606
        %v1671 = vadd.f32 %v1319, %v1607
        %v1672 = vadd.f32 %v1320, %v1608
        %v1673 = vadd.f32 %v1321, %v1609
        %v1674 = vadd.f32 %v1322, %v1610
        %v1675 = vadd.f32 %v1323, %v1611
        %v1676 = vadd.f32 %v1324, %v1612
        %v1677 = vadd.f32 %v1325, %v1613
        %v1678 = vadd.f32 %v1326, %v1614
        %v1679 = vadd.f32 %v1327, %v1615
        %v1680 = vadd.f32 %v1328, %v1616
        %v1681 = vadd.f32 %v1329, %v1617
        %v1682 = vadd.f32 %v1330, %v1618
        %v1683 = vadd.f32 %v1331, %v1619
        %v1684 = vadd.f32 %v1332, %v1620
        %v1685 = vadd.f32 %v1333, %v1621
        %v1686 = vadd.f32 %v1334, %v1622
        %v1687 = vadd.f32 %v1335, %v1623
        %v1688 = vadd.f32 %v1336, %v1624
        %v1689 = vadd.f32 %v1337, %v1625
        %v1690 = vadd.f32 %v1338, %v1626
        %v1691 = vadd.f32 %v1339, %v1627
        %v1692 = vadd.f32 %v1340, %v1628
        %v1693 = vadd.f32 %v1341, %v1629
        %v1694 = vadd.f32 %v1342, %v1630
        %v1695 = vadd.f32 %v1343, %v1631
        %v1696 = vadd.f32 %v1344, %v1632
        %v1697 = vadd.f32 %v1345, %v1633
        %v1698 = vadd.f32 %v1346, %v1634
        %v1699 = vadd.f32 %v1347, %v1635
        %v1700 = vadd.f32 %v1348, %v1636
        %v1701 = vadd.f32 %v1349, %v1637
        %v1702 = vadd.f32 %v1350, %v1638
        %1703 = vset.pattern.permute.xlu0 4
        %1704 = vperm.xlu0 %1703, %v324
        %v1705 = vpop.permute.xlu0 %1704
        %1706 = vset.pattern.permute.xlu0 4
        %1707 = vperm.xlu0 %1706, %v325
        %v1708 = vpop.permute.xlu0 %1707
        %1709 = vset.pattern.permute.xlu0 4
        %1710 = vperm.xlu0 %1709, %v326
        %v1711 = vpop.permute.xlu0 %1710
        %1712 = vset.pattern.permute.xlu0 4
        %1713 = vperm.xlu0 %1712, %v327
        %v1714 = vpop.permute.xlu0 %1713
        %1715 = vset.pattern.permute.xlu0 4
        %1716 = vperm.xlu0 %1715, %v328
        %v1717 = vpop.permute.xlu0 %1716
        %1718 = vset.pattern.permute.xlu0 4
        %1719 = vperm.xlu0 %1718, %v329
        %v1720 = vpop.permute.xlu0 %1719
        %1721 = vset.pattern.permute.xlu0 4
        %1722 = vperm.xlu0 %1721, %v330
        %v1723 = vpop.permute.xlu0 %1722
        %1724 = vset.pattern.permute.xlu0 4
        %1725 = vperm.xlu0 %1724, %v331
        %v1726 = vpop.permute.xlu0 %1725
        %1727 = vset.pattern.permute.xlu0 4
        %1728 = vperm.xlu0 %1727, %v332
        %v1729 = vpop.permute.xlu0 %1728
        %1730 = vset.pattern.permute.xlu0 4
        %1731 = vperm.xlu0 %1730, %v333
        %v1732 = vpop.permute.xlu0 %1731
        %1733 = vset.pattern.permute.xlu0 4
        %1734 = vperm.xlu0 %1733, %v334
        %v1735 = vpop.permute.xlu0 %1734
        %1736 = vset.pattern.permute.xlu0 4
        %1737 = vperm.xlu0 %1736, %v335
        %v1738 = vpop.permute.xlu0 %1737
        %1739 = vset.pattern.permute.xlu0 4
        %1740 = vperm.xlu0 %1739, %v336
        %v1741 = vpop.permute.xlu0 %1740
        %1742 = vset.pattern.permute.xlu0 4
        %1743 = vperm.xlu0 %1742, %v337
        %v1744 = vpop.permute.xlu0 %1743
        %1745 = vset.pattern.permute.xlu0 4
        %1746 = vperm.xlu0 %1745, %v338
        %v1747 = vpop.permute.xlu0 %1746
        %1748 = vset.pattern.permute.xlu0 4
        %1749 = vperm.xlu0 %1748, %v339
        %v1750 = vpop.permute.xlu0 %1749
        %1751 = vset.pattern.permute.xlu0 4
        %1752 = vperm.xlu0 %1751, %v340
        %v1753 = vpop.permute.xlu0 %1752
        %1754 = vset.pattern.permute.xlu0 4
        %1755 = vperm.xlu0 %1754, %v341
        %v1756 = vpop.permute.xlu0 %1755
        %1757 = vset.pattern.permute.xlu0 4
        %1758 = vperm.xlu0 %1757, %v342
        %v1759 = vpop.permute.xlu0 %1758
        %1760 = vset.pattern.permute.xlu0 4
        %1761 = vperm.xlu0 %1760, %v343
        %v1762 = vpop.permute.xlu0 %1761
        %1763 = vset.pattern.permute.xlu0 4
        %1764 = vperm.xlu0 %1763, %v344
        %v1765 = vpop.permute.xlu0 %1764
        %1766 = vset.pattern.permute.xlu0 4
        %1767 = vperm.xlu0 %1766, %v345
        %v1768 = vpop.permute.xlu0 %1767
        %1769 = vset.pattern.permute.xlu0 4
        %1770 = vperm.xlu0 %1769, %v346
        %v1771 = vpop.permute.xlu0 %1770
        %1772 = vset.pattern.permute.xlu0 4
        %1773 = vperm.xlu0 %1772, %v347
        %v1774 = vpop.permute.xlu0 %1773
        %1775 = vset.pattern.permute.xlu0 4
        %1776 = vperm.xlu0 %1775, %v348
        %v1777 = vpop.permute.xlu0 %1776
        %1778 = vset.pattern.permute.xlu0 4
        %1779 = vperm.xlu0 %1778, %v349
        %v1780 = vpop.permute.xlu0 %1779
        %1781 = vset.pattern.permute.xlu0 4
        %1782 = vperm.xlu0 %1781, %v350
        %v1783 = vpop.permute.xlu0 %1782
        %1784 = vset.pattern.permute.xlu0 4
        %1785 = vperm.xlu0 %1784, %v351
        %v1786 = vpop.permute.xlu0 %1785
        %1787 = vset.pattern.permute.xlu0 4
        %1788 = vperm.xlu0 %1787, %v352
        %v1789 = vpop.permute.xlu0 %1788
        %1790 = vset.pattern.permute.xlu0 4
        %1791 = vperm.xlu0 %1790, %v353
        %v1792 = vpop.permute.xlu0 %1791
        %1793 = vset.pattern.permute.xlu0 4
        %1794 = vperm.xlu0 %1793, %v354
        %v1795 = vpop.permute.xlu0 %1794
        %1796 = vset.pattern.permute.xlu0 4
        %1797 = vperm.xlu0 %1796, %v355
        %v1798 = vpop.permute.xlu0 %1797
        %vm1799 = vcmp.eq.s32.totalorder %v1705, %v357
        %vm1800 = vcmp.eq.s32.totalorder %v1705, %v358
        %vm1801 = vcmp.eq.s32.totalorder %v1708, %v357
        %vm1802 = vcmp.eq.s32.totalorder %v1708, %v358
        %vm1803 = vcmp.eq.s32.totalorder %v1711, %v357
        %vm1804 = vcmp.eq.s32.totalorder %v1711, %v358
        %vm1805 = vcmp.eq.s32.totalorder %v1714, %v357
        %vm1806 = vcmp.eq.s32.totalorder %v1714, %v358
        %vm1807 = vcmp.eq.s32.totalorder %v1717, %v357
        %vm1808 = vcmp.eq.s32.totalorder %v1717, %v358
        %vm1809 = vcmp.eq.s32.totalorder %v1720, %v357
        %vm1810 = vcmp.eq.s32.totalorder %v1720, %v358
        %vm1811 = vcmp.eq.s32.totalorder %v1723, %v357
        %vm1812 = vcmp.eq.s32.totalorder %v1723, %v358
        %vm1813 = vcmp.eq.s32.totalorder %v1726, %v357
        %vm1814 = vcmp.eq.s32.totalorder %v1726, %v358
        %vm1815 = vcmp.eq.s32.totalorder %v1729, %v357
        %vm1816 = vcmp.eq.s32.totalorder %v1729, %v358
        %vm1817 = vcmp.eq.s32.totalorder %v1732, %v357
        %vm1818 = vcmp.eq.s32.totalorder %v1732, %v358
        %vm1819 = vcmp.eq.s32.totalorder %v1735, %v357
        %vm1820 = vcmp.eq.s32.totalorder %v1735, %v358
        %vm1821 = vcmp.eq.s32.totalorder %v1738, %v357
        %vm1822 = vcmp.eq.s32.totalorder %v1738, %v358
        %vm1823 = vcmp.eq.s32.totalorder %v1741, %v357
        %vm1824 = vcmp.eq.s32.totalorder %v1741, %v358
        %vm1825 = vcmp.eq.s32.totalorder %v1744, %v357
        %vm1826 = vcmp.eq.s32.totalorder %v1744, %v358
        %vm1827 = vcmp.eq.s32.totalorder %v1747, %v357
        %vm1828 = vcmp.eq.s32.totalorder %v1747, %v358
        %vm1829 = vcmp.eq.s32.totalorder %v1750, %v357
        %vm1830 = vcmp.eq.s32.totalorder %v1750, %v358
        %vm1831 = vcmp.eq.s32.totalorder %v1753, %v357
        %vm1832 = vcmp.eq.s32.totalorder %v1753, %v358
        %vm1833 = vcmp.eq.s32.totalorder %v1756, %v357
        %vm1834 = vcmp.eq.s32.totalorder %v1756, %v358
        %vm1835 = vcmp.eq.s32.totalorder %v1759, %v357
        %vm1836 = vcmp.eq.s32.totalorder %v1759, %v358
        %vm1837 = vcmp.eq.s32.totalorder %v1762, %v357
        %vm1838 = vcmp.eq.s32.totalorder %v1762, %v358
        %vm1839 = vcmp.eq.s32.totalorder %v1765, %v357
        %vm1840 = vcmp.eq.s32.totalorder %v1765, %v358
        %vm1841 = vcmp.eq.s32.totalorder %v1768, %v357
        %vm1842 = vcmp.eq.s32.totalorder %v1768, %v358
        %vm1843 = vcmp.eq.s32.totalorder %v1771, %v357
        %vm1844 = vcmp.eq.s32.totalorder %v1771, %v358
        %vm1845 = vcmp.eq.s32.totalorder %v1774, %v357
        %vm1846 = vcmp.eq.s32.totalorder %v1774, %v358
        %vm1847 = vcmp.eq.s32.totalorder %v1777, %v357
        %vm1848 = vcmp.eq.s32.totalorder %v1777, %v358
        %vm1849 = vcmp.eq.s32.totalorder %v1780, %v357
        %vm1850 = vcmp.eq.s32.totalorder %v1780, %v358
        %vm1851 = vcmp.eq.s32.totalorder %v1783, %v357
        %vm1852 = vcmp.eq.s32.totalorder %v1783, %v358
        %vm1853 = vcmp.eq.s32.totalorder %v1786, %v357
        %vm1854 = vcmp.eq.s32.totalorder %v1786, %v358
        %vm1855 = vcmp.eq.s32.totalorder %v1789, %v357
        %vm1856 = vcmp.eq.s32.totalorder %v1789, %v358
        %vm1857 = vcmp.eq.s32.totalorder %v1792, %v357
        %vm1858 = vcmp.eq.s32.totalorder %v1792, %v358
        %vm1859 = vcmp.eq.s32.totalorder %v1795, %v357
        %vm1860 = vcmp.eq.s32.totalorder %v1795, %v358
        %vm1861 = vcmp.eq.s32.totalorder %v1798, %v357
        %vm1862 = vcmp.eq.s32.totalorder %v1798, %v358
        %v1863 = vsel %vm1799, 1, 0
        %v1864 = vsel %vm1800, 1, 0
        %v1865 = vsel %vm1801, 1, 0
        %v1866 = vsel %vm1802, 1, 0
        %v1867 = vsel %vm1803, 1, 0
        %v1868 = vsel %vm1804, 1, 0
        %v1869 = vsel %vm1805, 1, 0
        %v1870 = vsel %vm1806, 1, 0
        %v1871 = vsel %vm1807, 1, 0
        %v1872 = vsel %vm1808, 1, 0
        %v1873 = vsel %vm1809, 1, 0
        %v1874 = vsel %vm1810, 1, 0
        %v1875 = vsel %vm1811, 1, 0
        %v1876 = vsel %vm1812, 1, 0
        %v1877 = vsel %vm1813, 1, 0
        %v1878 = vsel %vm1814, 1, 0
        %v1879 = vsel %vm1815, 1, 0
        %v1880 = vsel %vm1816, 1, 0
        %v1881 = vsel %vm1817, 1, 0
        %v1882 = vsel %vm1818, 1, 0
        %v1883 = vsel %vm1819, 1, 0
        %v1884 = vsel %vm1820, 1, 0
        %v1885 = vsel %vm1821, 1, 0
        %v1886 = vsel %vm1822, 1, 0
        %v1887 = vsel %vm1823, 1, 0
        %v1888 = vsel %vm1824, 1, 0
        %v1889 = vsel %vm1825, 1, 0
        %v1890 = vsel %vm1826, 1, 0
        %v1891 = vsel %vm1827, 1, 0
        %v1892 = vsel %vm1828, 1, 0
        %v1893 = vsel %vm1829, 1, 0
        %v1894 = vsel %vm1830, 1, 0
        %v1895 = vsel %vm1831, 1, 0
        %v1896 = vsel %vm1832, 1, 0
        %v1897 = vsel %vm1833, 1, 0
        %v1898 = vsel %vm1834, 1, 0
        %v1899 = vsel %vm1835, 1, 0
        %v1900 = vsel %vm1836, 1, 0
        %v1901 = vsel %vm1837, 1, 0
        %v1902 = vsel %vm1838, 1, 0
        %v1903 = vsel %vm1839, 1, 0
        %v1904 = vsel %vm1840, 1, 0
        %v1905 = vsel %vm1841, 1, 0
        %v1906 = vsel %vm1842, 1, 0
        %v1907 = vsel %vm1843, 1, 0
        %v1908 = vsel %vm1844, 1, 0
        %v1909 = vsel %vm1845, 1, 0
        %v1910 = vsel %vm1846, 1, 0
        %v1911 = vsel %vm1847, 1, 0
        %v1912 = vsel %vm1848, 1, 0
        %v1913 = vsel %vm1849, 1, 0
        %v1914 = vsel %vm1850, 1, 0
        %v1915 = vsel %vm1851, 1, 0
        %v1916 = vsel %vm1852, 1, 0
        %v1917 = vsel %vm1853, 1, 0
        %v1918 = vsel %vm1854, 1, 0
        %v1919 = vsel %vm1855, 1, 0
        %v1920 = vsel %vm1856, 1, 0
        %v1921 = vsel %vm1857, 1, 0
        %v1922 = vsel %vm1858, 1, 0
        %v1923 = vsel %vm1859, 1, 0
        %v1924 = vsel %vm1860, 1, 0
        %v1925 = vsel %vm1861, 1, 0
        %v1926 = vsel %vm1862, 1, 0
        %v1927 = vcvt.s32.f32 %v1863
        %v1928 = vcvt.s32.f32 %v1864
        %v1929 = vcvt.s32.f32 %v1865
        %v1930 = vcvt.s32.f32 %v1866
        %v1931 = vcvt.s32.f32 %v1867
        %v1932 = vcvt.s32.f32 %v1868
        %v1933 = vcvt.s32.f32 %v1869
        %v1934 = vcvt.s32.f32 %v1870
        %v1935 = vcvt.s32.f32 %v1871
        %v1936 = vcvt.s32.f32 %v1872
        %v1937 = vcvt.s32.f32 %v1873
        %v1938 = vcvt.s32.f32 %v1874
        %v1939 = vcvt.s32.f32 %v1875
        %v1940 = vcvt.s32.f32 %v1876
        %v1941 = vcvt.s32.f32 %v1877
        %v1942 = vcvt.s32.f32 %v1878
        %v1943 = vcvt.s32.f32 %v1879
        %v1944 = vcvt.s32.f32 %v1880
        %v1945 = vcvt.s32.f32 %v1881
        %v1946 = vcvt.s32.f32 %v1882
        %v1947 = vcvt.s32.f32 %v1883
        %v1948 = vcvt.s32.f32 %v1884
        %v1949 = vcvt.s32.f32 %v1885
        %v1950 = vcvt.s32.f32 %v1886
        %v1951 = vcvt.s32.f32 %v1887
        %v1952 = vcvt.s32.f32 %v1888
        %v1953 = vcvt.s32.f32 %v1889
        %v1954 = vcvt.s32.f32 %v1890
        %v1955 = vcvt.s32.f32 %v1891
        %v1956 = vcvt.s32.f32 %v1892
        %v1957 = vcvt.s32.f32 %v1893
        %v1958 = vcvt.s32.f32 %v1894
        %v1959 = vcvt.s32.f32 %v1895
        %v1960 = vcvt.s32.f32 %v1896
        %v1961 = vcvt.s32.f32 %v1897
        %v1962 = vcvt.s32.f32 %v1898
        %v1963 = vcvt.s32.f32 %v1899
        %v1964 = vcvt.s32.f32 %v1900
        %v1965 = vcvt.s32.f32 %v1901
        %v1966 = vcvt.s32.f32 %v1902
        %v1967 = vcvt.s32.f32 %v1903
        %v1968 = vcvt.s32.f32 %v1904
        %v1969 = vcvt.s32.f32 %v1905
        %v1970 = vcvt.s32.f32 %v1906
        %v1971 = vcvt.s32.f32 %v1907
        %v1972 = vcvt.s32.f32 %v1908
        %v1973 = vcvt.s32.f32 %v1909
        %v1974 = vcvt.s32.f32 %v1910
        %v1975 = vcvt.s32.f32 %v1911
        %v1976 = vcvt.s32.f32 %v1912
        %v1977 = vcvt.s32.f32 %v1913
        %v1978 = vcvt.s32.f32 %v1914
        %v1979 = vcvt.s32.f32 %v1915
        %v1980 = vcvt.s32.f32 %v1916
        %v1981 = vcvt.s32.f32 %v1917
        %v1982 = vcvt.s32.f32 %v1918
        %v1983 = vcvt.s32.f32 %v1919
        %v1984 = vcvt.s32.f32 %v1920
        %v1985 = vcvt.s32.f32 %v1921
        %v1986 = vcvt.s32.f32 %v1922
        %v1987 = vcvt.s32.f32 %v1923
        %v1988 = vcvt.s32.f32 %v1924
        %v1989 = vcvt.s32.f32 %v1925
        %v1990 = vcvt.s32.f32 %v1926
        %v1991 = vadd.f32 %v1639, %v1927
        %v1992 = vadd.f32 %v1640, %v1928
        %v1993 = vadd.f32 %v1641, %v1929
        %v1994 = vadd.f32 %v1642, %v1930
        %v1995 = vadd.f32 %v1643, %v1931
        %v1996 = vadd.f32 %v1644, %v1932
        %v1997 = vadd.f32 %v1645, %v1933
        %v1998 = vadd.f32 %v1646, %v1934
        %v1999 = vadd.f32 %v1647, %v1935
        %v2000 = vadd.f32 %v1648, %v1936
        %v2001 = vadd.f32 %v1649, %v1937
        %v2002 = vadd.f32 %v1650, %v1938
        %v2003 = vadd.f32 %v1651, %v1939
        %v2004 = vadd.f32 %v1652, %v1940
        %v2005 = vadd.f32 %v1653, %v1941
        %v2006 = vadd.f32 %v1654, %v1942
        %v2007 = vadd.f32 %v1655, %v1943
        %v2008 = vadd.f32 %v1656, %v1944
        %v2009 = vadd.f32 %v1657, %v1945
        %v2010 = vadd.f32 %v1658, %v1946
        %v2011 = vadd.f32 %v1659, %v1947
        %v2012 = vadd.f32 %v1660, %v1948
        %v2013 = vadd.f32 %v1661, %v1949
        %v2014 = vadd.f32 %v1662, %v1950
        %v2015 = vadd.f32 %v1663, %v1951
        %v2016 = vadd.f32 %v1664, %v1952
        %v2017 = vadd.f32 %v1665, %v1953
        %v2018 = vadd.f32 %v1666, %v1954
        %v2019 = vadd.f32 %v1667, %v1955
        %v2020 = vadd.f32 %v1668, %v1956
        %v2021 = vadd.f32 %v1669, %v1957
        %v2022 = vadd.f32 %v1670, %v1958
        %v2023 = vadd.f32 %v1671, %v1959
        %v2024 = vadd.f32 %v1672, %v1960
        %v2025 = vadd.f32 %v1673, %v1961
        %v2026 = vadd.f32 %v1674, %v1962
        %v2027 = vadd.f32 %v1675, %v1963
        %v2028 = vadd.f32 %v1676, %v1964
        %v2029 = vadd.f32 %v1677, %v1965
        %v2030 = vadd.f32 %v1678, %v1966
        %v2031 = vadd.f32 %v1679, %v1967
        %v2032 = vadd.f32 %v1680, %v1968
        %v2033 = vadd.f32 %v1681, %v1969
        %v2034 = vadd.f32 %v1682, %v1970
        %v2035 = vadd.f32 %v1683, %v1971
        %v2036 = vadd.f32 %v1684, %v1972
        %v2037 = vadd.f32 %v1685, %v1973
        %v2038 = vadd.f32 %v1686, %v1974
        %v2039 = vadd.f32 %v1687, %v1975
        %v2040 = vadd.f32 %v1688, %v1976
        %v2041 = vadd.f32 %v1689, %v1977
        %v2042 = vadd.f32 %v1690, %v1978
        %v2043 = vadd.f32 %v1691, %v1979
        %v2044 = vadd.f32 %v1692, %v1980
        %v2045 = vadd.f32 %v1693, %v1981
        %v2046 = vadd.f32 %v1694, %v1982
        %v2047 = vadd.f32 %v1695, %v1983
        %v2048 = vadd.f32 %v1696, %v1984
        %v2049 = vadd.f32 %v1697, %v1985
        %v2050 = vadd.f32 %v1698, %v1986
        %v2051 = vadd.f32 %v1699, %v1987
        %v2052 = vadd.f32 %v1700, %v1988
        %v2053 = vadd.f32 %v1701, %v1989
        %v2054 = vadd.f32 %v1702, %v1990
        %2055 = vset.pattern.permute.xlu0 5
        %2056 = vperm.xlu0 %2055, %v324
        %v2057 = vpop.permute.xlu0 %2056
        %2058 = vset.pattern.permute.xlu0 5
        %2059 = vperm.xlu0 %2058, %v325
        %v2060 = vpop.permute.xlu0 %2059
        %2061 = vset.pattern.permute.xlu0 5
        %2062 = vperm.xlu0 %2061, %v326
        %v2063 = vpop.permute.xlu0 %2062
        %2064 = vset.pattern.permute.xlu0 5
        %2065 = vperm.xlu0 %2064, %v327
        %v2066 = vpop.permute.xlu0 %2065
        %2067 = vset.pattern.permute.xlu0 5
        %2068 = vperm.xlu0 %2067, %v328
        %v2069 = vpop.permute.xlu0 %2068
        %2070 = vset.pattern.permute.xlu0 5
        %2071 = vperm.xlu0 %2070, %v329
        %v2072 = vpop.permute.xlu0 %2071
        %2073 = vset.pattern.permute.xlu0 5
        %2074 = vperm.xlu0 %2073, %v330
        %v2075 = vpop.permute.xlu0 %2074
        %2076 = vset.pattern.permute.xlu0 5
        %2077 = vperm.xlu0 %2076, %v331
        %v2078 = vpop.permute.xlu0 %2077
        %2079 = vset.pattern.permute.xlu0 5
        %2080 = vperm.xlu0 %2079, %v332
        %v2081 = vpop.permute.xlu0 %2080
        %2082 = vset.pattern.permute.xlu0 5
        %2083 = vperm.xlu0 %2082, %v333
        %v2084 = vpop.permute.xlu0 %2083
        %2085 = vset.pattern.permute.xlu0 5
        %2086 = vperm.xlu0 %2085, %v334
        %v2087 = vpop.permute.xlu0 %2086
        %2088 = vset.pattern.permute.xlu0 5
        %2089 = vperm.xlu0 %2088, %v335
        %v2090 = vpop.permute.xlu0 %2089
        %2091 = vset.pattern.permute.xlu0 5
        %2092 = vperm.xlu0 %2091, %v336
        %v2093 = vpop.permute.xlu0 %2092
        %2094 = vset.pattern.permute.xlu0 5
        %2095 = vperm.xlu0 %2094, %v337
        %v2096 = vpop.permute.xlu0 %2095
        %2097 = vset.pattern.permute.xlu0 5
        %2098 = vperm.xlu0 %2097, %v338
        %v2099 = vpop.permute.xlu0 %2098
        %2100 = vset.pattern.permute.xlu0 5
        %2101 = vperm.xlu0 %2100, %v339
        %v2102 = vpop.permute.xlu0 %2101
        %2103 = vset.pattern.permute.xlu0 5
        %2104 = vperm.xlu0 %2103, %v340
        %v2105 = vpop.permute.xlu0 %2104
        %2106 = vset.pattern.permute.xlu0 5
        %2107 = vperm.xlu0 %2106, %v341
        %v2108 = vpop.permute.xlu0 %2107
        %2109 = vset.pattern.permute.xlu0 5
        %2110 = vperm.xlu0 %2109, %v342
        %v2111 = vpop.permute.xlu0 %2110
        %2112 = vset.pattern.permute.xlu0 5
        %2113 = vperm.xlu0 %2112, %v343
        %v2114 = vpop.permute.xlu0 %2113
        %2115 = vset.pattern.permute.xlu0 5
        %2116 = vperm.xlu0 %2115, %v344
        %v2117 = vpop.permute.xlu0 %2116
        %2118 = vset.pattern.permute.xlu0 5
        %2119 = vperm.xlu0 %2118, %v345
        %v2120 = vpop.permute.xlu0 %2119
        %2121 = vset.pattern.permute.xlu0 5
        %2122 = vperm.xlu0 %2121, %v346
        %v2123 = vpop.permute.xlu0 %2122
        %2124 = vset.pattern.permute.xlu0 5
        %2125 = vperm.xlu0 %2124, %v347
        %v2126 = vpop.permute.xlu0 %2125
        %2127 = vset.pattern.permute.xlu0 5
        %2128 = vperm.xlu0 %2127, %v348
        %v2129 = vpop.permute.xlu0 %2128
        %2130 = vset.pattern.permute.xlu0 5
        %2131 = vperm.xlu0 %2130, %v349
        %v2132 = vpop.permute.xlu0 %2131
        %2133 = vset.pattern.permute.xlu0 5
        %2134 = vperm.xlu0 %2133, %v350
        %v2135 = vpop.permute.xlu0 %2134
        %2136 = vset.pattern.permute.xlu0 5
        %2137 = vperm.xlu0 %2136, %v351
        %v2138 = vpop.permute.xlu0 %2137
        %2139 = vset.pattern.permute.xlu0 5
        %2140 = vperm.xlu0 %2139, %v352
        %v2141 = vpop.permute.xlu0 %2140
        %2142 = vset.pattern.permute.xlu0 5
        %2143 = vperm.xlu0 %2142, %v353
        %v2144 = vpop.permute.xlu0 %2143
        %2145 = vset.pattern.permute.xlu0 5
        %2146 = vperm.xlu0 %2145, %v354
        %v2147 = vpop.permute.xlu0 %2146
        %2148 = vset.pattern.permute.xlu0 5
        %2149 = vperm.xlu0 %2148, %v355
        %v2150 = vpop.permute.xlu0 %2149
        %vm2151 = vcmp.eq.s32.totalorder %v2057, %v357
        %vm2152 = vcmp.eq.s32.totalorder %v2057, %v358
        %vm2153 = vcmp.eq.s32.totalorder %v2060, %v357
        %vm2154 = vcmp.eq.s32.totalorder %v2060, %v358
        %vm2155 = vcmp.eq.s32.totalorder %v2063, %v357
        %vm2156 = vcmp.eq.s32.totalorder %v2063, %v358
        %vm2157 = vcmp.eq.s32.totalorder %v2066, %v357
        %vm2158 = vcmp.eq.s32.totalorder %v2066, %v358
        %vm2159 = vcmp.eq.s32.totalorder %v2069, %v357
        %vm2160 = vcmp.eq.s32.totalorder %v2069, %v358
        %vm2161 = vcmp.eq.s32.totalorder %v2072, %v357
        %vm2162 = vcmp.eq.s32.totalorder %v2072, %v358
        %vm2163 = vcmp.eq.s32.totalorder %v2075, %v357
        %vm2164 = vcmp.eq.s32.totalorder %v2075, %v358
        %vm2165 = vcmp.eq.s32.totalorder %v2078, %v357
        %vm2166 = vcmp.eq.s32.totalorder %v2078, %v358
        %vm2167 = vcmp.eq.s32.totalorder %v2081, %v357
        %vm2168 = vcmp.eq.s32.totalorder %v2081, %v358
        %vm2169 = vcmp.eq.s32.totalorder %v2084, %v357
        %vm2170 = vcmp.eq.s32.totalorder %v2084, %v358
        %vm2171 = vcmp.eq.s32.totalorder %v2087, %v357
        %vm2172 = vcmp.eq.s32.totalorder %v2087, %v358
        %vm2173 = vcmp.eq.s32.totalorder %v2090, %v357
        %vm2174 = vcmp.eq.s32.totalorder %v2090, %v358
        %vm2175 = vcmp.eq.s32.totalorder %v2093, %v357
        %vm2176 = vcmp.eq.s32.totalorder %v2093, %v358
        %vm2177 = vcmp.eq.s32.totalorder %v2096, %v357
        %vm2178 = vcmp.eq.s32.totalorder %v2096, %v358
        %vm2179 = vcmp.eq.s32.totalorder %v2099, %v357
        %vm2180 = vcmp.eq.s32.totalorder %v2099, %v358
        %vm2181 = vcmp.eq.s32.totalorder %v2102, %v357
        %vm2182 = vcmp.eq.s32.totalorder %v2102, %v358
        %vm2183 = vcmp.eq.s32.totalorder %v2105, %v357
        %vm2184 = vcmp.eq.s32.totalorder %v2105, %v358
        %vm2185 = vcmp.eq.s32.totalorder %v2108, %v357
        %vm2186 = vcmp.eq.s32.totalorder %v2108, %v358
        %vm2187 = vcmp.eq.s32.totalorder %v2111, %v357
        %vm2188 = vcmp.eq.s32.totalorder %v2111, %v358
        %vm2189 = vcmp.eq.s32.totalorder %v2114, %v357
        %vm2190 = vcmp.eq.s32.totalorder %v2114, %v358
        %vm2191 = vcmp.eq.s32.totalorder %v2117, %v357
        %vm2192 = vcmp.eq.s32.totalorder %v2117, %v358
        %vm2193 = vcmp.eq.s32.totalorder %v2120, %v357
        %vm2194 = vcmp.eq.s32.totalorder %v2120, %v358
        %vm2195 = vcmp.eq.s32.totalorder %v2123, %v357
        %vm2196 = vcmp.eq.s32.totalorder %v2123, %v358
        %vm2197 = vcmp.eq.s32.totalorder %v2126, %v357
        %vm2198 = vcmp.eq.s32.totalorder %v2126, %v358
        %vm2199 = vcmp.eq.s32.totalorder %v2129, %v357
        %vm2200 = vcmp.eq.s32.totalorder %v2129, %v358
        %vm2201 = vcmp.eq.s32.totalorder %v2132, %v357
        %vm2202 = vcmp.eq.s32.totalorder %v2132, %v358
        %vm2203 = vcmp.eq.s32.totalorder %v2135, %v357
        %vm2204 = vcmp.eq.s32.totalorder %v2135, %v358
        %vm2205 = vcmp.eq.s32.totalorder %v2138, %v357
        %vm2206 = vcmp.eq.s32.totalorder %v2138, %v358
        %vm2207 = vcmp.eq.s32.totalorder %v2141, %v357
        %vm2208 = vcmp.eq.s32.totalorder %v2141, %v358
        %vm2209 = vcmp.eq.s32.totalorder %v2144, %v357
        %vm2210 = vcmp.eq.s32.totalorder %v2144, %v358
        %vm2211 = vcmp.eq.s32.totalorder %v2147, %v357
        %vm2212 = vcmp.eq.s32.totalorder %v2147, %v358
        %vm2213 = vcmp.eq.s32.totalorder %v2150, %v357
        %vm2214 = vcmp.eq.s32.totalorder %v2150, %v358
        %v2215 = vsel %vm2151, 1, 0
        %v2216 = vsel %vm2152, 1, 0
        %v2217 = vsel %vm2153, 1, 0
        %v2218 = vsel %vm2154, 1, 0
        %v2219 = vsel %vm2155, 1, 0
        %v2220 = vsel %vm2156, 1, 0
        %v2221 = vsel %vm2157, 1, 0
        %v2222 = vsel %vm2158, 1, 0
        %v2223 = vsel %vm2159, 1, 0
        %v2224 = vsel %vm2160, 1, 0
        %v2225 = vsel %vm2161, 1, 0
        %v2226 = vsel %vm2162, 1, 0
        %v2227 = vsel %vm2163, 1, 0
        %v2228 = vsel %vm2164, 1, 0
        %v2229 = vsel %vm2165, 1, 0
        %v2230 = vsel %vm2166, 1, 0
        %v2231 = vsel %vm2167, 1, 0
        %v2232 = vsel %vm2168, 1, 0
        %v2233 = vsel %vm2169, 1, 0
        %v2234 = vsel %vm2170, 1, 0
        %v2235 = vsel %vm2171, 1, 0
        %v2236 = vsel %vm2172, 1, 0
        %v2237 = vsel %vm2173, 1, 0
        %v2238 = vsel %vm2174, 1, 0
        %v2239 = vsel %vm2175, 1, 0
        %v2240 = vsel %vm2176, 1, 0
        %v2241 = vsel %vm2177, 1, 0
        %v2242 = vsel %vm2178, 1, 0
        %v2243 = vsel %vm2179, 1, 0
        %v2244 = vsel %vm2180, 1, 0
        %v2245 = vsel %vm2181, 1, 0
        %v2246 = vsel %vm2182, 1, 0
        %v2247 = vsel %vm2183, 1, 0
        %v2248 = vsel %vm2184, 1, 0
        %v2249 = vsel %vm2185, 1, 0
        %v2250 = vsel %vm2186, 1, 0
        %v2251 = vsel %vm2187, 1, 0
        %v2252 = vsel %vm2188, 1, 0
        %v2253 = vsel %vm2189, 1, 0
        %v2254 = vsel %vm2190, 1, 0
        %v2255 = vsel %vm2191, 1, 0
        %v2256 = vsel %vm2192, 1, 0
        %v2257 = vsel %vm2193, 1, 0
        %v2258 = vsel %vm2194, 1, 0
        %v2259 = vsel %vm2195, 1, 0
        %v2260 = vsel %vm2196, 1, 0
        %v2261 = vsel %vm2197, 1, 0
        %v2262 = vsel %vm2198, 1, 0
        %v2263 = vsel %vm2199, 1, 0
        %v2264 = vsel %vm2200, 1, 0
        %v2265 = vsel %vm2201, 1, 0
        %v2266 = vsel %vm2202, 1, 0
        %v2267 = vsel %vm2203, 1, 0
        %v2268 = vsel %vm2204, 1, 0
        %v2269 = vsel %vm2205, 1, 0
        %v2270 = vsel %vm2206, 1, 0
        %v2271 = vsel %vm2207, 1, 0
        %v2272 = vsel %vm2208, 1, 0
        %v2273 = vsel %vm2209, 1, 0
        %v2274 = vsel %vm2210, 1, 0
        %v2275 = vsel %vm2211, 1, 0
        %v2276 = vsel %vm2212, 1, 0
        %v2277 = vsel %vm2213, 1, 0
        %v2278 = vsel %vm2214, 1, 0
        %v2279 = vcvt.s32.f32 %v2215
        %v2280 = vcvt.s32.f32 %v2216
        %v2281 = vcvt.s32.f32 %v2217
        %v2282 = vcvt.s32.f32 %v2218
        %v2283 = vcvt.s32.f32 %v2219
        %v2284 = vcvt.s32.f32 %v2220
        %v2285 = vcvt.s32.f32 %v2221
        %v2286 = vcvt.s32.f32 %v2222
        %v2287 = vcvt.s32.f32 %v2223
        %v2288 = vcvt.s32.f32 %v2224
        %v2289 = vcvt.s32.f32 %v2225
        %v2290 = vcvt.s32.f32 %v2226
        %v2291 = vcvt.s32.f32 %v2227
        %v2292 = vcvt.s32.f32 %v2228
        %v2293 = vcvt.s32.f32 %v2229
        %v2294 = vcvt.s32.f32 %v2230
        %v2295 = vcvt.s32.f32 %v2231
        %v2296 = vcvt.s32.f32 %v2232
        %v2297 = vcvt.s32.f32 %v2233
        %v2298 = vcvt.s32.f32 %v2234
        %v2299 = vcvt.s32.f32 %v2235
        %v2300 = vcvt.s32.f32 %v2236
        %v2301 = vcvt.s32.f32 %v2237
        %v2302 = vcvt.s32.f32 %v2238
        %v2303 = vcvt.s32.f32 %v2239
        %v2304 = vcvt.s32.f32 %v2240
        %v2305 = vcvt.s32.f32 %v2241
        %v2306 = vcvt.s32.f32 %v2242
        %v2307 = vcvt.s32.f32 %v2243
        %v2308 = vcvt.s32.f32 %v2244
        %v2309 = vcvt.s32.f32 %v2245
        %v2310 = vcvt.s32.f32 %v2246
        %v2311 = vcvt.s32.f32 %v2247
        %v2312 = vcvt.s32.f32 %v2248
        %v2313 = vcvt.s32.f32 %v2249
        %v2314 = vcvt.s32.f32 %v2250
        %v2315 = vcvt.s32.f32 %v2251
        %v2316 = vcvt.s32.f32 %v2252
        %v2317 = vcvt.s32.f32 %v2253
        %v2318 = vcvt.s32.f32 %v2254
        %v2319 = vcvt.s32.f32 %v2255
        %v2320 = vcvt.s32.f32 %v2256
        %v2321 = vcvt.s32.f32 %v2257
        %v2322 = vcvt.s32.f32 %v2258
        %v2323 = vcvt.s32.f32 %v2259
        %v2324 = vcvt.s32.f32 %v2260
        %v2325 = vcvt.s32.f32 %v2261
        %v2326 = vcvt.s32.f32 %v2262
        %v2327 = vcvt.s32.f32 %v2263
        %v2328 = vcvt.s32.f32 %v2264
        %v2329 = vcvt.s32.f32 %v2265
        %v2330 = vcvt.s32.f32 %v2266
        %v2331 = vcvt.s32.f32 %v2267
        %v2332 = vcvt.s32.f32 %v2268
        %v2333 = vcvt.s32.f32 %v2269
        %v2334 = vcvt.s32.f32 %v2270
        %v2335 = vcvt.s32.f32 %v2271
        %v2336 = vcvt.s32.f32 %v2272
        %v2337 = vcvt.s32.f32 %v2273
        %v2338 = vcvt.s32.f32 %v2274
        %v2339 = vcvt.s32.f32 %v2275
        %v2340 = vcvt.s32.f32 %v2276
        %v2341 = vcvt.s32.f32 %v2277
        %v2342 = vcvt.s32.f32 %v2278
        %v2343 = vadd.f32 %v1991, %v2279
        %v2344 = vadd.f32 %v1992, %v2280
        %v2345 = vadd.f32 %v1993, %v2281
        %v2346 = vadd.f32 %v1994, %v2282
        %v2347 = vadd.f32 %v1995, %v2283
        %v2348 = vadd.f32 %v1996, %v2284
        %v2349 = vadd.f32 %v1997, %v2285
        %v2350 = vadd.f32 %v1998, %v2286
        %v2351 = vadd.f32 %v1999, %v2287
        %v2352 = vadd.f32 %v2000, %v2288
        %v2353 = vadd.f32 %v2001, %v2289
        %v2354 = vadd.f32 %v2002, %v2290
        %v2355 = vadd.f32 %v2003, %v2291
        %v2356 = vadd.f32 %v2004, %v2292
        %v2357 = vadd.f32 %v2005, %v2293
        %v2358 = vadd.f32 %v2006, %v2294
        %v2359 = vadd.f32 %v2007, %v2295
        %v2360 = vadd.f32 %v2008, %v2296
        %v2361 = vadd.f32 %v2009, %v2297
        %v2362 = vadd.f32 %v2010, %v2298
        %v2363 = vadd.f32 %v2011, %v2299
        %v2364 = vadd.f32 %v2012, %v2300
        %v2365 = vadd.f32 %v2013, %v2301
        %v2366 = vadd.f32 %v2014, %v2302
        %v2367 = vadd.f32 %v2015, %v2303
        %v2368 = vadd.f32 %v2016, %v2304
        %v2369 = vadd.f32 %v2017, %v2305
        %v2370 = vadd.f32 %v2018, %v2306
        %v2371 = vadd.f32 %v2019, %v2307
        %v2372 = vadd.f32 %v2020, %v2308
        %v2373 = vadd.f32 %v2021, %v2309
        %v2374 = vadd.f32 %v2022, %v2310
        %v2375 = vadd.f32 %v2023, %v2311
        %v2376 = vadd.f32 %v2024, %v2312
        %v2377 = vadd.f32 %v2025, %v2313
        %v2378 = vadd.f32 %v2026, %v2314
        %v2379 = vadd.f32 %v2027, %v2315
        %v2380 = vadd.f32 %v2028, %v2316
        %v2381 = vadd.f32 %v2029, %v2317
        %v2382 = vadd.f32 %v2030, %v2318
        %v2383 = vadd.f32 %v2031, %v2319
        %v2384 = vadd.f32 %v2032, %v2320
        %v2385 = vadd.f32 %v2033, %v2321
        %v2386 = vadd.f32 %v2034, %v2322
        %v2387 = vadd.f32 %v2035, %v2323
        %v2388 = vadd.f32 %v2036, %v2324
        %v2389 = vadd.f32 %v2037, %v2325
        %v2390 = vadd.f32 %v2038, %v2326
        %v2391 = vadd.f32 %v2039, %v2327
        %v2392 = vadd.f32 %v2040, %v2328
        %v2393 = vadd.f32 %v2041, %v2329
        %v2394 = vadd.f32 %v2042, %v2330
        %v2395 = vadd.f32 %v2043, %v2331
        %v2396 = vadd.f32 %v2044, %v2332
        %v2397 = vadd.f32 %v2045, %v2333
        %v2398 = vadd.f32 %v2046, %v2334
        %v2399 = vadd.f32 %v2047, %v2335
        %v2400 = vadd.f32 %v2048, %v2336
        %v2401 = vadd.f32 %v2049, %v2337
        %v2402 = vadd.f32 %v2050, %v2338
        %v2403 = vadd.f32 %v2051, %v2339
        %v2404 = vadd.f32 %v2052, %v2340
        %v2405 = vadd.f32 %v2053, %v2341
        %v2406 = vadd.f32 %v2054, %v2342
        %2407 = vset.pattern.permute.xlu0 6
        %2408 = vperm.xlu0 %2407, %v324
        %v2409 = vpop.permute.xlu0 %2408
        %2410 = vset.pattern.permute.xlu0 6
        %2411 = vperm.xlu0 %2410, %v325
        %v2412 = vpop.permute.xlu0 %2411
        %2413 = vset.pattern.permute.xlu0 6
        %2414 = vperm.xlu0 %2413, %v326
        %v2415 = vpop.permute.xlu0 %2414
        %2416 = vset.pattern.permute.xlu0 6
        %2417 = vperm.xlu0 %2416, %v327
        %v2418 = vpop.permute.xlu0 %2417
        %2419 = vset.pattern.permute.xlu0 6
        %2420 = vperm.xlu0 %2419, %v328
        %v2421 = vpop.permute.xlu0 %2420
        %2422 = vset.pattern.permute.xlu0 6
        %2423 = vperm.xlu0 %2422, %v329
        %v2424 = vpop.permute.xlu0 %2423
        %2425 = vset.pattern.permute.xlu0 6
        %2426 = vperm.xlu0 %2425, %v330
        %v2427 = vpop.permute.xlu0 %2426
        %2428 = vset.pattern.permute.xlu0 6
        %2429 = vperm.xlu0 %2428, %v331
        %v2430 = vpop.permute.xlu0 %2429
        %2431 = vset.pattern.permute.xlu0 6
        %2432 = vperm.xlu0 %2431, %v332
        %v2433 = vpop.permute.xlu0 %2432
        %2434 = vset.pattern.permute.xlu0 6
        %2435 = vperm.xlu0 %2434, %v333
        %v2436 = vpop.permute.xlu0 %2435
        %2437 = vset.pattern.permute.xlu0 6
        %2438 = vperm.xlu0 %2437, %v334
        %v2439 = vpop.permute.xlu0 %2438
        %2440 = vset.pattern.permute.xlu0 6
        %2441 = vperm.xlu0 %2440, %v335
        %v2442 = vpop.permute.xlu0 %2441
        %2443 = vset.pattern.permute.xlu0 6
        %2444 = vperm.xlu0 %2443, %v336
        %v2445 = vpop.permute.xlu0 %2444
        %2446 = vset.pattern.permute.xlu0 6
        %2447 = vperm.xlu0 %2446, %v337
        %v2448 = vpop.permute.xlu0 %2447
        %2449 = vset.pattern.permute.xlu0 6
        %2450 = vperm.xlu0 %2449, %v338
        %v2451 = vpop.permute.xlu0 %2450
        %2452 = vset.pattern.permute.xlu0 6
        %2453 = vperm.xlu0 %2452, %v339
        %v2454 = vpop.permute.xlu0 %2453
        %2455 = vset.pattern.permute.xlu0 6
        %2456 = vperm.xlu0 %2455, %v340
        %v2457 = vpop.permute.xlu0 %2456
        %2458 = vset.pattern.permute.xlu0 6
        %2459 = vperm.xlu0 %2458, %v341
        %v2460 = vpop.permute.xlu0 %2459
        %2461 = vset.pattern.permute.xlu0 6
        %2462 = vperm.xlu0 %2461, %v342
        %v2463 = vpop.permute.xlu0 %2462
        %2464 = vset.pattern.permute.xlu0 6
        %2465 = vperm.xlu0 %2464, %v343
        %v2466 = vpop.permute.xlu0 %2465
        %2467 = vset.pattern.permute.xlu0 6
        %2468 = vperm.xlu0 %2467, %v344
        %v2469 = vpop.permute.xlu0 %2468
        %2470 = vset.pattern.permute.xlu0 6
        %2471 = vperm.xlu0 %2470, %v345
        %v2472 = vpop.permute.xlu0 %2471
        %2473 = vset.pattern.permute.xlu0 6
        %2474 = vperm.xlu0 %2473, %v346
        %v2475 = vpop.permute.xlu0 %2474
        %2476 = vset.pattern.permute.xlu0 6
        %2477 = vperm.xlu0 %2476, %v347
        %v2478 = vpop.permute.xlu0 %2477
        %2479 = vset.pattern.permute.xlu0 6
        %2480 = vperm.xlu0 %2479, %v348
        %v2481 = vpop.permute.xlu0 %2480
        %2482 = vset.pattern.permute.xlu0 6
        %2483 = vperm.xlu0 %2482, %v349
        %v2484 = vpop.permute.xlu0 %2483
        %2485 = vset.pattern.permute.xlu0 6
        %2486 = vperm.xlu0 %2485, %v350
        %v2487 = vpop.permute.xlu0 %2486
        %2488 = vset.pattern.permute.xlu0 6
        %2489 = vperm.xlu0 %2488, %v351
        %v2490 = vpop.permute.xlu0 %2489
        %2491 = vset.pattern.permute.xlu0 6
        %2492 = vperm.xlu0 %2491, %v352
        %v2493 = vpop.permute.xlu0 %2492
        %2494 = vset.pattern.permute.xlu0 6
        %2495 = vperm.xlu0 %2494, %v353
        %v2496 = vpop.permute.xlu0 %2495
        %2497 = vset.pattern.permute.xlu0 6
        %2498 = vperm.xlu0 %2497, %v354
        %v2499 = vpop.permute.xlu0 %2498
        %2500 = vset.pattern.permute.xlu0 6
        %2501 = vperm.xlu0 %2500, %v355
        %v2502 = vpop.permute.xlu0 %2501
        %vm2503 = vcmp.eq.s32.totalorder %v2409, %v357
        %vm2504 = vcmp.eq.s32.totalorder %v2409, %v358
        %vm2505 = vcmp.eq.s32.totalorder %v2412, %v357
        %vm2506 = vcmp.eq.s32.totalorder %v2412, %v358
        %vm2507 = vcmp.eq.s32.totalorder %v2415, %v357
        %vm2508 = vcmp.eq.s32.totalorder %v2415, %v358
        %vm2509 = vcmp.eq.s32.totalorder %v2418, %v357
        %vm2510 = vcmp.eq.s32.totalorder %v2418, %v358
        %vm2511 = vcmp.eq.s32.totalorder %v2421, %v357
        %vm2512 = vcmp.eq.s32.totalorder %v2421, %v358
        %vm2513 = vcmp.eq.s32.totalorder %v2424, %v357
        %vm2514 = vcmp.eq.s32.totalorder %v2424, %v358
        %vm2515 = vcmp.eq.s32.totalorder %v2427, %v357
        %vm2516 = vcmp.eq.s32.totalorder %v2427, %v358
        %vm2517 = vcmp.eq.s32.totalorder %v2430, %v357
        %vm2518 = vcmp.eq.s32.totalorder %v2430, %v358
        %vm2519 = vcmp.eq.s32.totalorder %v2433, %v357
        %vm2520 = vcmp.eq.s32.totalorder %v2433, %v358
        %vm2521 = vcmp.eq.s32.totalorder %v2436, %v357
        %vm2522 = vcmp.eq.s32.totalorder %v2436, %v358
        %vm2523 = vcmp.eq.s32.totalorder %v2439, %v357
        %vm2524 = vcmp.eq.s32.totalorder %v2439, %v358
        %vm2525 = vcmp.eq.s32.totalorder %v2442, %v357
        %vm2526 = vcmp.eq.s32.totalorder %v2442, %v358
        %vm2527 = vcmp.eq.s32.totalorder %v2445, %v357
        %vm2528 = vcmp.eq.s32.totalorder %v2445, %v358
        %vm2529 = vcmp.eq.s32.totalorder %v2448, %v357
        %vm2530 = vcmp.eq.s32.totalorder %v2448, %v358
        %vm2531 = vcmp.eq.s32.totalorder %v2451, %v357
        %vm2532 = vcmp.eq.s32.totalorder %v2451, %v358
        %vm2533 = vcmp.eq.s32.totalorder %v2454, %v357
        %vm2534 = vcmp.eq.s32.totalorder %v2454, %v358
        %vm2535 = vcmp.eq.s32.totalorder %v2457, %v357
        %vm2536 = vcmp.eq.s32.totalorder %v2457, %v358
        %vm2537 = vcmp.eq.s32.totalorder %v2460, %v357
        %vm2538 = vcmp.eq.s32.totalorder %v2460, %v358
        %vm2539 = vcmp.eq.s32.totalorder %v2463, %v357
        %vm2540 = vcmp.eq.s32.totalorder %v2463, %v358
        %vm2541 = vcmp.eq.s32.totalorder %v2466, %v357
        %vm2542 = vcmp.eq.s32.totalorder %v2466, %v358
        %vm2543 = vcmp.eq.s32.totalorder %v2469, %v357
        %vm2544 = vcmp.eq.s32.totalorder %v2469, %v358
        %vm2545 = vcmp.eq.s32.totalorder %v2472, %v357
        %vm2546 = vcmp.eq.s32.totalorder %v2472, %v358
        %vm2547 = vcmp.eq.s32.totalorder %v2475, %v357
        %vm2548 = vcmp.eq.s32.totalorder %v2475, %v358
        %vm2549 = vcmp.eq.s32.totalorder %v2478, %v357
        %vm2550 = vcmp.eq.s32.totalorder %v2478, %v358
        %vm2551 = vcmp.eq.s32.totalorder %v2481, %v357
        %vm2552 = vcmp.eq.s32.totalorder %v2481, %v358
        %vm2553 = vcmp.eq.s32.totalorder %v2484, %v357
        %vm2554 = vcmp.eq.s32.totalorder %v2484, %v358
        %vm2555 = vcmp.eq.s32.totalorder %v2487, %v357
        %vm2556 = vcmp.eq.s32.totalorder %v2487, %v358
        %vm2557 = vcmp.eq.s32.totalorder %v2490, %v357
        %vm2558 = vcmp.eq.s32.totalorder %v2490, %v358
        %vm2559 = vcmp.eq.s32.totalorder %v2493, %v357
        %vm2560 = vcmp.eq.s32.totalorder %v2493, %v358
        %vm2561 = vcmp.eq.s32.totalorder %v2496, %v357
        %vm2562 = vcmp.eq.s32.totalorder %v2496, %v358
        %vm2563 = vcmp.eq.s32.totalorder %v2499, %v357
        %vm2564 = vcmp.eq.s32.totalorder %v2499, %v358
        %vm2565 = vcmp.eq.s32.totalorder %v2502, %v357
        %vm2566 = vcmp.eq.s32.totalorder %v2502, %v358
        %v2567 = vsel %vm2503, 1, 0
        %v2568 = vsel %vm2504, 1, 0
        %v2569 = vsel %vm2505, 1, 0
        %v2570 = vsel %vm2506, 1, 0
        %v2571 = vsel %vm2507, 1, 0
        %v2572 = vsel %vm2508, 1, 0
        %v2573 = vsel %vm2509, 1, 0
        %v2574 = vsel %vm2510, 1, 0
        %v2575 = vsel %vm2511, 1, 0
        %v2576 = vsel %vm2512, 1, 0
        %v2577 = vsel %vm2513, 1, 0
        %v2578 = vsel %vm2514, 1, 0
        %v2579 = vsel %vm2515, 1, 0
        %v2580 = vsel %vm2516, 1, 0
        %v2581 = vsel %vm2517, 1, 0
        %v2582 = vsel %vm2518, 1, 0
        %v2583 = vsel %vm2519, 1, 0
        %v2584 = vsel %vm2520, 1, 0
        %v2585 = vsel %vm2521, 1, 0
        %v2586 = vsel %vm2522, 1, 0
        %v2587 = vsel %vm2523, 1, 0
        %v2588 = vsel %vm2524, 1, 0
        %v2589 = vsel %vm2525, 1, 0
        %v2590 = vsel %vm2526, 1, 0
        %v2591 = vsel %vm2527, 1, 0
        %v2592 = vsel %vm2528, 1, 0
        %v2593 = vsel %vm2529, 1, 0
        %v2594 = vsel %vm2530, 1, 0
        %v2595 = vsel %vm2531, 1, 0
        %v2596 = vsel %vm2532, 1, 0
        %v2597 = vsel %vm2533, 1, 0
        %v2598 = vsel %vm2534, 1, 0
        %v2599 = vsel %vm2535, 1, 0
        %v2600 = vsel %vm2536, 1, 0
        %v2601 = vsel %vm2537, 1, 0
        %v2602 = vsel %vm2538, 1, 0
        %v2603 = vsel %vm2539, 1, 0
        %v2604 = vsel %vm2540, 1, 0
        %v2605 = vsel %vm2541, 1, 0
        %v2606 = vsel %vm2542, 1, 0
        %v2607 = vsel %vm2543, 1, 0
        %v2608 = vsel %vm2544, 1, 0
        %v2609 = vsel %vm2545, 1, 0
        %v2610 = vsel %vm2546, 1, 0
        %v2611 = vsel %vm2547, 1, 0
        %v2612 = vsel %vm2548, 1, 0
        %v2613 = vsel %vm2549, 1, 0
        %v2614 = vsel %vm2550, 1, 0
        %v2615 = vsel %vm2551, 1, 0
        %v2616 = vsel %vm2552, 1, 0
        %v2617 = vsel %vm2553, 1, 0
        %v2618 = vsel %vm2554, 1, 0
        %v2619 = vsel %vm2555, 1, 0
        %v2620 = vsel %vm2556, 1, 0
        %v2621 = vsel %vm2557, 1, 0
        %v2622 = vsel %vm2558, 1, 0
        %v2623 = vsel %vm2559, 1, 0
        %v2624 = vsel %vm2560, 1, 0
        %v2625 = vsel %vm2561, 1, 0
        %v2626 = vsel %vm2562, 1, 0
        %v2627 = vsel %vm2563, 1, 0
        %v2628 = vsel %vm2564, 1, 0
        %v2629 = vsel %vm2565, 1, 0
        %v2630 = vsel %vm2566, 1, 0
        %v2631 = vcvt.s32.f32 %v2567
        %v2632 = vcvt.s32.f32 %v2568
        %v2633 = vcvt.s32.f32 %v2569
        %v2634 = vcvt.s32.f32 %v2570
        %v2635 = vcvt.s32.f32 %v2571
        %v2636 = vcvt.s32.f32 %v2572
        %v2637 = vcvt.s32.f32 %v2573
        %v2638 = vcvt.s32.f32 %v2574
        %v2639 = vcvt.s32.f32 %v2575
        %v2640 = vcvt.s32.f32 %v2576
        %v2641 = vcvt.s32.f32 %v2577
        %v2642 = vcvt.s32.f32 %v2578
        %v2643 = vcvt.s32.f32 %v2579
        %v2644 = vcvt.s32.f32 %v2580
        %v2645 = vcvt.s32.f32 %v2581
        %v2646 = vcvt.s32.f32 %v2582
        %v2647 = vcvt.s32.f32 %v2583
        %v2648 = vcvt.s32.f32 %v2584
        %v2649 = vcvt.s32.f32 %v2585
        %v2650 = vcvt.s32.f32 %v2586
        %v2651 = vcvt.s32.f32 %v2587
        %v2652 = vcvt.s32.f32 %v2588
        %v2653 = vcvt.s32.f32 %v2589
        %v2654 = vcvt.s32.f32 %v2590
        %v2655 = vcvt.s32.f32 %v2591
        %v2656 = vcvt.s32.f32 %v2592
        %v2657 = vcvt.s32.f32 %v2593
        %v2658 = vcvt.s32.f32 %v2594
        %v2659 = vcvt.s32.f32 %v2595
        %v2660 = vcvt.s32.f32 %v2596
        %v2661 = vcvt.s32.f32 %v2597
        %v2662 = vcvt.s32.f32 %v2598
        %v2663 = vcvt.s32.f32 %v2599
        %v2664 = vcvt.s32.f32 %v2600
        %v2665 = vcvt.s32.f32 %v2601
        %v2666 = vcvt.s32.f32 %v2602
        %v2667 = vcvt.s32.f32 %v2603
        %v2668 = vcvt.s32.f32 %v2604
        %v2669 = vcvt.s32.f32 %v2605
        %v2670 = vcvt.s32.f32 %v2606
        %v2671 = vcvt.s32.f32 %v2607
        %v2672 = vcvt.s32.f32 %v2608
        %v2673 = vcvt.s32.f32 %v2609
        %v2674 = vcvt.s32.f32 %v2610
        %v2675 = vcvt.s32.f32 %v2611
        %v2676 = vcvt.s32.f32 %v2612
        %v2677 = vcvt.s32.f32 %v2613
        %v2678 = vcvt.s32.f32 %v2614
        %v2679 = vcvt.s32.f32 %v2615
        %v2680 = vcvt.s32.f32 %v2616
        %v2681 = vcvt.s32.f32 %v2617
        %v2682 = vcvt.s32.f32 %v2618
        %v2683 = vcvt.s32.f32 %v2619
        %v2684 = vcvt.s32.f32 %v2620
        %v2685 = vcvt.s32.f32 %v2621
        %v2686 = vcvt.s32.f32 %v2622
        %v2687 = vcvt.s32.f32 %v2623
        %v2688 = vcvt.s32.f32 %v2624
        %v2689 = vcvt.s32.f32 %v2625
        %v2690 = vcvt.s32.f32 %v2626
        %v2691 = vcvt.s32.f32 %v2627
        %v2692 = vcvt.s32.f32 %v2628
        %v2693 = vcvt.s32.f32 %v2629
        %v2694 = vcvt.s32.f32 %v2630
        %v2695 = vadd.f32 %v2343, %v2631
        %v2696 = vadd.f32 %v2344, %v2632
        %v2697 = vadd.f32 %v2345, %v2633
        %v2698 = vadd.f32 %v2346, %v2634
        %v2699 = vadd.f32 %v2347, %v2635
        %v2700 = vadd.f32 %v2348, %v2636
        %v2701 = vadd.f32 %v2349, %v2637
        %v2702 = vadd.f32 %v2350, %v2638
        %v2703 = vadd.f32 %v2351, %v2639
        %v2704 = vadd.f32 %v2352, %v2640
        %v2705 = vadd.f32 %v2353, %v2641
        %v2706 = vadd.f32 %v2354, %v2642
        %v2707 = vadd.f32 %v2355, %v2643
        %v2708 = vadd.f32 %v2356, %v2644
        %v2709 = vadd.f32 %v2357, %v2645
        %v2710 = vadd.f32 %v2358, %v2646
        %v2711 = vadd.f32 %v2359, %v2647
        %v2712 = vadd.f32 %v2360, %v2648
        %v2713 = vadd.f32 %v2361, %v2649
        %v2714 = vadd.f32 %v2362, %v2650
        %v2715 = vadd.f32 %v2363, %v2651
        %v2716 = vadd.f32 %v2364, %v2652
        %v2717 = vadd.f32 %v2365, %v2653
        %v2718 = vadd.f32 %v2366, %v2654
        %v2719 = vadd.f32 %v2367, %v2655
        %v2720 = vadd.f32 %v2368, %v2656
        %v2721 = vadd.f32 %v2369, %v2657
        %v2722 = vadd.f32 %v2370, %v2658
        %v2723 = vadd.f32 %v2371, %v2659
        %v2724 = vadd.f32 %v2372, %v2660
        %v2725 = vadd.f32 %v2373, %v2661
        %v2726 = vadd.f32 %v2374, %v2662
        %v2727 = vadd.f32 %v2375, %v2663
        %v2728 = vadd.f32 %v2376, %v2664
        %v2729 = vadd.f32 %v2377, %v2665
        %v2730 = vadd.f32 %v2378, %v2666
        %v2731 = vadd.f32 %v2379, %v2667
        %v2732 = vadd.f32 %v2380, %v2668
        %v2733 = vadd.f32 %v2381, %v2669
        %v2734 = vadd.f32 %v2382, %v2670
        %v2735 = vadd.f32 %v2383, %v2671
        %v2736 = vadd.f32 %v2384, %v2672
        %v2737 = vadd.f32 %v2385, %v2673
        %v2738 = vadd.f32 %v2386, %v2674
        %v2739 = vadd.f32 %v2387, %v2675
        %v2740 = vadd.f32 %v2388, %v2676
        %v2741 = vadd.f32 %v2389, %v2677
        %v2742 = vadd.f32 %v2390, %v2678
        %v2743 = vadd.f32 %v2391, %v2679
        %v2744 = vadd.f32 %v2392, %v2680
        %v2745 = vadd.f32 %v2393, %v2681
        %v2746 = vadd.f32 %v2394, %v2682
        %v2747 = vadd.f32 %v2395, %v2683
        %v2748 = vadd.f32 %v2396, %v2684
        %v2749 = vadd.f32 %v2397, %v2685
        %v2750 = vadd.f32 %v2398, %v2686
        %v2751 = vadd.f32 %v2399, %v2687
        %v2752 = vadd.f32 %v2400, %v2688
        %v2753 = vadd.f32 %v2401, %v2689
        %v2754 = vadd.f32 %v2402, %v2690
        %v2755 = vadd.f32 %v2403, %v2691
        %v2756 = vadd.f32 %v2404, %v2692
        %v2757 = vadd.f32 %v2405, %v2693
        %v2758 = vadd.f32 %v2406, %v2694
        %2759 = vset.pattern.permute.xlu0 7
        %2760 = vperm.xlu0 %2759, %v324
        %v2761 = vpop.permute.xlu0 %2760
        %2762 = vset.pattern.permute.xlu0 7
        %2763 = vperm.xlu0 %2762, %v325
        %v2764 = vpop.permute.xlu0 %2763
        %2765 = vset.pattern.permute.xlu0 7
        %2766 = vperm.xlu0 %2765, %v326
        %v2767 = vpop.permute.xlu0 %2766
        %2768 = vset.pattern.permute.xlu0 7
        %2769 = vperm.xlu0 %2768, %v327
        %v2770 = vpop.permute.xlu0 %2769
        %2771 = vset.pattern.permute.xlu0 7
        %2772 = vperm.xlu0 %2771, %v328
        %v2773 = vpop.permute.xlu0 %2772
        %2774 = vset.pattern.permute.xlu0 7
        %2775 = vperm.xlu0 %2774, %v329
        %v2776 = vpop.permute.xlu0 %2775
        %2777 = vset.pattern.permute.xlu0 7
        %2778 = vperm.xlu0 %2777, %v330
        %v2779 = vpop.permute.xlu0 %2778
        %2780 = vset.pattern.permute.xlu0 7
        %2781 = vperm.xlu0 %2780, %v331
        %v2782 = vpop.permute.xlu0 %2781
        %2783 = vset.pattern.permute.xlu0 7
        %2784 = vperm.xlu0 %2783, %v332
        %v2785 = vpop.permute.xlu0 %2784
        %2786 = vset.pattern.permute.xlu0 7
        %2787 = vperm.xlu0 %2786, %v333
        %v2788 = vpop.permute.xlu0 %2787
        %2789 = vset.pattern.permute.xlu0 7
        %2790 = vperm.xlu0 %2789, %v334
        %v2791 = vpop.permute.xlu0 %2790
        %2792 = vset.pattern.permute.xlu0 7
        %2793 = vperm.xlu0 %2792, %v335
        %v2794 = vpop.permute.xlu0 %2793
        %2795 = vset.pattern.permute.xlu0 7
        %2796 = vperm.xlu0 %2795, %v336
        %v2797 = vpop.permute.xlu0 %2796
        %2798 = vset.pattern.permute.xlu0 7
        %2799 = vperm.xlu0 %2798, %v337
        %v2800 = vpop.permute.xlu0 %2799
        %2801 = vset.pattern.permute.xlu0 7
        %2802 = vperm.xlu0 %2801, %v338
        %v2803 = vpop.permute.xlu0 %2802
        %2804 = vset.pattern.permute.xlu0 7
        %2805 = vperm.xlu0 %2804, %v339
        %v2806 = vpop.permute.xlu0 %2805
        %2807 = vset.pattern.permute.xlu0 7
        %2808 = vperm.xlu0 %2807, %v340
        %v2809 = vpop.permute.xlu0 %2808
        %2810 = vset.pattern.permute.xlu0 7
        %2811 = vperm.xlu0 %2810, %v341
        %v2812 = vpop.permute.xlu0 %2811
        %2813 = vset.pattern.permute.xlu0 7
        %2814 = vperm.xlu0 %2813, %v342
        %v2815 = vpop.permute.xlu0 %2814
        %2816 = vset.pattern.permute.xlu0 7
        %2817 = vperm.xlu0 %2816, %v343
        %v2818 = vpop.permute.xlu0 %2817
        %2819 = vset.pattern.permute.xlu0 7
        %2820 = vperm.xlu0 %2819, %v344
        %v2821 = vpop.permute.xlu0 %2820
        %2822 = vset.pattern.permute.xlu0 7
        %2823 = vperm.xlu0 %2822, %v345
        %v2824 = vpop.permute.xlu0 %2823
        %2825 = vset.pattern.permute.xlu0 7
        %2826 = vperm.xlu0 %2825, %v346
        %v2827 = vpop.permute.xlu0 %2826
        %2828 = vset.pattern.permute.xlu0 7
        %2829 = vperm.xlu0 %2828, %v347
        %v2830 = vpop.permute.xlu0 %2829
        %2831 = vset.pattern.permute.xlu0 7
        %2832 = vperm.xlu0 %2831, %v348
        %v2833 = vpop.permute.xlu0 %2832
        %2834 = vset.pattern.permute.xlu0 7
        %2835 = vperm.xlu0 %2834, %v349
        %v2836 = vpop.permute.xlu0 %2835
        %2837 = vset.pattern.permute.xlu0 7
        %2838 = vperm.xlu0 %2837, %v350
        %v2839 = vpop.permute.xlu0 %2838
        %2840 = vset.pattern.permute.xlu0 7
        %2841 = vperm.xlu0 %2840, %v351
        %v2842 = vpop.permute.xlu0 %2841
        %2843 = vset.pattern.permute.xlu0 7
        %2844 = vperm.xlu0 %2843, %v352
        %v2845 = vpop.permute.xlu0 %2844
        %2846 = vset.pattern.permute.xlu0 7
        %2847 = vperm.xlu0 %2846, %v353
        %v2848 = vpop.permute.xlu0 %2847
        %2849 = vset.pattern.permute.xlu0 7
        %2850 = vperm.xlu0 %2849, %v354
        %v2851 = vpop.permute.xlu0 %2850
        %2852 = vset.pattern.permute.xlu0 7
        %2853 = vperm.xlu0 %2852, %v355
        %v2854 = vpop.permute.xlu0 %2853
        %vm2855 = vcmp.eq.s32.totalorder %v2761, %v357
        %vm2856 = vcmp.eq.s32.totalorder %v2761, %v358
        %vm2857 = vcmp.eq.s32.totalorder %v2764, %v357
        %vm2858 = vcmp.eq.s32.totalorder %v2764, %v358
        %vm2859 = vcmp.eq.s32.totalorder %v2767, %v357
        %vm2860 = vcmp.eq.s32.totalorder %v2767, %v358
        %vm2861 = vcmp.eq.s32.totalorder %v2770, %v357
        %vm2862 = vcmp.eq.s32.totalorder %v2770, %v358
        %vm2863 = vcmp.eq.s32.totalorder %v2773, %v357
        %vm2864 = vcmp.eq.s32.totalorder %v2773, %v358
        %vm2865 = vcmp.eq.s32.totalorder %v2776, %v357
        %vm2866 = vcmp.eq.s32.totalorder %v2776, %v358
        %vm2867 = vcmp.eq.s32.totalorder %v2779, %v357
        %vm2868 = vcmp.eq.s32.totalorder %v2779, %v358
        %vm2869 = vcmp.eq.s32.totalorder %v2782, %v357
        %vm2870 = vcmp.eq.s32.totalorder %v2782, %v358
        %vm2871 = vcmp.eq.s32.totalorder %v2785, %v357
        %vm2872 = vcmp.eq.s32.totalorder %v2785, %v358
        %vm2873 = vcmp.eq.s32.totalorder %v2788, %v357
        %vm2874 = vcmp.eq.s32.totalorder %v2788, %v358
        %vm2875 = vcmp.eq.s32.totalorder %v2791, %v357
        %vm2876 = vcmp.eq.s32.totalorder %v2791, %v358
        %vm2877 = vcmp.eq.s32.totalorder %v2794, %v357
        %vm2878 = vcmp.eq.s32.totalorder %v2794, %v358
        %vm2879 = vcmp.eq.s32.totalorder %v2797, %v357
        %vm2880 = vcmp.eq.s32.totalorder %v2797, %v358
        %vm2881 = vcmp.eq.s32.totalorder %v2800, %v357
        %vm2882 = vcmp.eq.s32.totalorder %v2800, %v358
        %vm2883 = vcmp.eq.s32.totalorder %v2803, %v357
        %vm2884 = vcmp.eq.s32.totalorder %v2803, %v358
        %vm2885 = vcmp.eq.s32.totalorder %v2806, %v357
        %vm2886 = vcmp.eq.s32.totalorder %v2806, %v358
        %vm2887 = vcmp.eq.s32.totalorder %v2809, %v357
        %vm2888 = vcmp.eq.s32.totalorder %v2809, %v358
        %vm2889 = vcmp.eq.s32.totalorder %v2812, %v357
        %vm2890 = vcmp.eq.s32.totalorder %v2812, %v358
        %vm2891 = vcmp.eq.s32.totalorder %v2815, %v357
        %vm2892 = vcmp.eq.s32.totalorder %v2815, %v358
        %vm2893 = vcmp.eq.s32.totalorder %v2818, %v357
        %vm2894 = vcmp.eq.s32.totalorder %v2818, %v358
        %vm2895 = vcmp.eq.s32.totalorder %v2821, %v357
        %vm2896 = vcmp.eq.s32.totalorder %v2821, %v358
        %vm2897 = vcmp.eq.s32.totalorder %v2824, %v357
        %vm2898 = vcmp.eq.s32.totalorder %v2824, %v358
        %vm2899 = vcmp.eq.s32.totalorder %v2827, %v357
        %vm2900 = vcmp.eq.s32.totalorder %v2827, %v358
        %vm2901 = vcmp.eq.s32.totalorder %v2830, %v357
        %vm2902 = vcmp.eq.s32.totalorder %v2830, %v358
        %vm2903 = vcmp.eq.s32.totalorder %v2833, %v357
        %vm2904 = vcmp.eq.s32.totalorder %v2833, %v358
        %vm2905 = vcmp.eq.s32.totalorder %v2836, %v357
        %vm2906 = vcmp.eq.s32.totalorder %v2836, %v358
        %vm2907 = vcmp.eq.s32.totalorder %v2839, %v357
        %vm2908 = vcmp.eq.s32.totalorder %v2839, %v358
        %vm2909 = vcmp.eq.s32.totalorder %v2842, %v357
        %vm2910 = vcmp.eq.s32.totalorder %v2842, %v358
        %vm2911 = vcmp.eq.s32.totalorder %v2845, %v357
        %vm2912 = vcmp.eq.s32.totalorder %v2845, %v358
        %vm2913 = vcmp.eq.s32.totalorder %v2848, %v357
        %vm2914 = vcmp.eq.s32.totalorder %v2848, %v358
        %vm2915 = vcmp.eq.s32.totalorder %v2851, %v357
        %vm2916 = vcmp.eq.s32.totalorder %v2851, %v358
        %vm2917 = vcmp.eq.s32.totalorder %v2854, %v357
        %vm2918 = vcmp.eq.s32.totalorder %v2854, %v358
        %v2919 = vsel %vm2855, 1, 0
        %v2920 = vsel %vm2856, 1, 0
        %v2921 = vsel %vm2857, 1, 0
        %v2922 = vsel %vm2858, 1, 0
        %v2923 = vsel %vm2859, 1, 0
        %v2924 = vsel %vm2860, 1, 0
        %v2925 = vsel %vm2861, 1, 0
        %v2926 = vsel %vm2862, 1, 0
        %v2927 = vsel %vm2863, 1, 0
        %v2928 = vsel %vm2864, 1, 0
        %v2929 = vsel %vm2865, 1, 0
        %v2930 = vsel %vm2866, 1, 0
        %v2931 = vsel %vm2867, 1, 0
        %v2932 = vsel %vm2868, 1, 0
        %v2933 = vsel %vm2869, 1, 0
        %v2934 = vsel %vm2870, 1, 0
        %v2935 = vsel %vm2871, 1, 0
        %v2936 = vsel %vm2872, 1, 0
        %v2937 = vsel %vm2873, 1, 0
        %v2938 = vsel %vm2874, 1, 0
        %v2939 = vsel %vm2875, 1, 0
        %v2940 = vsel %vm2876, 1, 0
        %v2941 = vsel %vm2877, 1, 0
        %v2942 = vsel %vm2878, 1, 0
        %v2943 = vsel %vm2879, 1, 0
        %v2944 = vsel %vm2880, 1, 0
        %v2945 = vsel %vm2881, 1, 0
        %v2946 = vsel %vm2882, 1, 0
        %v2947 = vsel %vm2883, 1, 0
        %v2948 = vsel %vm2884, 1, 0
        %v2949 = vsel %vm2885, 1, 0
        %v2950 = vsel %vm2886, 1, 0
        %v2951 = vsel %vm2887, 1, 0
        %v2952 = vsel %vm2888, 1, 0
        %v2953 = vsel %vm2889, 1, 0
        %v2954 = vsel %vm2890, 1, 0
        %v2955 = vsel %vm2891, 1, 0
        %v2956 = vsel %vm2892, 1, 0
        %v2957 = vsel %vm2893, 1, 0
        %v2958 = vsel %vm2894, 1, 0
        %v2959 = vsel %vm2895, 1, 0
        %v2960 = vsel %vm2896, 1, 0
        %v2961 = vsel %vm2897, 1, 0
        %v2962 = vsel %vm2898, 1, 0
        %v2963 = vsel %vm2899, 1, 0
        %v2964 = vsel %vm2900, 1, 0
        %v2965 = vsel %vm2901, 1, 0
        %v2966 = vsel %vm2902, 1, 0
        %v2967 = vsel %vm2903, 1, 0
        %v2968 = vsel %vm2904, 1, 0
        %v2969 = vsel %vm2905, 1, 0
        %v2970 = vsel %vm2906, 1, 0
        %v2971 = vsel %vm2907, 1, 0
        %v2972 = vsel %vm2908, 1, 0
        %v2973 = vsel %vm2909, 1, 0
        %v2974 = vsel %vm2910, 1, 0
        %v2975 = vsel %vm2911, 1, 0
        %v2976 = vsel %vm2912, 1, 0
        %v2977 = vsel %vm2913, 1, 0
        %v2978 = vsel %vm2914, 1, 0
        %v2979 = vsel %vm2915, 1, 0
        %v2980 = vsel %vm2916, 1, 0
        %v2981 = vsel %vm2917, 1, 0
        %v2982 = vsel %vm2918, 1, 0
        %v2983 = vcvt.s32.f32 %v2919
        %v2984 = vcvt.s32.f32 %v2920
        %v2985 = vcvt.s32.f32 %v2921
        %v2986 = vcvt.s32.f32 %v2922
        %v2987 = vcvt.s32.f32 %v2923
        %v2988 = vcvt.s32.f32 %v2924
        %v2989 = vcvt.s32.f32 %v2925
        %v2990 = vcvt.s32.f32 %v2926
        %v2991 = vcvt.s32.f32 %v2927
        %v2992 = vcvt.s32.f32 %v2928
        %v2993 = vcvt.s32.f32 %v2929
        %v2994 = vcvt.s32.f32 %v2930
        %v2995 = vcvt.s32.f32 %v2931
        %v2996 = vcvt.s32.f32 %v2932
        %v2997 = vcvt.s32.f32 %v2933
        %v2998 = vcvt.s32.f32 %v2934
        %v2999 = vcvt.s32.f32 %v2935
        %v3000 = vcvt.s32.f32 %v2936
        %v3001 = vcvt.s32.f32 %v2937
        %v3002 = vcvt.s32.f32 %v2938
        %v3003 = vcvt.s32.f32 %v2939
        %v3004 = vcvt.s32.f32 %v2940
        %v3005 = vcvt.s32.f32 %v2941
        %v3006 = vcvt.s32.f32 %v2942
        %v3007 = vcvt.s32.f32 %v2943
        %v3008 = vcvt.s32.f32 %v2944
        %v3009 = vcvt.s32.f32 %v2945
        %v3010 = vcvt.s32.f32 %v2946
        %v3011 = vcvt.s32.f32 %v2947
        %v3012 = vcvt.s32.f32 %v2948
        %v3013 = vcvt.s32.f32 %v2949
        %v3014 = vcvt.s32.f32 %v2950
        %v3015 = vcvt.s32.f32 %v2951
        %v3016 = vcvt.s32.f32 %v2952
        %v3017 = vcvt.s32.f32 %v2953
        %v3018 = vcvt.s32.f32 %v2954
        %v3019 = vcvt.s32.f32 %v2955
        %v3020 = vcvt.s32.f32 %v2956
        %v3021 = vcvt.s32.f32 %v2957
        %v3022 = vcvt.s32.f32 %v2958
        %v3023 = vcvt.s32.f32 %v2959
        %v3024 = vcvt.s32.f32 %v2960
        %v3025 = vcvt.s32.f32 %v2961
        %v3026 = vcvt.s32.f32 %v2962
        %v3027 = vcvt.s32.f32 %v2963
        %v3028 = vcvt.s32.f32 %v2964
        %v3029 = vcvt.s32.f32 %v2965
        %v3030 = vcvt.s32.f32 %v2966
        %v3031 = vcvt.s32.f32 %v2967
        %v3032 = vcvt.s32.f32 %v2968
        %v3033 = vcvt.s32.f32 %v2969
        %v3034 = vcvt.s32.f32 %v2970
        %v3035 = vcvt.s32.f32 %v2971
        %v3036 = vcvt.s32.f32 %v2972
        %v3037 = vcvt.s32.f32 %v2973
        %v3038 = vcvt.s32.f32 %v2974
        %v3039 = vcvt.s32.f32 %v2975
        %v3040 = vcvt.s32.f32 %v2976
        %v3041 = vcvt.s32.f32 %v2977
        %v3042 = vcvt.s32.f32 %v2978
        %v3043 = vcvt.s32.f32 %v2979
        %v3044 = vcvt.s32.f32 %v2980
        %v3045 = vcvt.s32.f32 %v2981
        %v3046 = vcvt.s32.f32 %v2982
        %v3047 = vadd.f32 %v2695, %v2983
        %v3048 = vadd.f32 %v2696, %v2984
        %v3049 = vadd.f32 %v2697, %v2985
        %v3050 = vadd.f32 %v2698, %v2986
        %v3051 = vadd.f32 %v2699, %v2987
        %v3052 = vadd.f32 %v2700, %v2988
        %v3053 = vadd.f32 %v2701, %v2989
        %v3054 = vadd.f32 %v2702, %v2990
        %v3055 = vadd.f32 %v2703, %v2991
        %v3056 = vadd.f32 %v2704, %v2992
        %v3057 = vadd.f32 %v2705, %v2993
        %v3058 = vadd.f32 %v2706, %v2994
        %v3059 = vadd.f32 %v2707, %v2995
        %v3060 = vadd.f32 %v2708, %v2996
        %v3061 = vadd.f32 %v2709, %v2997
        %v3062 = vadd.f32 %v2710, %v2998
        %v3063 = vadd.f32 %v2711, %v2999
        %v3064 = vadd.f32 %v2712, %v3000
        %v3065 = vadd.f32 %v2713, %v3001
        %v3066 = vadd.f32 %v2714, %v3002
        %v3067 = vadd.f32 %v2715, %v3003
        %v3068 = vadd.f32 %v2716, %v3004
        %v3069 = vadd.f32 %v2717, %v3005
        %v3070 = vadd.f32 %v2718, %v3006
        %v3071 = vadd.f32 %v2719, %v3007
        %v3072 = vadd.f32 %v2720, %v3008
        %v3073 = vadd.f32 %v2721, %v3009
        %v3074 = vadd.f32 %v2722, %v3010
        %v3075 = vadd.f32 %v2723, %v3011
        %v3076 = vadd.f32 %v2724, %v3012
        %v3077 = vadd.f32 %v2725, %v3013
        %v3078 = vadd.f32 %v2726, %v3014
        %v3079 = vadd.f32 %v2727, %v3015
        %v3080 = vadd.f32 %v2728, %v3016
        %v3081 = vadd.f32 %v2729, %v3017
        %v3082 = vadd.f32 %v2730, %v3018
        %v3083 = vadd.f32 %v2731, %v3019
        %v3084 = vadd.f32 %v2732, %v3020
        %v3085 = vadd.f32 %v2733, %v3021
        %v3086 = vadd.f32 %v2734, %v3022
        %v3087 = vadd.f32 %v2735, %v3023
        %v3088 = vadd.f32 %v2736, %v3024
        %v3089 = vadd.f32 %v2737, %v3025
        %v3090 = vadd.f32 %v2738, %v3026
        %v3091 = vadd.f32 %v2739, %v3027
        %v3092 = vadd.f32 %v2740, %v3028
        %v3093 = vadd.f32 %v2741, %v3029
        %v3094 = vadd.f32 %v2742, %v3030
        %v3095 = vadd.f32 %v2743, %v3031
        %v3096 = vadd.f32 %v2744, %v3032
        %v3097 = vadd.f32 %v2745, %v3033
        %v3098 = vadd.f32 %v2746, %v3034
        %v3099 = vadd.f32 %v2747, %v3035
        %v3100 = vadd.f32 %v2748, %v3036
        %v3101 = vadd.f32 %v2749, %v3037
        %v3102 = vadd.f32 %v2750, %v3038
        %v3103 = vadd.f32 %v2751, %v3039
        %v3104 = vadd.f32 %v2752, %v3040
        %v3105 = vadd.f32 %v2753, %v3041
        %v3106 = vadd.f32 %v2754, %v3042
        %v3107 = vadd.f32 %v2755, %v3043
        %v3108 = vadd.f32 %v2756, %v3044
        %v3109 = vadd.f32 %v2757, %v3045
        %v3110 = vadd.f32 %v2758, %v3046
        %v3111 = vld [vmem:[%s3] sm:$0xff]
        %v3112 = vld [vmem:[%s3 + $0x8] sm:$0xff]
        %v3113 = vld [vmem:[%s3 + $0x10] sm:$0xff]
        %v3114 = vld [vmem:[%s3 + $0x18] sm:$0xff]
        %v3115 = vld [vmem:[%s3 + $0x20] sm:$0xff]
        %v3116 = vld [vmem:[%s3 + $0x28] sm:$0xff]
        %v3117 = vld [vmem:[%s3 + $0x30] sm:$0xff]
        %v3118 = vld [vmem:[%s3 + $0x38] sm:$0xff]
        %v3119 = vld [vmem:[%s3 + $0x40] sm:$0xff]
        %v3120 = vld [vmem:[%s3 + $0x48] sm:$0xff]
        %v3121 = vld [vmem:[%s3 + $0x50] sm:$0xff]
        %v3122 = vld [vmem:[%s3 + $0x58] sm:$0xff]
        %v3123 = vld [vmem:[%s3 + $0x60] sm:$0xff]
        %v3124 = vld [vmem:[%s3 + $0x68] sm:$0xff]
        %v3125 = vld [vmem:[%s3 + $0x70] sm:$0xff]
        %v3126 = vld [vmem:[%s3 + $0x78] sm:$0xff]
        %v3127 = vld [vmem:[%s3 + $0x80] sm:$0xff]
        %v3128 = vld [vmem:[%s3 + $0x88] sm:$0xff]
        %v3129 = vld [vmem:[%s3 + $0x90] sm:$0xff]
        %v3130 = vld [vmem:[%s3 + $0x98] sm:$0xff]
        %v3131 = vld [vmem:[%s3 + $0xa0] sm:$0xff]
        %v3132 = vld [vmem:[%s3 + $0xa8] sm:$0xff]
        %v3133 = vld [vmem:[%s3 + $0xb0] sm:$0xff]
        %v3134 = vld [vmem:[%s3 + $0xb8] sm:$0xff]
        %v3135 = vld [vmem:[%s3 + $0xc0] sm:$0xff]
        %v3136 = vld [vmem:[%s3 + $0xc8] sm:$0xff]
        %v3137 = vld [vmem:[%s3 + $0xd0] sm:$0xff]
        %v3138 = vld [vmem:[%s3 + $0xd8] sm:$0xff]
        %v3139 = vld [vmem:[%s3 + $0xe0] sm:$0xff]
        %v3140 = vld [vmem:[%s3 + $0xe8] sm:$0xff]
        %v3141 = vld [vmem:[%s3 + $0xf0] sm:$0xff]
        %v3142 = vld [vmem:[%s3 + $0xf8] sm:$0xff]
        %v3143 = vld [vmem:[%s6] sm:$0x1]
        %v3145 = vlaneseq
        %v3146 = vshrl.u32 %v3145, 7
        %v3147 = vsub.s32 0, %v3146
        %v3148 = vrot.slane %v3143, %v3147
        %3150 = vmatprep.subr.mxu0 0.0
        %3151 = vmatpush1.msra.mxu0 %v3126
        %3152 = vmatprep.subr.mxu0 0.0
        %3153 = vmatpush1.msra.mxu0 %v3125
        %3154 = vmatprep.subr.mxu0 0.0
        %3155 = vmatpush1.msra.mxu0 %v3124
        %3156 = vmatprep.subr.mxu0 0.0
        %3157 = vmatpush1.msra.mxu0 %v3123
        %3158 = vmatprep.subr.mxu0 0.0
        %3159 = vmatpush1.msra.mxu0 %v3122
        %3160 = vmatprep.subr.mxu0 0.0
        %3161 = vmatpush1.msra.mxu0 %v3121
        %3162 = vmatprep.subr.mxu0 0.0
        %3163 = vmatpush1.msra.mxu0 %v3120
        %3164 = vmatprep.subr.mxu0 0.0
        %3165 = vmatpush1.msra.mxu0 %v3119
        %3166 = vmatprep.subr.mxu0 0.0
        %3167 = vmatpush1.msra.mxu0 %v3118
        %3168 = vmatprep.subr.mxu0 0.0
        %3169 = vmatpush1.msra.mxu0 %v3117
        %3170 = vmatprep.subr.mxu0 0.0
        %3171 = vmatpush1.msra.mxu0 %v3116
        %3172 = vmatprep.subr.mxu0 0.0
        %3173 = vmatpush1.msra.mxu0 %v3115
        %3174 = vmatprep.subr.mxu0 0.0
        %3175 = vmatpush1.msra.mxu0 %v3114
        %3176 = vmatprep.subr.mxu0 0.0
        %3177 = vmatpush1.msra.mxu0 %v3113
        %3178 = vmatprep.subr.mxu0 0.0
        %3179 = vmatpush1.msra.mxu0 %v3112
        %3180 = vmatprep.subr.mxu0 0.0
        %3181 = vmatpush1.msra.mxu0 %v3111
        %3182 = vmatprep.subr.mxu0 0.0
        %3183 = vmatpush2.msra.mxu0 %v3142
        %3184 = vmatprep.subr.mxu0 0.0
        %3185 = vmatpush2.msra.mxu0 %v3141
        %3186 = vmatprep.subr.mxu0 0.0
        %3187 = vmatpush2.msra.mxu0 %v3140
        %3188 = vmatprep.subr.mxu0 0.0
        %3189 = vmatpush2.msra.mxu0 %v3139
        %3190 = vmatprep.subr.mxu0 0.0
        %3191 = vmatpush2.msra.mxu0 %v3138
        %3192 = vmatprep.subr.mxu0 0.0
        %3193 = vmatpush2.msra.mxu0 %v3137
        %3194 = vmatprep.subr.mxu0 0.0
        %3195 = vmatpush2.msra.mxu0 %v3136
        %3196 = vmatprep.subr.mxu0 0.0
        %3197 = vmatpush2.msra.mxu0 %v3135
        %3198 = vmatprep.subr.mxu0 0.0
        %3199 = vmatpush2.msra.mxu0 %v3134
        %3200 = vmatprep.subr.mxu0 0.0
        %3201 = vmatpush2.msra.mxu0 %v3133
        %3202 = vmatprep.subr.mxu0 0.0
        %3203 = vmatpush2.msra.mxu0 %v3132
        %3204 = vmatprep.subr.mxu0 0.0
        %3205 = vmatpush2.msra.mxu0 %v3131
        %3206 = vmatprep.subr.mxu0 0.0
        %3207 = vmatpush2.msra.mxu0 %v3130
        %3208 = vmatprep.subr.mxu0 0.0
        %3209 = vmatpush2.msra.mxu0 %v3129
        %3210 = vmatprep.subr.mxu0 0.0
        %3211 = vmatpush2.msra.mxu0 %v3128
        %3212 = vmatprep.subr.mxu0 0.0
        %3213 = vmatpush2.msra.mxu0 %v3127
        %3214 = vmatprep.mubr.f32.mxu0 %v3048
        %3215 = vmatmul.mubr.f32.gmra.mxu0 %v3047
        %v3216 = vpop.f32.mrf.mxu0
        %v3217 = vadd.f32 %v3148, %v3216
        %v3218 = vpop.f32.mrf.mxu0
        %3219 = vmatprep.mubr.f32.mxu0 %v3050
        %3220 = vmatmul.mubr.f32.gmra.mxu0 %v3049
        %v3221 = vpop.f32.mrf.mxu0
        %v3222 = vadd.f32 %v3148, %v3221
        %v3223 = vpop.f32.mrf.mxu0
        %3224 = vmatprep.mubr.f32.mxu0 %v3052
        %3225 = vmatmul.mubr.f32.gmra.mxu0 %v3051
        %v3226 = vpop.f32.mrf.mxu0
        %v3227 = vadd.f32 %v3148, %v3226
        %v3228 = vpop.f32.mrf.mxu0
        %3229 = vmatprep.mubr.f32.mxu0 %v3054
        %3230 = vmatmul.mubr.f32.gmra.mxu0 %v3053
        %v3231 = vpop.f32.mrf.mxu0
        %v3232 = vadd.f32 %v3148, %v3231
        %v3233 = vpop.f32.mrf.mxu0
        %3234 = vmatprep.mubr.f32.mxu0 %v3056
        %3235 = vmatmul.mubr.f32.gmra.mxu0 %v3055
        %v3236 = vpop.f32.mrf.mxu0
        %v3237 = vadd.f32 %v3148, %v3236
        %v3238 = vpop.f32.mrf.mxu0
        %3239 = vmatprep.mubr.f32.mxu0 %v3058
        %3240 = vmatmul.mubr.f32.gmra.mxu0 %v3057
        %v3241 = vpop.f32.mrf.mxu0
        %v3242 = vadd.f32 %v3148, %v3241
        %v3243 = vpop.f32.mrf.mxu0
        %3244 = vmatprep.mubr.f32.mxu0 %v3060
        %3245 = vmatmul.mubr.f32.gmra.mxu0 %v3059
        %v3246 = vpop.f32.mrf.mxu0
        %v3247 = vadd.f32 %v3148, %v3246
        %v3248 = vpop.f32.mrf.mxu0
        %3249 = vmatprep.mubr.f32.mxu0 %v3062
        %3250 = vmatmul.mubr.f32.gmra.mxu0 %v3061
        %v3251 = vpop.f32.mrf.mxu0
        %v3252 = vadd.f32 %v3148, %v3251
        %v3253 = vpop.f32.mrf.mxu0
        %3254 = vmatprep.mubr.f32.mxu0 %v3064
        %3255 = vmatmul.mubr.f32.gmra.mxu0 %v3063
        %v3256 = vpop.f32.mrf.mxu0
        %v3257 = vadd.f32 %v3148, %v3256
        %v3258 = vpop.f32.mrf.mxu0
        %3259 = vmatprep.mubr.f32.mxu0 %v3066
        %3260 = vmatmul.mubr.f32.gmra.mxu0 %v3065
        %v3261 = vpop.f32.mrf.mxu0
        %v3262 = vadd.f32 %v3148, %v3261
        %v3263 = vpop.f32.mrf.mxu0
        %3264 = vmatprep.mubr.f32.mxu0 %v3068
        %3265 = vmatmul.mubr.f32.gmra.mxu0 %v3067
        %v3266 = vpop.f32.mrf.mxu0
        %v3267 = vadd.f32 %v3148, %v3266
        %v3268 = vpop.f32.mrf.mxu0
        %3269 = vmatprep.mubr.f32.mxu0 %v3070
        %3270 = vmatmul.mubr.f32.gmra.mxu0 %v3069
        %v3271 = vpop.f32.mrf.mxu0
        %v3272 = vadd.f32 %v3148, %v3271
        %v3273 = vpop.f32.mrf.mxu0
        %3274 = vmatprep.mubr.f32.mxu0 %v3072
        %3275 = vmatmul.mubr.f32.gmra.mxu0 %v3071
        %v3276 = vpop.f32.mrf.mxu0
        %v3277 = vadd.f32 %v3148, %v3276
        %v3278 = vpop.f32.mrf.mxu0
        %3279 = vmatprep.mubr.f32.mxu0 %v3074
        %3280 = vmatmul.mubr.f32.gmra.mxu0 %v3073
        %v3281 = vpop.f32.mrf.mxu0
        %v3282 = vadd.f32 %v3148, %v3281
        %v3283 = vpop.f32.mrf.mxu0
        %3284 = vmatprep.mubr.f32.mxu0 %v3076
        %3285 = vmatmul.mubr.f32.gmra.mxu0 %v3075
        %v3286 = vpop.f32.mrf.mxu0
        %v3287 = vadd.f32 %v3148, %v3286
        %v3288 = vpop.f32.mrf.mxu0
        %3289 = vmatprep.mubr.f32.mxu0 %v3078
        %3290 = vmatmul.mubr.f32.gmra.mxu0 %v3077
        %v3291 = vpop.f32.mrf.mxu0
        %v3292 = vadd.f32 %v3148, %v3291
        %v3293 = vpop.f32.mrf.mxu0
        %3294 = vmatprep.mubr.f32.mxu0 %v3080
        %3295 = vmatmul.mubr.f32.gmra.mxu0 %v3079
        %v3296 = vpop.f32.mrf.mxu0
        %v3297 = vadd.f32 %v3148, %v3296
        %v3298 = vpop.f32.mrf.mxu0
        %3299 = vmatprep.mubr.f32.mxu0 %v3082
        %3300 = vmatmul.mubr.f32.gmra.mxu0 %v3081
        %v3301 = vpop.f32.mrf.mxu0
        %v3302 = vadd.f32 %v3148, %v3301
        %v3303 = vpop.f32.mrf.mxu0
        %3304 = vmatprep.mubr.f32.mxu0 %v3084
        %3305 = vmatmul.mubr.f32.gmra.mxu0 %v3083
        %v3306 = vpop.f32.mrf.mxu0
        %v3307 = vadd.f32 %v3148, %v3306
        %v3308 = vpop.f32.mrf.mxu0
        %3309 = vmatprep.mubr.f32.mxu0 %v3086
        %3310 = vmatmul.mubr.f32.gmra.mxu0 %v3085
        %v3311 = vpop.f32.mrf.mxu0
        %v3312 = vadd.f32 %v3148, %v3311
        %v3313 = vpop.f32.mrf.mxu0
        %3314 = vmatprep.mubr.f32.mxu0 %v3088
        %3315 = vmatmul.mubr.f32.gmra.mxu0 %v3087
        %v3316 = vpop.f32.mrf.mxu0
        %v3317 = vadd.f32 %v3148, %v3316
        %v3318 = vpop.f32.mrf.mxu0
        %3319 = vmatprep.mubr.f32.mxu0 %v3090
        %3320 = vmatmul.mubr.f32.gmra.mxu0 %v3089
        %v3321 = vpop.f32.mrf.mxu0
        %v3322 = vadd.f32 %v3148, %v3321
        %v3323 = vpop.f32.mrf.mxu0
        %3324 = vmatprep.mubr.f32.mxu0 %v3092
        %3325 = vmatmul.mubr.f32.gmra.mxu0 %v3091
        %v3326 = vpop.f32.mrf.mxu0
        %v3327 = vadd.f32 %v3148, %v3326
        %v3328 = vpop.f32.mrf.mxu0
        %3329 = vmatprep.mubr.f32.mxu0 %v3094
        %3330 = vmatmul.mubr.f32.gmra.mxu0 %v3093
        %v3331 = vpop.f32.mrf.mxu0
        %v3332 = vadd.f32 %v3148, %v3331
        %v3333 = vpop.f32.mrf.mxu0
        %3334 = vmatprep.mubr.f32.mxu0 %v3096
        %3335 = vmatmul.mubr.f32.gmra.mxu0 %v3095
        %v3336 = vpop.f32.mrf.mxu0
        %v3337 = vadd.f32 %v3148, %v3336
        %v3338 = vpop.f32.mrf.mxu0
        %3339 = vmatprep.mubr.f32.mxu0 %v3098
        %3340 = vmatmul.mubr.f32.gmra.mxu0 %v3097
        %v3341 = vpop.f32.mrf.mxu0
        %v3342 = vadd.f32 %v3148, %v3341
        %v3343 = vpop.f32.mrf.mxu0
        %3344 = vmatprep.mubr.f32.mxu0 %v3100
        %3345 = vmatmul.mubr.f32.gmra.mxu0 %v3099
        %v3346 = vpop.f32.mrf.mxu0
        %v3347 = vadd.f32 %v3148, %v3346
        %v3348 = vpop.f32.mrf.mxu0
        %3349 = vmatprep.mubr.f32.mxu0 %v3102
        %3350 = vmatmul.mubr.f32.gmra.mxu0 %v3101
        %v3351 = vpop.f32.mrf.mxu0
        %v3352 = vadd.f32 %v3148, %v3351
        %v3353 = vpop.f32.mrf.mxu0
        %3354 = vmatprep.mubr.f32.mxu0 %v3104
        %3355 = vmatmul.mubr.f32.gmra.mxu0 %v3103
        %v3356 = vpop.f32.mrf.mxu0
        %v3357 = vadd.f32 %v3148, %v3356
        %v3358 = vpop.f32.mrf.mxu0
        %3359 = vmatprep.mubr.f32.mxu0 %v3106
        %3360 = vmatmul.mubr.f32.gmra.mxu0 %v3105
        %v3361 = vpop.f32.mrf.mxu0
        %v3362 = vadd.f32 %v3148, %v3361
        %v3363 = vpop.f32.mrf.mxu0
        %3364 = vmatprep.mubr.f32.mxu0 %v3108
        %3365 = vmatmul.mubr.f32.gmra.mxu0 %v3107
        %v3366 = vpop.f32.mrf.mxu0
        %v3367 = vadd.f32 %v3148, %v3366
        %v3368 = vpop.f32.mrf.mxu0
        %3369 = vmatprep.mubr.f32.mxu0 %v3110
        %3370 = vmatmul.mubr.f32.gmra.mxu0 %v3109
        %v3371 = vpop.f32.mrf.mxu0
        %v3372 = vadd.f32 %v3148, %v3371
        %v3373 = vpop.f32.mrf.mxu0
        %3374 = vdwg.mxu0
        %v3375 = vld [vmem:[%s315] sm:$0xff]
        %v3376 = vld [vmem:[%s315 + $0x8] sm:$0xff]
        %v3377 = vld [vmem:[%s315 + $0x10] sm:$0xff]
        %v3378 = vld [vmem:[%s315 + $0x18] sm:$0xff]
        %v3379 = vld [vmem:[%s315 + $0x20] sm:$0xff]
        %v3380 = vld [vmem:[%s315 + $0x28] sm:$0xff]
        %v3381 = vld [vmem:[%s315 + $0x30] sm:$0xff]
        %v3382 = vld [vmem:[%s315 + $0x38] sm:$0xff]
        %v3383 = vld [vmem:[%s315 + $0x40] sm:$0xff]
        %v3384 = vld [vmem:[%s315 + $0x48] sm:$0xff]
        %v3385 = vld [vmem:[%s315 + $0x50] sm:$0xff]
        %v3386 = vld [vmem:[%s315 + $0x58] sm:$0xff]
        %v3387 = vld [vmem:[%s315 + $0x60] sm:$0xff]
        %v3388 = vld [vmem:[%s315 + $0x68] sm:$0xff]
        %v3389 = vld [vmem:[%s315 + $0x70] sm:$0xff]
        %v3390 = vld [vmem:[%s315 + $0x78] sm:$0xff]
        %v3391 = vld [vmem:[%s315 + $0x80] sm:$0xff]
        %v3392 = vld [vmem:[%s315 + $0x88] sm:$0xff]
        %v3393 = vld [vmem:[%s315 + $0x90] sm:$0xff]
        %v3394 = vld [vmem:[%s315 + $0x98] sm:$0xff]
        %v3395 = vld [vmem:[%s315 + $0xa0] sm:$0xff]
        %v3396 = vld [vmem:[%s315 + $0xa8] sm:$0xff]
        %v3397 = vld [vmem:[%s315 + $0xb0] sm:$0xff]
        %v3398 = vld [vmem:[%s315 + $0xb8] sm:$0xff]
        %v3399 = vld [vmem:[%s315 + $0xc0] sm:$0xff]
        %v3400 = vld [vmem:[%s315 + $0xc8] sm:$0xff]
        %v3401 = vld [vmem:[%s315 + $0xd0] sm:$0xff]
        %v3402 = vld [vmem:[%s315 + $0xd8] sm:$0xff]
        %v3403 = vld [vmem:[%s315 + $0xe0] sm:$0xff]
        %v3404 = vld [vmem:[%s315 + $0xe8] sm:$0xff]
        %v3405 = vld [vmem:[%s315 + $0xf0] sm:$0xff]
        %v3406 = vld [vmem:[%s315 + $0xf8] sm:$0xff]
        %3407 = vset.pattern.permute.xlu0 0
        %3408 = vperm.xlu0 %3407, %v3375
        %v3409 = vpop.permute.xlu0 %3408
        %3410 = vset.pattern.permute.xlu0 0
        %3411 = vperm.xlu0 %3410, %v3376
        %v3412 = vpop.permute.xlu0 %3411
        %3413 = vset.pattern.permute.xlu0 0
        %3414 = vperm.xlu0 %3413, %v3377
        %v3415 = vpop.permute.xlu0 %3414
        %3416 = vset.pattern.permute.xlu0 0
        %3417 = vperm.xlu0 %3416, %v3378
        %v3418 = vpop.permute.xlu0 %3417
        %3419 = vset.pattern.permute.xlu0 0
        %3420 = vperm.xlu0 %3419, %v3379
        %v3421 = vpop.permute.xlu0 %3420
        %3422 = vset.pattern.permute.xlu0 0
        %3423 = vperm.xlu0 %3422, %v3380
        %v3424 = vpop.permute.xlu0 %3423
        %3425 = vset.pattern.permute.xlu0 0
        %3426 = vperm.xlu0 %3425, %v3381
        %v3427 = vpop.permute.xlu0 %3426
        %3428 = vset.pattern.permute.xlu0 0
        %3429 = vperm.xlu0 %3428, %v3382
        %v3430 = vpop.permute.xlu0 %3429
        %3431 = vset.pattern.permute.xlu0 0
        %3432 = vperm.xlu0 %3431, %v3383
        %v3433 = vpop.permute.xlu0 %3432
        %3434 = vset.pattern.permute.xlu0 0
        %3435 = vperm.xlu0 %3434, %v3384
        %v3436 = vpop.permute.xlu0 %3435
        %3437 = vset.pattern.permute.xlu0 0
        %3438 = vperm.xlu0 %3437, %v3385
        %v3439 = vpop.permute.xlu0 %3438
        %3440 = vset.pattern.permute.xlu0 0
        %3441 = vperm.xlu0 %3440, %v3386
        %v3442 = vpop.permute.xlu0 %3441
        %3443 = vset.pattern.permute.xlu0 0
        %3444 = vperm.xlu0 %3443, %v3387
        %v3445 = vpop.permute.xlu0 %3444
        %3446 = vset.pattern.permute.xlu0 0
        %3447 = vperm.xlu0 %3446, %v3388
        %v3448 = vpop.permute.xlu0 %3447
        %3449 = vset.pattern.permute.xlu0 0
        %3450 = vperm.xlu0 %3449, %v3389
        %v3451 = vpop.permute.xlu0 %3450
        %3452 = vset.pattern.permute.xlu0 0
        %3453 = vperm.xlu0 %3452, %v3390
        %v3454 = vpop.permute.xlu0 %3453
        %3455 = vset.pattern.permute.xlu0 0
        %3456 = vperm.xlu0 %3455, %v3391
        %v3457 = vpop.permute.xlu0 %3456
        %3458 = vset.pattern.permute.xlu0 0
        %3459 = vperm.xlu0 %3458, %v3392
        %v3460 = vpop.permute.xlu0 %3459
        %3461 = vset.pattern.permute.xlu0 0
        %3462 = vperm.xlu0 %3461, %v3393
        %v3463 = vpop.permute.xlu0 %3462
        %3464 = vset.pattern.permute.xlu0 0
        %3465 = vperm.xlu0 %3464, %v3394
        %v3466 = vpop.permute.xlu0 %3465
        %3467 = vset.pattern.permute.xlu0 0
        %3468 = vperm.xlu0 %3467, %v3395
        %v3469 = vpop.permute.xlu0 %3468
        %3470 = vset.pattern.permute.xlu0 0
        %3471 = vperm.xlu0 %3470, %v3396
        %v3472 = vpop.permute.xlu0 %3471
        %3473 = vset.pattern.permute.xlu0 0
        %3474 = vperm.xlu0 %3473, %v3397
        %v3475 = vpop.permute.xlu0 %3474
        %3476 = vset.pattern.permute.xlu0 0
        %3477 = vperm.xlu0 %3476, %v3398
        %v3478 = vpop.permute.xlu0 %3477
        %3479 = vset.pattern.permute.xlu0 0
        %3480 = vperm.xlu0 %3479, %v3399
        %v3481 = vpop.permute.xlu0 %3480
        %3482 = vset.pattern.permute.xlu0 0
        %3483 = vperm.xlu0 %3482, %v3400
        %v3484 = vpop.permute.xlu0 %3483
        %3485 = vset.pattern.permute.xlu0 0
        %3486 = vperm.xlu0 %3485, %v3401
        %v3487 = vpop.permute.xlu0 %3486
        %3488 = vset.pattern.permute.xlu0 0
        %3489 = vperm.xlu0 %3488, %v3402
        %v3490 = vpop.permute.xlu0 %3489
        %3491 = vset.pattern.permute.xlu0 0
        %3492 = vperm.xlu0 %3491, %v3403
        %v3493 = vpop.permute.xlu0 %3492
        %3494 = vset.pattern.permute.xlu0 0
        %3495 = vperm.xlu0 %3494, %v3404
        %v3496 = vpop.permute.xlu0 %3495
        %3497 = vset.pattern.permute.xlu0 0
        %3498 = vperm.xlu0 %3497, %v3405
        %v3499 = vpop.permute.xlu0 %3498
        %3500 = vset.pattern.permute.xlu0 0
        %3501 = vperm.xlu0 %3500, %v3406
        %v3502 = vpop.permute.xlu0 %3501
        %vm3503 = vcmp.eq.s32.totalorder %v3409, %v357
        %vm3504 = vcmp.eq.s32.totalorder %v3412, %v357
        %vm3505 = vcmp.eq.s32.totalorder %v3415, %v357
        %vm3506 = vcmp.eq.s32.totalorder %v3418, %v357
        %vm3507 = vcmp.eq.s32.totalorder %v3421, %v357
        %vm3508 = vcmp.eq.s32.totalorder %v3424, %v357
        %vm3509 = vcmp.eq.s32.totalorder %v3427, %v357
        %vm3510 = vcmp.eq.s32.totalorder %v3430, %v357
        %vm3511 = vcmp.eq.s32.totalorder %v3433, %v357
        %vm3512 = vcmp.eq.s32.totalorder %v3436, %v357
        %vm3513 = vcmp.eq.s32.totalorder %v3439, %v357
        %vm3514 = vcmp.eq.s32.totalorder %v3442, %v357
        %vm3515 = vcmp.eq.s32.totalorder %v3445, %v357
        %vm3516 = vcmp.eq.s32.totalorder %v3448, %v357
        %vm3517 = vcmp.eq.s32.totalorder %v3451, %v357
        %vm3518 = vcmp.eq.s32.totalorder %v3454, %v357
        %vm3519 = vcmp.eq.s32.totalorder %v3457, %v357
        %vm3520 = vcmp.eq.s32.totalorder %v3460, %v357
        %vm3521 = vcmp.eq.s32.totalorder %v3463, %v357
        %vm3522 = vcmp.eq.s32.totalorder %v3466, %v357
        %vm3523 = vcmp.eq.s32.totalorder %v3469, %v357
        %vm3524 = vcmp.eq.s32.totalorder %v3472, %v357
        %vm3525 = vcmp.eq.s32.totalorder %v3475, %v357
        %vm3526 = vcmp.eq.s32.totalorder %v3478, %v357
        %vm3527 = vcmp.eq.s32.totalorder %v3481, %v357
        %vm3528 = vcmp.eq.s32.totalorder %v3484, %v357
        %vm3529 = vcmp.eq.s32.totalorder %v3487, %v357
        %vm3530 = vcmp.eq.s32.totalorder %v3490, %v357
        %vm3531 = vcmp.eq.s32.totalorder %v3493, %v357
        %vm3532 = vcmp.eq.s32.totalorder %v3496, %v357
        %vm3533 = vcmp.eq.s32.totalorder %v3499, %v357
        %vm3534 = vcmp.eq.s32.totalorder %v3502, %v357
        %v3535 = vsel %vm3503, 1, 0
        %v3536 = vsel %vm3504, 1, 0
        %v3537 = vsel %vm3505, 1, 0
        %v3538 = vsel %vm3506, 1, 0
        %v3539 = vsel %vm3507, 1, 0
        %v3540 = vsel %vm3508, 1, 0
        %v3541 = vsel %vm3509, 1, 0
        %v3542 = vsel %vm3510, 1, 0
        %v3543 = vsel %vm3511, 1, 0
        %v3544 = vsel %vm3512, 1, 0
        %v3545 = vsel %vm3513, 1, 0
        %v3546 = vsel %vm3514, 1, 0
        %v3547 = vsel %vm3515, 1, 0
        %v3548 = vsel %vm3516, 1, 0
        %v3549 = vsel %vm3517, 1, 0
        %v3550 = vsel %vm3518, 1, 0
        %v3551 = vsel %vm3519, 1, 0
        %v3552 = vsel %vm3520, 1, 0
        %v3553 = vsel %vm3521, 1, 0
        %v3554 = vsel %vm3522, 1, 0
        %v3555 = vsel %vm3523, 1, 0
        %v3556 = vsel %vm3524, 1, 0
        %v3557 = vsel %vm3525, 1, 0
        %v3558 = vsel %vm3526, 1, 0
        %v3559 = vsel %vm3527, 1, 0
        %v3560 = vsel %vm3528, 1, 0
        %v3561 = vsel %vm3529, 1, 0
        %v3562 = vsel %vm3530, 1, 0
        %v3563 = vsel %vm3531, 1, 0
        %v3564 = vsel %vm3532, 1, 0
        %v3565 = vsel %vm3533, 1, 0
        %v3566 = vsel %vm3534, 1, 0
        %v3567 = vcvt.s32.f32 %v3535
        %v3568 = vcvt.s32.f32 %v3536
        %v3569 = vcvt.s32.f32 %v3537
        %v3570 = vcvt.s32.f32 %v3538
        %v3571 = vcvt.s32.f32 %v3539
        %v3572 = vcvt.s32.f32 %v3540
        %v3573 = vcvt.s32.f32 %v3541
        %v3574 = vcvt.s32.f32 %v3542
        %v3575 = vcvt.s32.f32 %v3543
        %v3576 = vcvt.s32.f32 %v3544
        %v3577 = vcvt.s32.f32 %v3545
        %v3578 = vcvt.s32.f32 %v3546
        %v3579 = vcvt.s32.f32 %v3547
        %v3580 = vcvt.s32.f32 %v3548
        %v3581 = vcvt.s32.f32 %v3549
        %v3582 = vcvt.s32.f32 %v3550
        %v3583 = vcvt.s32.f32 %v3551
        %v3584 = vcvt.s32.f32 %v3552
        %v3585 = vcvt.s32.f32 %v3553
        %v3586 = vcvt.s32.f32 %v3554
        %v3587 = vcvt.s32.f32 %v3555
        %v3588 = vcvt.s32.f32 %v3556
        %v3589 = vcvt.s32.f32 %v3557
        %v3590 = vcvt.s32.f32 %v3558
        %v3591 = vcvt.s32.f32 %v3559
        %v3592 = vcvt.s32.f32 %v3560
        %v3593 = vcvt.s32.f32 %v3561
        %v3594 = vcvt.s32.f32 %v3562
        %v3595 = vcvt.s32.f32 %v3563
        %v3596 = vcvt.s32.f32 %v3564
        %v3597 = vcvt.s32.f32 %v3565
        %v3598 = vcvt.s32.f32 %v3566
        %v3599 = vld [vmem:[%s4] sm:$0xff]
        %v3600 = vld [vmem:[%s4 + $0x8] sm:$0xff]
        %v3601 = vld [vmem:[%s4 + $0x10] sm:$0xff]
        %v3602 = vld [vmem:[%s4 + $0x18] sm:$0xff]
        %v3603 = vld [vmem:[%s4 + $0x20] sm:$0xff]
        %v3604 = vld [vmem:[%s4 + $0x28] sm:$0xff]
        %v3605 = vld [vmem:[%s4 + $0x30] sm:$0xff]
        %v3606 = vld [vmem:[%s4 + $0x38] sm:$0xff]
        %v3607 = vld [vmem:[%s4 + $0x40] sm:$0xff]
        %v3608 = vld [vmem:[%s4 + $0x48] sm:$0xff]
        %v3609 = vld [vmem:[%s4 + $0x50] sm:$0xff]
        %v3610 = vld [vmem:[%s4 + $0x58] sm:$0xff]
        %v3611 = vld [vmem:[%s4 + $0x60] sm:$0xff]
        %v3612 = vld [vmem:[%s4 + $0x68] sm:$0xff]
        %v3613 = vld [vmem:[%s4 + $0x70] sm:$0xff]
        %v3614 = vld [vmem:[%s4 + $0x78] sm:$0xff]
        %3615 = vmatprep.subr.mxu0 0.0
        %3616 = vmatpush1.msra.mxu0 %v3614
        %3617 = vmatprep.subr.mxu0 0.0
        %3618 = vmatpush1.msra.mxu0 %v3613
        %3619 = vmatprep.subr.mxu0 0.0
        %3620 = vmatpush1.msra.mxu0 %v3612
        %3621 = vmatprep.subr.mxu0 0.0
        %3622 = vmatpush1.msra.mxu0 %v3611
        %3623 = vmatprep.subr.mxu0 0.0
        %3624 = vmatpush1.msra.mxu0 %v3610
        %3625 = vmatprep.subr.mxu0 0.0
        %3626 = vmatpush1.msra.mxu0 %v3609
        %3627 = vmatprep.subr.mxu0 0.0
        %3628 = vmatpush1.msra.mxu0 %v3608
        %3629 = vmatprep.subr.mxu0 0.0
        %3630 = vmatpush1.msra.mxu0 %v3607
        %3631 = vmatprep.subr.mxu0 0.0
        %3632 = vmatpush1.msra.mxu0 %v3606
        %3633 = vmatprep.subr.mxu0 0.0
        %3634 = vmatpush1.msra.mxu0 %v3605
        %3635 = vmatprep.subr.mxu0 0.0
        %3636 = vmatpush1.msra.mxu0 %v3604
        %3637 = vmatprep.subr.mxu0 0.0
        %3638 = vmatpush1.msra.mxu0 %v3603
        %3639 = vmatprep.subr.mxu0 0.0
        %3640 = vmatpush1.msra.mxu0 %v3602
        %3641 = vmatprep.subr.mxu0 0.0
        %3642 = vmatpush1.msra.mxu0 %v3601
        %3643 = vmatprep.subr.mxu0 0.0
        %3644 = vmatpush1.msra.mxu0 %v3600
        %3645 = vmatprep.subr.mxu0 0.0
        %3646 = vmatpush1.msra.mxu0 %v3599
        %3647 = vmatprep.subr.mxu0 0.0
        %3648 = vmatpush2.msra.mxu0 0.0
        %3649 = vmatprep.subr.mxu0 0.0
        %3650 = vmatpush2.msra.mxu0 0.0
        %3651 = vmatprep.subr.mxu0 0.0
        %3652 = vmatpush2.msra.mxu0 0.0
        %3653 = vmatprep.subr.mxu0 0.0
        %3654 = vmatpush2.msra.mxu0 0.0
        %3655 = vmatprep.subr.mxu0 0.0
        %3656 = vmatpush2.msra.mxu0 0.0
        %3657 = vmatprep.subr.mxu0 0.0
        %3658 = vmatpush2.msra.mxu0 0.0
        %3659 = vmatprep.subr.mxu0 0.0
        %3660 = vmatpush2.msra.mxu0 0.0
        %3661 = vmatprep.subr.mxu0 0.0
        %3662 = vmatpush2.msra.mxu0 0.0
        %3663 = vmatprep.subr.mxu0 0.0
        %3664 = vmatpush2.msra.mxu0 0.0
        %3665 = vmatprep.subr.mxu0 0.0
        %3666 = vmatpush2.msra.mxu0 0.0
        %3667 = vmatprep.subr.mxu0 0.0
        %3668 = vmatpush2.msra.mxu0 0.0
        %3669 = vmatprep.subr.mxu0 0.0
        %3670 = vmatpush2.msra.mxu0 0.0
        %3671 = vmatprep.subr.mxu0 0.0
        %3672 = vmatpush2.msra.mxu0 0.0
        %3673 = vmatprep.subr.mxu0 0.0
        %3674 = vmatpush2.msra.mxu0 0.0
        %3675 = vmatprep.subr.mxu0 0.0
        %3676 = vmatpush2.msra.mxu0 0.0
        %3677 = vmatprep.subr.mxu0 0.0
        %3678 = vmatpush2.msra.mxu0 0.0
        %3679 = vmatprep.mubr.f32.mxu0 0.0
        %3680 = vmatmul.mubr.f32.gmra.mxu0 %v3567
        %v3681 = vpop.f32.mrf.mxu0
        %v3682 = vadd.f32 0.0, %v3681
        %v3683 = vpop.f32.mrf.mxu0
        %3684 = vmatprep.mubr.f32.mxu0 0.0
        %3685 = vmatmul.mubr.f32.gmra.mxu0 %v3568
        %v3686 = vpop.f32.mrf.mxu0
        %v3687 = vadd.f32 0.0, %v3686
        %v3688 = vpop.f32.mrf.mxu0
        %3689 = vmatprep.mubr.f32.mxu0 0.0
        %3690 = vmatmul.mubr.f32.gmra.mxu0 %v3569
        %v3691 = vpop.f32.mrf.mxu0
        %v3692 = vadd.f32 0.0, %v3691
        %v3693 = vpop.f32.mrf.mxu0
        %3694 = vmatprep.mubr.f32.mxu0 0.0
        %3695 = vmatmul.mubr.f32.gmra.mxu0 %v3570
        %v3696 = vpop.f32.mrf.mxu0
        %v3697 = vadd.f32 0.0, %v3696
        %v3698 = vpop.f32.mrf.mxu0
        %3699 = vmatprep.mubr.f32.mxu0 0.0
        %3700 = vmatmul.mubr.f32.gmra.mxu0 %v3571
        %v3701 = vpop.f32.mrf.mxu0
        %v3702 = vadd.f32 0.0, %v3701
        %v3703 = vpop.f32.mrf.mxu0
        %3704 = vmatprep.mubr.f32.mxu0 0.0
        %3705 = vmatmul.mubr.f32.gmra.mxu0 %v3572
        %v3706 = vpop.f32.mrf.mxu0
        %v3707 = vadd.f32 0.0, %v3706
        %v3708 = vpop.f32.mrf.mxu0
        %3709 = vmatprep.mubr.f32.mxu0 0.0
        %3710 = vmatmul.mubr.f32.gmra.mxu0 %v3573
        %v3711 = vpop.f32.mrf.mxu0
        %v3712 = vadd.f32 0.0, %v3711
        %v3713 = vpop.f32.mrf.mxu0
        %3714 = vmatprep.mubr.f32.mxu0 0.0
        %3715 = vmatmul.mubr.f32.gmra.mxu0 %v3574
        %v3716 = vpop.f32.mrf.mxu0
        %v3717 = vadd.f32 0.0, %v3716
        %v3718 = vpop.f32.mrf.mxu0
        %3719 = vmatprep.mubr.f32.mxu0 0.0
        %3720 = vmatmul.mubr.f32.gmra.mxu0 %v3575
        %v3721 = vpop.f32.mrf.mxu0
        %v3722 = vadd.f32 0.0, %v3721
        %v3723 = vpop.f32.mrf.mxu0
        %3724 = vmatprep.mubr.f32.mxu0 0.0
        %3725 = vmatmul.mubr.f32.gmra.mxu0 %v3576
        %v3726 = vpop.f32.mrf.mxu0
        %v3727 = vadd.f32 0.0, %v3726
        %v3728 = vpop.f32.mrf.mxu0
        %3729 = vmatprep.mubr.f32.mxu0 0.0
        %3730 = vmatmul.mubr.f32.gmra.mxu0 %v3577
        %v3731 = vpop.f32.mrf.mxu0
        %v3732 = vadd.f32 0.0, %v3731
        %v3733 = vpop.f32.mrf.mxu0
        %3734 = vmatprep.mubr.f32.mxu0 0.0
        %3735 = vmatmul.mubr.f32.gmra.mxu0 %v3578
        %v3736 = vpop.f32.mrf.mxu0
        %v3737 = vadd.f32 0.0, %v3736
        %v3738 = vpop.f32.mrf.mxu0
        %3739 = vmatprep.mubr.f32.mxu0 0.0
        %3740 = vmatmul.mubr.f32.gmra.mxu0 %v3579
        %v3741 = vpop.f32.mrf.mxu0
        %v3742 = vadd.f32 0.0, %v3741
        %v3743 = vpop.f32.mrf.mxu0
        %3744 = vmatprep.mubr.f32.mxu0 0.0
        %3745 = vmatmul.mubr.f32.gmra.mxu0 %v3580
        %v3746 = vpop.f32.mrf.mxu0
        %v3747 = vadd.f32 0.0, %v3746
        %v3748 = vpop.f32.mrf.mxu0
        %3749 = vmatprep.mubr.f32.mxu0 0.0
        %3750 = vmatmul.mubr.f32.gmra.mxu0 %v3581
        %v3751 = vpop.f32.mrf.mxu0
        %v3752 = vadd.f32 0.0, %v3751
        %v3753 = vpop.f32.mrf.mxu0
        %3754 = vmatprep.mubr.f32.mxu0 0.0
        %3755 = vmatmul.mubr.f32.gmra.mxu0 %v3582
        %v3756 = vpop.f32.mrf.mxu0
        %v3757 = vadd.f32 0.0, %v3756
        %v3758 = vpop.f32.mrf.mxu0
        %3759 = vmatprep.mubr.f32.mxu0 0.0
        %3760 = vmatmul.mubr.f32.gmra.mxu0 %v3583
        %v3761 = vpop.f32.mrf.mxu0
        %v3762 = vadd.f32 0.0, %v3761
        %v3763 = vpop.f32.mrf.mxu0
        %3764 = vmatprep.mubr.f32.mxu0 0.0
        %3765 = vmatmul.mubr.f32.gmra.mxu0 %v3584
        %v3766 = vpop.f32.mrf.mxu0
        %v3767 = vadd.f32 0.0, %v3766
        %v3768 = vpop.f32.mrf.mxu0
        %3769 = vmatprep.mubr.f32.mxu0 0.0
        %3770 = vmatmul.mubr.f32.gmra.mxu0 %v3585
        %v3771 = vpop.f32.mrf.mxu0
        %v3772 = vadd.f32 0.0, %v3771
        %v3773 = vpop.f32.mrf.mxu0
        %3774 = vmatprep.mubr.f32.mxu0 0.0
        %3775 = vmatmul.mubr.f32.gmra.mxu0 %v3586
        %v3776 = vpop.f32.mrf.mxu0
        %v3777 = vadd.f32 0.0, %v3776
        %v3778 = vpop.f32.mrf.mxu0
        %3779 = vmatprep.mubr.f32.mxu0 0.0
        %3780 = vmatmul.mubr.f32.gmra.mxu0 %v3587
        %v3781 = vpop.f32.mrf.mxu0
        %v3782 = vadd.f32 0.0, %v3781
        %v3783 = vpop.f32.mrf.mxu0
        %3784 = vmatprep.mubr.f32.mxu0 0.0
        %3785 = vmatmul.mubr.f32.gmra.mxu0 %v3588
        %v3786 = vpop.f32.mrf.mxu0
        %v3787 = vadd.f32 0.0, %v3786
        %v3788 = vpop.f32.mrf.mxu0
        %3789 = vmatprep.mubr.f32.mxu0 0.0
        %3790 = vmatmul.mubr.f32.gmra.mxu0 %v3589
        %v3791 = vpop.f32.mrf.mxu0
        %v3792 = vadd.f32 0.0, %v3791
        %v3793 = vpop.f32.mrf.mxu0
        %3794 = vmatprep.mubr.f32.mxu0 0.0
        %3795 = vmatmul.mubr.f32.gmra.mxu0 %v3590
        %v3796 = vpop.f32.mrf.mxu0
        %v3797 = vadd.f32 0.0, %v3796
        %v3798 = vpop.f32.mrf.mxu0
        %3799 = vmatprep.mubr.f32.mxu0 0.0
        %3800 = vmatmul.mubr.f32.gmra.mxu0 %v3591
        %v3801 = vpop.f32.mrf.mxu0
        %v3802 = vadd.f32 0.0, %v3801
        %v3803 = vpop.f32.mrf.mxu0
        %3804 = vmatprep.mubr.f32.mxu0 0.0
        %3805 = vmatmul.mubr.f32.gmra.mxu0 %v3592
        %v3806 = vpop.f32.mrf.mxu0
        %v3807 = vadd.f32 0.0, %v3806
        %v3808 = vpop.f32.mrf.mxu0
        %3809 = vmatprep.mubr.f32.mxu0 0.0
        %3810 = vmatmul.mubr.f32.gmra.mxu0 %v3593
        %v3811 = vpop.f32.mrf.mxu0
        %v3812 = vadd.f32 0.0, %v3811
        %v3813 = vpop.f32.mrf.mxu0
        %3814 = vmatprep.mubr.f32.mxu0 0.0
        %3815 = vmatmul.mubr.f32.gmra.mxu0 %v3594
        %v3816 = vpop.f32.mrf.mxu0
        %v3817 = vadd.f32 0.0, %v3816
        %v3818 = vpop.f32.mrf.mxu0
        %3819 = vmatprep.mubr.f32.mxu0 0.0
        %3820 = vmatmul.mubr.f32.gmra.mxu0 %v3595
        %v3821 = vpop.f32.mrf.mxu0
        %v3822 = vadd.f32 0.0, %v3821
        %v3823 = vpop.f32.mrf.mxu0
        %3824 = vmatprep.mubr.f32.mxu0 0.0
        %3825 = vmatmul.mubr.f32.gmra.mxu0 %v3596
        %v3826 = vpop.f32.mrf.mxu0
        %v3827 = vadd.f32 0.0, %v3826
        %v3828 = vpop.f32.mrf.mxu0
        %3829 = vmatprep.mubr.f32.mxu0 0.0
        %3830 = vmatmul.mubr.f32.gmra.mxu0 %v3597
        %v3831 = vpop.f32.mrf.mxu0
        %v3832 = vadd.f32 0.0, %v3831
        %v3833 = vpop.f32.mrf.mxu0
        %3834 = vmatprep.mubr.f32.mxu0 0.0
        %3835 = vmatmul.mubr.f32.gmra.mxu0 %v3598
        %v3836 = vpop.f32.mrf.mxu0
        %v3837 = vadd.f32 0.0, %v3836
        %v3838 = vpop.f32.mrf.mxu0
        %3839 = vdwg.mxu0
        %v3840 = vld [vmem:[%s321] sm:$0xff]
        %v3841 = vld [vmem:[%s321 + $0x8] sm:$0xff]
        %v3842 = vld [vmem:[%s321 + $0x10] sm:$0xff]
        %v3843 = vld [vmem:[%s321 + $0x18] sm:$0xff]
        %v3844 = vld [vmem:[%s321 + $0x20] sm:$0xff]
        %v3845 = vld [vmem:[%s321 + $0x28] sm:$0xff]
        %v3846 = vld [vmem:[%s321 + $0x30] sm:$0xff]
        %v3847 = vld [vmem:[%s321 + $0x38] sm:$0xff]
        %v3848 = vld [vmem:[%s321 + $0x40] sm:$0xff]
        %v3849 = vld [vmem:[%s321 + $0x48] sm:$0xff]
        %v3850 = vld [vmem:[%s321 + $0x50] sm:$0xff]
        %v3851 = vld [vmem:[%s321 + $0x58] sm:$0xff]
        %v3852 = vld [vmem:[%s321 + $0x60] sm:$0xff]
        %v3853 = vld [vmem:[%s321 + $0x68] sm:$0xff]
        %v3854 = vld [vmem:[%s321 + $0x70] sm:$0xff]
        %v3855 = vld [vmem:[%s321 + $0x78] sm:$0xff]
        %v3856 = vld [vmem:[%s321 + $0x80] sm:$0xff]
        %v3857 = vld [vmem:[%s321 + $0x88] sm:$0xff]
        %v3858 = vld [vmem:[%s321 + $0x90] sm:$0xff]
        %v3859 = vld [vmem:[%s321 + $0x98] sm:$0xff]
        %v3860 = vld [vmem:[%s321 + $0xa0] sm:$0xff]
        %v3861 = vld [vmem:[%s321 + $0xa8] sm:$0xff]
        %v3862 = vld [vmem:[%s321 + $0xb0] sm:$0xff]
        %v3863 = vld [vmem:[%s321 + $0xb8] sm:$0xff]
        %v3864 = vld [vmem:[%s321 + $0xc0] sm:$0xff]
        %v3865 = vld [vmem:[%s321 + $0xc8] sm:$0xff]
        %v3866 = vld [vmem:[%s321 + $0xd0] sm:$0xff]
        %v3867 = vld [vmem:[%s321 + $0xd8] sm:$0xff]
        %v3868 = vld [vmem:[%s321 + $0xe0] sm:$0xff]
        %v3869 = vld [vmem:[%s321 + $0xe8] sm:$0xff]
        %v3870 = vld [vmem:[%s321 + $0xf0] sm:$0xff]
        %v3871 = vld [vmem:[%s321 + $0xf8] sm:$0xff]
        %3872 = vset.pattern.permute.xlu0 0
        %3873 = vperm.xlu0 %3872, %v3840
        %v3874 = vpop.permute.xlu0 %3873
        %3875 = vset.pattern.permute.xlu0 0
        %3876 = vperm.xlu0 %3875, %v3841
        %v3877 = vpop.permute.xlu0 %3876
        %3878 = vset.pattern.permute.xlu0 0
        %3879 = vperm.xlu0 %3878, %v3842
        %v3880 = vpop.permute.xlu0 %3879
        %3881 = vset.pattern.permute.xlu0 0
        %3882 = vperm.xlu0 %3881, %v3843
        %v3883 = vpop.permute.xlu0 %3882
        %3884 = vset.pattern.permute.xlu0 0
        %3885 = vperm.xlu0 %3884, %v3844
        %v3886 = vpop.permute.xlu0 %3885
        %3887 = vset.pattern.permute.xlu0 0
        %3888 = vperm.xlu0 %3887, %v3845
        %v3889 = vpop.permute.xlu0 %3888
        %3890 = vset.pattern.permute.xlu0 0
        %3891 = vperm.xlu0 %3890, %v3846
        %v3892 = vpop.permute.xlu0 %3891
        %3893 = vset.pattern.permute.xlu0 0
        %3894 = vperm.xlu0 %3893, %v3847
        %v3895 = vpop.permute.xlu0 %3894
        %3896 = vset.pattern.permute.xlu0 0
        %3897 = vperm.xlu0 %3896, %v3848
        %v3898 = vpop.permute.xlu0 %3897
        %3899 = vset.pattern.permute.xlu0 0
        %3900 = vperm.xlu0 %3899, %v3849
        %v3901 = vpop.permute.xlu0 %3900
        %3902 = vset.pattern.permute.xlu0 0
        %3903 = vperm.xlu0 %3902, %v3850
        %v3904 = vpop.permute.xlu0 %3903
        %3905 = vset.pattern.permute.xlu0 0
        %3906 = vperm.xlu0 %3905, %v3851
        %v3907 = vpop.permute.xlu0 %3906
        %3908 = vset.pattern.permute.xlu0 0
        %3909 = vperm.xlu0 %3908, %v3852
        %v3910 = vpop.permute.xlu0 %3909
        %3911 = vset.pattern.permute.xlu0 0
        %3912 = vperm.xlu0 %3911, %v3853
        %v3913 = vpop.permute.xlu0 %3912
        %3914 = vset.pattern.permute.xlu0 0
        %3915 = vperm.xlu0 %3914, %v3854
        %v3916 = vpop.permute.xlu0 %3915
        %3917 = vset.pattern.permute.xlu0 0
        %3918 = vperm.xlu0 %3917, %v3855
        %v3919 = vpop.permute.xlu0 %3918
        %3920 = vset.pattern.permute.xlu0 0
        %3921 = vperm.xlu0 %3920, %v3856
        %v3922 = vpop.permute.xlu0 %3921
        %3923 = vset.pattern.permute.xlu0 0
        %3924 = vperm.xlu0 %3923, %v3857
        %v3925 = vpop.permute.xlu0 %3924
        %3926 = vset.pattern.permute.xlu0 0
        %3927 = vperm.xlu0 %3926, %v3858
        %v3928 = vpop.permute.xlu0 %3927
        %3929 = vset.pattern.permute.xlu0 0
        %3930 = vperm.xlu0 %3929, %v3859
        %v3931 = vpop.permute.xlu0 %3930
        %3932 = vset.pattern.permute.xlu0 0
        %3933 = vperm.xlu0 %3932, %v3860
        %v3934 = vpop.permute.xlu0 %3933
        %3935 = vset.pattern.permute.xlu0 0
        %3936 = vperm.xlu0 %3935, %v3861
        %v3937 = vpop.permute.xlu0 %3936
        %3938 = vset.pattern.permute.xlu0 0
        %3939 = vperm.xlu0 %3938, %v3862
        %v3940 = vpop.permute.xlu0 %3939
        %3941 = vset.pattern.permute.xlu0 0
        %3942 = vperm.xlu0 %3941, %v3863
        %v3943 = vpop.permute.xlu0 %3942
        %3944 = vset.pattern.permute.xlu0 0
        %3945 = vperm.xlu0 %3944, %v3864
        %v3946 = vpop.permute.xlu0 %3945
        %3947 = vset.pattern.permute.xlu0 0
        %3948 = vperm.xlu0 %3947, %v3865
        %v3949 = vpop.permute.xlu0 %3948
        %3950 = vset.pattern.permute.xlu0 0
        %3951 = vperm.xlu0 %3950, %v3866
        %v3952 = vpop.permute.xlu0 %3951
        %3953 = vset.pattern.permute.xlu0 0
        %3954 = vperm.xlu0 %3953, %v3867
        %v3955 = vpop.permute.xlu0 %3954
        %3956 = vset.pattern.permute.xlu0 0
        %3957 = vperm.xlu0 %3956, %v3868
        %v3958 = vpop.permute.xlu0 %3957
        %3959 = vset.pattern.permute.xlu0 0
        %3960 = vperm.xlu0 %3959, %v3869
        %v3961 = vpop.permute.xlu0 %3960
        %3962 = vset.pattern.permute.xlu0 0
        %3963 = vperm.xlu0 %3962, %v3870
        %v3964 = vpop.permute.xlu0 %3963
        %3965 = vset.pattern.permute.xlu0 0
        %3966 = vperm.xlu0 %3965, %v3871
        %v3967 = vpop.permute.xlu0 %3966
        %vm3968 = vcmp.eq.s32.totalorder %v3874, %v357
        %vm3969 = vcmp.eq.s32.totalorder %v3877, %v357
        %vm3970 = vcmp.eq.s32.totalorder %v3880, %v357
        %vm3971 = vcmp.eq.s32.totalorder %v3883, %v357
        %vm3972 = vcmp.eq.s32.totalorder %v3886, %v357
        %vm3973 = vcmp.eq.s32.totalorder %v3889, %v357
        %vm3974 = vcmp.eq.s32.totalorder %v3892, %v357
        %vm3975 = vcmp.eq.s32.totalorder %v3895, %v357
        %vm3976 = vcmp.eq.s32.totalorder %v3898, %v357
        %vm3977 = vcmp.eq.s32.totalorder %v3901, %v357
        %vm3978 = vcmp.eq.s32.totalorder %v3904, %v357
        %vm3979 = vcmp.eq.s32.totalorder %v3907, %v357
        %vm3980 = vcmp.eq.s32.totalorder %v3910, %v357
        %vm3981 = vcmp.eq.s32.totalorder %v3913, %v357
        %vm3982 = vcmp.eq.s32.totalorder %v3916, %v357
        %vm3983 = vcmp.eq.s32.totalorder %v3919, %v357
        %vm3984 = vcmp.eq.s32.totalorder %v3922, %v357
        %vm3985 = vcmp.eq.s32.totalorder %v3925, %v357
        %vm3986 = vcmp.eq.s32.totalorder %v3928, %v357
        %vm3987 = vcmp.eq.s32.totalorder %v3931, %v357
        %vm3988 = vcmp.eq.s32.totalorder %v3934, %v357
        %vm3989 = vcmp.eq.s32.totalorder %v3937, %v357
        %vm3990 = vcmp.eq.s32.totalorder %v3940, %v357
        %vm3991 = vcmp.eq.s32.totalorder %v3943, %v357
        %vm3992 = vcmp.eq.s32.totalorder %v3946, %v357
        %vm3993 = vcmp.eq.s32.totalorder %v3949, %v357
        %vm3994 = vcmp.eq.s32.totalorder %v3952, %v357
        %vm3995 = vcmp.eq.s32.totalorder %v3955, %v357
        %vm3996 = vcmp.eq.s32.totalorder %v3958, %v357
        %vm3997 = vcmp.eq.s32.totalorder %v3961, %v357
        %vm3998 = vcmp.eq.s32.totalorder %v3964, %v357
        %vm3999 = vcmp.eq.s32.totalorder %v3967, %v357
        %v4000 = vsel %vm3968, 1, 0
        %v4001 = vsel %vm3969, 1, 0
        %v4002 = vsel %vm3970, 1, 0
        %v4003 = vsel %vm3971, 1, 0
        %v4004 = vsel %vm3972, 1, 0
        %v4005 = vsel %vm3973, 1, 0
        %v4006 = vsel %vm3974, 1, 0
        %v4007 = vsel %vm3975, 1, 0
        %v4008 = vsel %vm3976, 1, 0
        %v4009 = vsel %vm3977, 1, 0
        %v4010 = vsel %vm3978, 1, 0
        %v4011 = vsel %vm3979, 1, 0
        %v4012 = vsel %vm3980, 1, 0
        %v4013 = vsel %vm3981, 1, 0
        %v4014 = vsel %vm3982, 1, 0
        %v4015 = vsel %vm3983, 1, 0
        %v4016 = vsel %vm3984, 1, 0
        %v4017 = vsel %vm3985, 1, 0
        %v4018 = vsel %vm3986, 1, 0
        %v4019 = vsel %vm3987, 1, 0
        %v4020 = vsel %vm3988, 1, 0
        %v4021 = vsel %vm3989, 1, 0
        %v4022 = vsel %vm3990, 1, 0
        %v4023 = vsel %vm3991, 1, 0
        %v4024 = vsel %vm3992, 1, 0
        %v4025 = vsel %vm3993, 1, 0
        %v4026 = vsel %vm3994, 1, 0
        %v4027 = vsel %vm3995, 1, 0
        %v4028 = vsel %vm3996, 1, 0
        %v4029 = vsel %vm3997, 1, 0
        %v4030 = vsel %vm3998, 1, 0
        %v4031 = vsel %vm3999, 1, 0
        %v4032 = vcvt.s32.f32 %v4000
        %v4033 = vcvt.s32.f32 %v4001
        %v4034 = vcvt.s32.f32 %v4002
        %v4035 = vcvt.s32.f32 %v4003
        %v4036 = vcvt.s32.f32 %v4004
        %v4037 = vcvt.s32.f32 %v4005
        %v4038 = vcvt.s32.f32 %v4006
        %v4039 = vcvt.s32.f32 %v4007
        %v4040 = vcvt.s32.f32 %v4008
        %v4041 = vcvt.s32.f32 %v4009
        %v4042 = vcvt.s32.f32 %v4010
        %v4043 = vcvt.s32.f32 %v4011
        %v4044 = vcvt.s32.f32 %v4012
        %v4045 = vcvt.s32.f32 %v4013
        %v4046 = vcvt.s32.f32 %v4014
        %v4047 = vcvt.s32.f32 %v4015
        %v4048 = vcvt.s32.f32 %v4016
        %v4049 = vcvt.s32.f32 %v4017
        %v4050 = vcvt.s32.f32 %v4018
        %v4051 = vcvt.s32.f32 %v4019
        %v4052 = vcvt.s32.f32 %v4020
        %v4053 = vcvt.s32.f32 %v4021
        %v4054 = vcvt.s32.f32 %v4022
        %v4055 = vcvt.s32.f32 %v4023
        %v4056 = vcvt.s32.f32 %v4024
        %v4057 = vcvt.s32.f32 %v4025
        %v4058 = vcvt.s32.f32 %v4026
        %v4059 = vcvt.s32.f32 %v4027
        %v4060 = vcvt.s32.f32 %v4028
        %v4061 = vcvt.s32.f32 %v4029
        %v4062 = vcvt.s32.f32 %v4030
        %v4063 = vcvt.s32.f32 %v4031
        %v4064 = vld [vmem:[%s5] sm:$0xff]
        %v4065 = vld [vmem:[%s5 + $0x8] sm:$0xff]
        %v4066 = vld [vmem:[%s5 + $0x10] sm:$0xff]
        %v4067 = vld [vmem:[%s5 + $0x18] sm:$0xff]
        %v4068 = vld [vmem:[%s5 + $0x20] sm:$0xff]
        %v4069 = vld [vmem:[%s5 + $0x28] sm:$0xff]
        %v4070 = vld [vmem:[%s5 + $0x30] sm:$0xff]
        %v4071 = vld [vmem:[%s5 + $0x38] sm:$0xff]
        %v4072 = vld [vmem:[%s5 + $0x40] sm:$0xff]
        %v4073 = vld [vmem:[%s5 + $0x48] sm:$0xff]
        %v4074 = vld [vmem:[%s5 + $0x50] sm:$0xff]
        %v4075 = vld [vmem:[%s5 + $0x58] sm:$0xff]
        %v4076 = vld [vmem:[%s5 + $0x60] sm:$0xff]
        %v4077 = vld [vmem:[%s5 + $0x68] sm:$0xff]
        %v4078 = vld [vmem:[%s5 + $0x70] sm:$0xff]
        %v4079 = vld [vmem:[%s5 + $0x78] sm:$0xff]
        %4080 = vmatprep.subr.mxu0 0.0
        %4081 = vmatpush1.msra.mxu0 %v4079
        %4082 = vmatprep.subr.mxu0 0.0
        %4083 = vmatpush1.msra.mxu0 %v4078
        %4084 = vmatprep.subr.mxu0 0.0
        %4085 = vmatpush1.msra.mxu0 %v4077
        %4086 = vmatprep.subr.mxu0 0.0
        %4087 = vmatpush1.msra.mxu0 %v4076
        %4088 = vmatprep.subr.mxu0 0.0
        %4089 = vmatpush1.msra.mxu0 %v4075
        %4090 = vmatprep.subr.mxu0 0.0
        %4091 = vmatpush1.msra.mxu0 %v4074
        %4092 = vmatprep.subr.mxu0 0.0
        %4093 = vmatpush1.msra.mxu0 %v4073
        %4094 = vmatprep.subr.mxu0 0.0
        %4095 = vmatpush1.msra.mxu0 %v4072
        %4096 = vmatprep.subr.mxu0 0.0
        %4097 = vmatpush1.msra.mxu0 %v4071
        %4098 = vmatprep.subr.mxu0 0.0
        %4099 = vmatpush1.msra.mxu0 %v4070
        %4100 = vmatprep.subr.mxu0 0.0
        %4101 = vmatpush1.msra.mxu0 %v4069
        %4102 = vmatprep.subr.mxu0 0.0
        %4103 = vmatpush1.msra.mxu0 %v4068
        %4104 = vmatprep.subr.mxu0 0.0
        %4105 = vmatpush1.msra.mxu0 %v4067
        %4106 = vmatprep.subr.mxu0 0.0
        %4107 = vmatpush1.msra.mxu0 %v4066
        %4108 = vmatprep.subr.mxu0 0.0
        %4109 = vmatpush1.msra.mxu0 %v4065
        %4110 = vmatprep.subr.mxu0 0.0
        %4111 = vmatpush1.msra.mxu0 %v4064
        %4112 = vmatprep.subr.mxu0 0.0
        %4113 = vmatpush2.msra.mxu0 0.0
        %4114 = vmatprep.subr.mxu0 0.0
        %4115 = vmatpush2.msra.mxu0 0.0
        %4116 = vmatprep.subr.mxu0 0.0
        %4117 = vmatpush2.msra.mxu0 0.0
        %4118 = vmatprep.subr.mxu0 0.0
        %4119 = vmatpush2.msra.mxu0 0.0
        %4120 = vmatprep.subr.mxu0 0.0
        %4121 = vmatpush2.msra.mxu0 0.0
        %4122 = vmatprep.subr.mxu0 0.0
        %4123 = vmatpush2.msra.mxu0 0.0
        %4124 = vmatprep.subr.mxu0 0.0
        %4125 = vmatpush2.msra.mxu0 0.0
        %4126 = vmatprep.subr.mxu0 0.0
        %4127 = vmatpush2.msra.mxu0 0.0
        %4128 = vmatprep.subr.mxu0 0.0
        %4129 = vmatpush2.msra.mxu0 0.0
        %4130 = vmatprep.subr.mxu0 0.0
        %4131 = vmatpush2.msra.mxu0 0.0
        %4132 = vmatprep.subr.mxu0 0.0
        %4133 = vmatpush2.msra.mxu0 0.0
        %4134 = vmatprep.subr.mxu0 0.0
        %4135 = vmatpush2.msra.mxu0 0.0
        %4136 = vmatprep.subr.mxu0 0.0
        %4137 = vmatpush2.msra.mxu0 0.0
        %4138 = vmatprep.subr.mxu0 0.0
        %4139 = vmatpush2.msra.mxu0 0.0
        %4140 = vmatprep.subr.mxu0 0.0
        %4141 = vmatpush2.msra.mxu0 0.0
        %4142 = vmatprep.subr.mxu0 0.0
        %4143 = vmatpush2.msra.mxu0 0.0
        %4144 = vmatprep.mubr.f32.mxu0 0.0
        %4145 = vmatmul.mubr.f32.gmra.mxu0 %v4032
        %v4146 = vpop.f32.mrf.mxu0
        %v4147 = vadd.f32 0.0, %v4146
        %v4148 = vpop.f32.mrf.mxu0
        %4149 = vmatprep.mubr.f32.mxu0 0.0
        %4150 = vmatmul.mubr.f32.gmra.mxu0 %v4033
        %v4151 = vpop.f32.mrf.mxu0
        %v4152 = vadd.f32 0.0, %v4151
        %v4153 = vpop.f32.mrf.mxu0
        %4154 = vmatprep.mubr.f32.mxu0 0.0
        %4155 = vmatmul.mubr.f32.gmra.mxu0 %v4034
        %v4156 = vpop.f32.mrf.mxu0
        %v4157 = vadd.f32 0.0, %v4156
        %v4158 = vpop.f32.mrf.mxu0
        %4159 = vmatprep.mubr.f32.mxu0 0.0
        %4160 = vmatmul.mubr.f32.gmra.mxu0 %v4035
        %v4161 = vpop.f32.mrf.mxu0
        %v4162 = vadd.f32 0.0, %v4161
        %v4163 = vpop.f32.mrf.mxu0
        %4164 = vmatprep.mubr.f32.mxu0 0.0
        %4165 = vmatmul.mubr.f32.gmra.mxu0 %v4036
        %v4166 = vpop.f32.mrf.mxu0
        %v4167 = vadd.f32 0.0, %v4166
        %v4168 = vpop.f32.mrf.mxu0
        %4169 = vmatprep.mubr.f32.mxu0 0.0
        %4170 = vmatmul.mubr.f32.gmra.mxu0 %v4037
        %v4171 = vpop.f32.mrf.mxu0
        %v4172 = vadd.f32 0.0, %v4171
        %v4173 = vpop.f32.mrf.mxu0
        %4174 = vmatprep.mubr.f32.mxu0 0.0
        %4175 = vmatmul.mubr.f32.gmra.mxu0 %v4038
        %v4176 = vpop.f32.mrf.mxu0
        %v4177 = vadd.f32 0.0, %v4176
        %v4178 = vpop.f32.mrf.mxu0
        %4179 = vmatprep.mubr.f32.mxu0 0.0
        %4180 = vmatmul.mubr.f32.gmra.mxu0 %v4039
        %v4181 = vpop.f32.mrf.mxu0
        %v4182 = vadd.f32 0.0, %v4181
        %v4183 = vpop.f32.mrf.mxu0
        %4184 = vmatprep.mubr.f32.mxu0 0.0
        %4185 = vmatmul.mubr.f32.gmra.mxu0 %v4040
        %v4186 = vpop.f32.mrf.mxu0
        %v4187 = vadd.f32 0.0, %v4186
        %v4188 = vpop.f32.mrf.mxu0
        %4189 = vmatprep.mubr.f32.mxu0 0.0
        %4190 = vmatmul.mubr.f32.gmra.mxu0 %v4041
        %v4191 = vpop.f32.mrf.mxu0
        %v4192 = vadd.f32 0.0, %v4191
        %v4193 = vpop.f32.mrf.mxu0
        %4194 = vmatprep.mubr.f32.mxu0 0.0
        %4195 = vmatmul.mubr.f32.gmra.mxu0 %v4042
        %v4196 = vpop.f32.mrf.mxu0
        %v4197 = vadd.f32 0.0, %v4196
        %v4198 = vpop.f32.mrf.mxu0
        %4199 = vmatprep.mubr.f32.mxu0 0.0
        %4200 = vmatmul.mubr.f32.gmra.mxu0 %v4043
        %v4201 = vpop.f32.mrf.mxu0
        %v4202 = vadd.f32 0.0, %v4201
        %v4203 = vpop.f32.mrf.mxu0
        %4204 = vmatprep.mubr.f32.mxu0 0.0
        %4205 = vmatmul.mubr.f32.gmra.mxu0 %v4044
        %v4206 = vpop.f32.mrf.mxu0
        %v4207 = vadd.f32 0.0, %v4206
        %v4208 = vpop.f32.mrf.mxu0
        %4209 = vmatprep.mubr.f32.mxu0 0.0
        %4210 = vmatmul.mubr.f32.gmra.mxu0 %v4045
        %v4211 = vpop.f32.mrf.mxu0
        %v4212 = vadd.f32 0.0, %v4211
        %v4213 = vpop.f32.mrf.mxu0
        %4214 = vmatprep.mubr.f32.mxu0 0.0
        %4215 = vmatmul.mubr.f32.gmra.mxu0 %v4046
        %v4216 = vpop.f32.mrf.mxu0
        %v4217 = vadd.f32 0.0, %v4216
        %v4218 = vpop.f32.mrf.mxu0
        %4219 = vmatprep.mubr.f32.mxu0 0.0
        %4220 = vmatmul.mubr.f32.gmra.mxu0 %v4047
        %v4221 = vpop.f32.mrf.mxu0
        %v4222 = vadd.f32 0.0, %v4221
        %v4223 = vpop.f32.mrf.mxu0
        %4224 = vmatprep.mubr.f32.mxu0 0.0
        %4225 = vmatmul.mubr.f32.gmra.mxu0 %v4048
        %v4226 = vpop.f32.mrf.mxu0
        %v4227 = vadd.f32 0.0, %v4226
        %v4228 = vpop.f32.mrf.mxu0
        %4229 = vmatprep.mubr.f32.mxu0 0.0
        %4230 = vmatmul.mubr.f32.gmra.mxu0 %v4049
        %v4231 = vpop.f32.mrf.mxu0
        %v4232 = vadd.f32 0.0, %v4231
        %v4233 = vpop.f32.mrf.mxu0
        %4234 = vmatprep.mubr.f32.mxu0 0.0
        %4235 = vmatmul.mubr.f32.gmra.mxu0 %v4050
        %v4236 = vpop.f32.mrf.mxu0
        %v4237 = vadd.f32 0.0, %v4236
        %v4238 = vpop.f32.mrf.mxu0
        %4239 = vmatprep.mubr.f32.mxu0 0.0
        %4240 = vmatmul.mubr.f32.gmra.mxu0 %v4051
        %v4241 = vpop.f32.mrf.mxu0
        %v4242 = vadd.f32 0.0, %v4241
        %v4243 = vpop.f32.mrf.mxu0
        %4244 = vmatprep.mubr.f32.mxu0 0.0
        %4245 = vmatmul.mubr.f32.gmra.mxu0 %v4052
        %v4246 = vpop.f32.mrf.mxu0
        %v4247 = vadd.f32 0.0, %v4246
        %v4248 = vpop.f32.mrf.mxu0
        %4249 = vmatprep.mubr.f32.mxu0 0.0
        %4250 = vmatmul.mubr.f32.gmra.mxu0 %v4053
        %v4251 = vpop.f32.mrf.mxu0
        %v4252 = vadd.f32 0.0, %v4251
        %v4253 = vpop.f32.mrf.mxu0
        %4254 = vmatprep.mubr.f32.mxu0 0.0
        %4255 = vmatmul.mubr.f32.gmra.mxu0 %v4054
        %v4256 = vpop.f32.mrf.mxu0
        %v4257 = vadd.f32 0.0, %v4256
        %v4258 = vpop.f32.mrf.mxu0
        %4259 = vmatprep.mubr.f32.mxu0 0.0
        %4260 = vmatmul.mubr.f32.gmra.mxu0 %v4055
        %v4261 = vpop.f32.mrf.mxu0
        %v4262 = vadd.f32 0.0, %v4261
        %v4263 = vpop.f32.mrf.mxu0
        %4264 = vmatprep.mubr.f32.mxu0 0.0
        %4265 = vmatmul.mubr.f32.gmra.mxu0 %v4056
        %v4266 = vpop.f32.mrf.mxu0
        %v4267 = vadd.f32 0.0, %v4266
        %v4268 = vpop.f32.mrf.mxu0
        %4269 = vmatprep.mubr.f32.mxu0 0.0
        %4270 = vmatmul.mubr.f32.gmra.mxu0 %v4057
        %v4271 = vpop.f32.mrf.mxu0
        %v4272 = vadd.f32 0.0, %v4271
        %v4273 = vpop.f32.mrf.mxu0
        %4274 = vmatprep.mubr.f32.mxu0 0.0
        %4275 = vmatmul.mubr.f32.gmra.mxu0 %v4058
        %v4276 = vpop.f32.mrf.mxu0
        %v4277 = vadd.f32 0.0, %v4276
        %v4278 = vpop.f32.mrf.mxu0
        %4279 = vmatprep.mubr.f32.mxu0 0.0
        %4280 = vmatmul.mubr.f32.gmra.mxu0 %v4059
        %v4281 = vpop.f32.mrf.mxu0
        %v4282 = vadd.f32 0.0, %v4281
        %v4283 = vpop.f32.mrf.mxu0
        %4284 = vmatprep.mubr.f32.mxu0 0.0
        %4285 = vmatmul.mubr.f32.gmra.mxu0 %v4060
        %v4286 = vpop.f32.mrf.mxu0
        %v4287 = vadd.f32 0.0, %v4286
        %v4288 = vpop.f32.mrf.mxu0
        %4289 = vmatprep.mubr.f32.mxu0 0.0
        %4290 = vmatmul.mubr.f32.gmra.mxu0 %v4061
        %v4291 = vpop.f32.mrf.mxu0
        %v4292 = vadd.f32 0.0, %v4291
        %v4293 = vpop.f32.mrf.mxu0
        %4294 = vmatprep.mubr.f32.mxu0 0.0
        %4295 = vmatmul.mubr.f32.gmra.mxu0 %v4062
        %v4296 = vpop.f32.mrf.mxu0
        %v4297 = vadd.f32 0.0, %v4296
        %v4298 = vpop.f32.mrf.mxu0
        %4299 = vmatprep.mubr.f32.mxu0 0.0
        %4300 = vmatmul.mubr.f32.gmra.mxu0 %v4063
        %v4301 = vpop.f32.mrf.mxu0
        %v4302 = vadd.f32 0.0, %v4301
        %v4303 = vpop.f32.mrf.mxu0
        %4304 = vdwg.mxu0
        %v4305 = vmul.f32 %v3217, %v3682
        %v4306 = vmul.f32 %v3222, %v3687
        %v4307 = vmul.f32 %v3227, %v3692
        %v4308 = vmul.f32 %v3232, %v3697
        %v4309 = vmul.f32 %v3237, %v3702
        %v4310 = vmul.f32 %v3242, %v3707
        %v4311 = vmul.f32 %v3247, %v3712
        %v4312 = vmul.f32 %v3252, %v3717
        %v4313 = vmul.f32 %v3257, %v3722
        %v4314 = vmul.f32 %v3262, %v3727
        %v4315 = vmul.f32 %v3267, %v3732
        %v4316 = vmul.f32 %v3272, %v3737
        %v4317 = vmul.f32 %v3277, %v3742
        %v4318 = vmul.f32 %v3282, %v3747
        %v4319 = vmul.f32 %v3287, %v3752
        %v4320 = vmul.f32 %v3292, %v3757
        %v4321 = vmul.f32 %v3297, %v3762
        %v4322 = vmul.f32 %v3302, %v3767
        %v4323 = vmul.f32 %v3307, %v3772
        %v4324 = vmul.f32 %v3312, %v3777
        %v4325 = vmul.f32 %v3317, %v3782
        %v4326 = vmul.f32 %v3322, %v3787
        %v4327 = vmul.f32 %v3327, %v3792
        %v4328 = vmul.f32 %v3332, %v3797
        %v4329 = vmul.f32 %v3337, %v3802
        %v4330 = vmul.f32 %v3342, %v3807
        %v4331 = vmul.f32 %v3347, %v3812
        %v4332 = vmul.f32 %v3352, %v3817
        %v4333 = vmul.f32 %v3357, %v3822
        %v4334 = vmul.f32 %v3362, %v3827
        %v4335 = vmul.f32 %v3367, %v3832
        %v4336 = vmul.f32 %v3372, %v3837
        %v4337 = vxor.u32 %v4147, 2147483648
        %v4338 = vxor.u32 %v4152, 2147483648
        %v4339 = vxor.u32 %v4157, 2147483648
        %v4340 = vxor.u32 %v4162, 2147483648
        %v4341 = vxor.u32 %v4167, 2147483648
        %v4342 = vxor.u32 %v4172, 2147483648
        %v4343 = vxor.u32 %v4177, 2147483648
        %v4344 = vxor.u32 %v4182, 2147483648
        %v4345 = vxor.u32 %v4187, 2147483648
        %v4346 = vxor.u32 %v4192, 2147483648
        %v4347 = vxor.u32 %v4197, 2147483648
        %v4348 = vxor.u32 %v4202, 2147483648
        %v4349 = vxor.u32 %v4207, 2147483648
        %v4350 = vxor.u32 %v4212, 2147483648
        %v4351 = vxor.u32 %v4217, 2147483648
        %v4352 = vxor.u32 %v4222, 2147483648
        %v4353 = vxor.u32 %v4227, 2147483648
        %v4354 = vxor.u32 %v4232, 2147483648
        %v4355 = vxor.u32 %v4237, 2147483648
        %v4356 = vxor.u32 %v4242, 2147483648
        %v4357 = vxor.u32 %v4247, 2147483648
        %v4358 = vxor.u32 %v4252, 2147483648
        %v4359 = vxor.u32 %v4257, 2147483648
        %v4360 = vxor.u32 %v4262, 2147483648
        %v4361 = vxor.u32 %v4267, 2147483648
        %v4362 = vxor.u32 %v4272, 2147483648
        %v4363 = vxor.u32 %v4277, 2147483648
        %v4364 = vxor.u32 %v4282, 2147483648
        %v4365 = vxor.u32 %v4287, 2147483648
        %v4366 = vxor.u32 %v4292, 2147483648
        %v4367 = vxor.u32 %v4297, 2147483648
        %v4368 = vxor.u32 %v4302, 2147483648
        %v4369 = vmul.f32 %v4337, 1.442695
        %v4370 = vpow.pop %v4369
        %v4371 = vmul.f32 %v4338, 1.442695
        %v4372 = vpow.pop %v4371
        %v4373 = vmul.f32 %v4339, 1.442695
        %v4374 = vpow.pop %v4373
        %v4375 = vmul.f32 %v4340, 1.442695
        %v4376 = vpow.pop %v4375
        %v4377 = vmul.f32 %v4341, 1.442695
        %v4378 = vpow.pop %v4377
        %v4379 = vmul.f32 %v4342, 1.442695
        %v4380 = vpow.pop %v4379
        %v4381 = vmul.f32 %v4343, 1.442695
        %v4382 = vpow.pop %v4381
        %v4383 = vmul.f32 %v4344, 1.442695
        %v4384 = vpow.pop %v4383
        %v4385 = vmul.f32 %v4345, 1.442695
        %v4386 = vpow.pop %v4385
        %v4387 = vmul.f32 %v4346, 1.442695
        %v4388 = vpow.pop %v4387
        %v4389 = vmul.f32 %v4347, 1.442695
        %v4390 = vpow.pop %v4389
        %v4391 = vmul.f32 %v4348, 1.442695
        %v4392 = vpow.pop %v4391
        %v4393 = vmul.f32 %v4349, 1.442695
        %v4394 = vpow.pop %v4393
        %v4395 = vmul.f32 %v4350, 1.442695
        %v4396 = vpow.pop %v4395
        %v4397 = vmul.f32 %v4351, 1.442695
        %v4398 = vpow.pop %v4397
        %v4399 = vmul.f32 %v4352, 1.442695
        %v4400 = vpow.pop %v4399
        %v4401 = vmul.f32 %v4353, 1.442695
        %v4402 = vpow.pop %v4401
        %v4403 = vmul.f32 %v4354, 1.442695
        %v4404 = vpow.pop %v4403
        %v4405 = vmul.f32 %v4355, 1.442695
        %v4406 = vpow.pop %v4405
        %v4407 = vmul.f32 %v4356, 1.442695
        %v4408 = vpow.pop %v4407
        %v4409 = vmul.f32 %v4357, 1.442695
        %v4410 = vpow.pop %v4409
        %v4411 = vmul.f32 %v4358, 1.442695
        %v4412 = vpow.pop %v4411
        %v4413 = vmul.f32 %v4359, 1.442695
        %v4414 = vpow.pop %v4413
        %v4415 = vmul.f32 %v4360, 1.442695
        %v4416 = vpow.pop %v4415
        %v4417 = vmul.f32 %v4361, 1.442695
        %v4418 = vpow.pop %v4417
        %v4419 = vmul.f32 %v4362, 1.442695
        %v4420 = vpow.pop %v4419
        %v4421 = vmul.f32 %v4363, 1.442695
        %v4422 = vpow.pop %v4421
        %v4423 = vmul.f32 %v4364, 1.442695
        %v4424 = vpow.pop %v4423
        %v4425 = vmul.f32 %v4365, 1.442695
        %v4426 = vpow.pop %v4425
        %v4427 = vmul.f32 %v4366, 1.442695
        %v4428 = vpow.pop %v4427
        %v4429 = vmul.f32 %v4367, 1.442695
        %v4430 = vpow.pop %v4429
        %v4431 = vmul.f32 %v4368, 1.442695
        %v4432 = vpow.pop %v4431
        %v4433 = vadd.f32 %v4370, 1.0
        %v4434 = vadd.f32 %v4372, 1.0
        %v4435 = vadd.f32 %v4374, 1.0
        %v4436 = vadd.f32 %v4376, 1.0
        %v4437 = vadd.f32 %v4378, 1.0
        %v4438 = vadd.f32 %v4380, 1.0
        %v4439 = vadd.f32 %v4382, 1.0
        %v4440 = vadd.f32 %v4384, 1.0
        %v4441 = vadd.f32 %v4386, 1.0
        %v4442 = vadd.f32 %v4388, 1.0
        %v4443 = vadd.f32 %v4390, 1.0
        %v4444 = vadd.f32 %v4392, 1.0
        %v4445 = vadd.f32 %v4394, 1.0
        %v4446 = vadd.f32 %v4396, 1.0
        %v4447 = vadd.f32 %v4398, 1.0
        %v4448 = vadd.f32 %v4400, 1.0
        %v4449 = vadd.f32 %v4402, 1.0
        %v4450 = vadd.f32 %v4404, 1.0
        %v4451 = vadd.f32 %v4406, 1.0
        %v4452 = vadd.f32 %v4408, 1.0
        %v4453 = vadd.f32 %v4410, 1.0
        %v4454 = vadd.f32 %v4412, 1.0
        %v4455 = vadd.f32 %v4414, 1.0
        %v4456 = vadd.f32 %v4416, 1.0
        %v4457 = vadd.f32 %v4418, 1.0
        %v4458 = vadd.f32 %v4420, 1.0
        %v4459 = vadd.f32 %v4422, 1.0
        %v4460 = vadd.f32 %v4424, 1.0
        %v4461 = vadd.f32 %v4426, 1.0
        %v4462 = vadd.f32 %v4428, 1.0
        %v4463 = vadd.f32 %v4430, 1.0
        %v4464 = vadd.f32 %v4432, 1.0
        %v4465 = vrcp.pop %v4433
        %v4466 = vmul.f32 1.0, %v4465
        %v4467 = vrcp.pop %v4434
        %v4468 = vmul.f32 1.0, %v4467
        %v4469 = vrcp.pop %v4435
        %v4470 = vmul.f32 1.0, %v4469
        %v4471 = vrcp.pop %v4436
        %v4472 = vmul.f32 1.0, %v4471
        %v4473 = vrcp.pop %v4437
        %v4474 = vmul.f32 1.0, %v4473
        %v4475 = vrcp.pop %v4438
        %v4476 = vmul.f32 1.0, %v4475
        %v4477 = vrcp.pop %v4439
        %v4478 = vmul.f32 1.0, %v4477
        %v4479 = vrcp.pop %v4440
        %v4480 = vmul.f32 1.0, %v4479
        %v4481 = vrcp.pop %v4441
        %v4482 = vmul.f32 1.0, %v4481
        %v4483 = vrcp.pop %v4442
        %v4484 = vmul.f32 1.0, %v4483
        %v4485 = vrcp.pop %v4443
        %v4486 = vmul.f32 1.0, %v4485
        %v4487 = vrcp.pop %v4444
        %v4488 = vmul.f32 1.0, %v4487
        %v4489 = vrcp.pop %v4445
        %v4490 = vmul.f32 1.0, %v4489
        %v4491 = vrcp.pop %v4446
        %v4492 = vmul.f32 1.0, %v4491
        %v4493 = vrcp.pop %v4447
        %v4494 = vmul.f32 1.0, %v4493
        %v4495 = vrcp.pop %v4448
        %v4496 = vmul.f32 1.0, %v4495
        %v4497 = vrcp.pop %v4449
        %v4498 = vmul.f32 1.0, %v4497
        %v4499 = vrcp.pop %v4450
        %v4500 = vmul.f32 1.0, %v4499
        %v4501 = vrcp.pop %v4451
        %v4502 = vmul.f32 1.0, %v4501
        %v4503 = vrcp.pop %v4452
        %v4504 = vmul.f32 1.0, %v4503
        %v4505 = vrcp.pop %v4453
        %v4506 = vmul.f32 1.0, %v4505
        %v4507 = vrcp.pop %v4454
        %v4508 = vmul.f32 1.0, %v4507
        %v4509 = vrcp.pop %v4455
        %v4510 = vmul.f32 1.0, %v4509
        %v4511 = vrcp.pop %v4456
        %v4512 = vmul.f32 1.0, %v4511
        %v4513 = vrcp.pop %v4457
        %v4514 = vmul.f32 1.0, %v4513
        %v4515 = vrcp.pop %v4458
        %v4516 = vmul.f32 1.0, %v4515
        %v4517 = vrcp.pop %v4459
        %v4518 = vmul.f32 1.0, %v4517
        %v4519 = vrcp.pop %v4460
        %v4520 = vmul.f32 1.0, %v4519
        %v4521 = vrcp.pop %v4461
        %v4522 = vmul.f32 1.0, %v4521
        %v4523 = vrcp.pop %v4462
        %v4524 = vmul.f32 1.0, %v4523
        %v4525 = vrcp.pop %v4463
        %v4526 = vmul.f32 1.0, %v4525
        %v4527 = vrcp.pop %v4464
        %v4528 = vmul.f32 1.0, %v4527
        %v4529 = vmul.f32 %v4305, %v4466
        %v4530 = vmul.f32 %v4306, %v4468
        %v4531 = vmul.f32 %v4307, %v4470
        %v4532 = vmul.f32 %v4308, %v4472
        %v4533 = vmul.f32 %v4309, %v4474
        %v4534 = vmul.f32 %v4310, %v4476
        %v4535 = vmul.f32 %v4311, %v4478
        %v4536 = vmul.f32 %v4312, %v4480
        %v4537 = vmul.f32 %v4313, %v4482
        %v4538 = vmul.f32 %v4314, %v4484
        %v4539 = vmul.f32 %v4315, %v4486
        %v4540 = vmul.f32 %v4316, %v4488
        %v4541 = vmul.f32 %v4317, %v4490
        %v4542 = vmul.f32 %v4318, %v4492
        %v4543 = vmul.f32 %v4319, %v4494
        %v4544 = vmul.f32 %v4320, %v4496
        %v4545 = vmul.f32 %v4321, %v4498
        %v4546 = vmul.f32 %v4322, %v4500
        %v4547 = vmul.f32 %v4323, %v4502
        %v4548 = vmul.f32 %v4324, %v4504
        %v4549 = vmul.f32 %v4325, %v4506
        %v4550 = vmul.f32 %v4326, %v4508
        %v4551 = vmul.f32 %v4327, %v4510
        %v4552 = vmul.f32 %v4328, %v4512
        %v4553 = vmul.f32 %v4329, %v4514
        %v4554 = vmul.f32 %v4330, %v4516
        %v4555 = vmul.f32 %v4331, %v4518
        %v4556 = vmul.f32 %v4332, %v4520
        %v4557 = vmul.f32 %v4333, %v4522
        %v4558 = vmul.f32 %v4334, %v4524
        %v4559 = vmul.f32 %v4335, %v4526
        %v4560 = vmul.f32 %v4336, %v4528
        %vm4561 = vcmask 261120
        %v4563 = vsel %vm4561, 1.0, 0
        %v4566 = vsel %vm4561, %v4529, 0
        %v4569 = vsel %vm4561, %v4530, 0
        %v4572 = vsel %vm4561, %v4531, 0
        %v4575 = vsel %vm4561, %v4532, 0
        %v4578 = vsel %vm4561, %v4533, 0
        %v4581 = vsel %vm4561, %v4534, 0
        %v4584 = vsel %vm4561, %v4535, 0
        %v4587 = vsel %vm4561, %v4536, 0
        %v4590 = vsel %vm4561, %v4537, 0
        %v4593 = vsel %vm4561, %v4538, 0
        %v4596 = vsel %vm4561, %v4539, 0
        %v4599 = vsel %vm4561, %v4540, 0
        %v4602 = vsel %vm4561, %v4541, 0
        %v4605 = vsel %vm4561, %v4542, 0
        %v4608 = vsel %vm4561, %v4543, 0
        %v4611 = vsel %vm4561, %v4544, 0
        %v4614 = vsel %vm4561, %v4545, 0
        %v4617 = vsel %vm4561, %v4546, 0
        %v4620 = vsel %vm4561, %v4547, 0
        %v4623 = vsel %vm4561, %v4548, 0
        %v4626 = vsel %vm4561, %v4549, 0
        %v4629 = vsel %vm4561, %v4550, 0
        %v4632 = vsel %vm4561, %v4551, 0
        %v4635 = vsel %vm4561, %v4552, 0
        %v4638 = vsel %vm4561, %v4553, 0
        %v4641 = vsel %vm4561, %v4554, 0
        %v4644 = vsel %vm4561, %v4555, 0
        %v4647 = vsel %vm4561, %v4556, 0
        %v4650 = vsel %vm4561, %v4557, 0
        %v4653 = vsel %vm4561, %v4558, 0
        %v4656 = vsel %vm4561, %v4559, 0
        %v4659 = vsel %vm4561, %v4560, 0
        %4661 = vmatprep.subr.mxu0 0.0
        %4662 = vmatpush1.xpose.msra.mxu0 %v4611
        %4663 = vmatprep.subr.mxu0 0.0
        %4664 = vmatpush1.xpose.msra.mxu0 %v4608
        %4665 = vmatprep.subr.mxu0 0.0
        %4666 = vmatpush1.xpose.msra.mxu0 %v4605
        %4667 = vmatprep.subr.mxu0 0.0
        %4668 = vmatpush1.xpose.msra.mxu0 %v4602
        %4669 = vmatprep.subr.mxu0 0.0
        %4670 = vmatpush1.xpose.msra.mxu0 %v4599
        %4671 = vmatprep.subr.mxu0 0.0
        %4672 = vmatpush1.xpose.msra.mxu0 %v4596
        %4673 = vmatprep.subr.mxu0 0.0
        %4674 = vmatpush1.xpose.msra.mxu0 %v4593
        %4675 = vmatprep.subr.mxu0 0.0
        %4676 = vmatpush1.xpose.msra.mxu0 %v4590
        %4677 = vmatprep.subr.mxu0 0.0
        %4678 = vmatpush1.xpose.msra.mxu0 %v4587
        %4679 = vmatprep.subr.mxu0 0.0
        %4680 = vmatpush1.xpose.msra.mxu0 %v4584
        %4681 = vmatprep.subr.mxu0 0.0
        %4682 = vmatpush1.xpose.msra.mxu0 %v4581
        %4683 = vmatprep.subr.mxu0 0.0
        %4684 = vmatpush1.xpose.msra.mxu0 %v4578
        %4685 = vmatprep.subr.mxu0 0.0
        %4686 = vmatpush1.xpose.msra.mxu0 %v4575
        %4687 = vmatprep.subr.mxu0 0.0
        %4688 = vmatpush1.xpose.msra.mxu0 %v4572
        %4689 = vmatprep.subr.mxu0 0.0
        %4690 = vmatpush1.xpose.msra.mxu0 %v4569
        %4691 = vmatprep.subr.mxu0 0.0
        %4692 = vmatpush1.xpose.msra.mxu0 %v4566
        %4693 = vmatprep.subr.mxu0 0.0
        %4694 = vmatpush2.xpose.msra.mxu0 %v4659
        %4695 = vmatprep.subr.mxu0 0.0
        %4696 = vmatpush2.xpose.msra.mxu0 %v4656
        %4697 = vmatprep.subr.mxu0 0.0
        %4698 = vmatpush2.xpose.msra.mxu0 %v4653
        %4699 = vmatprep.subr.mxu0 0.0
        %4700 = vmatpush2.xpose.msra.mxu0 %v4650
        %4701 = vmatprep.subr.mxu0 0.0
        %4702 = vmatpush2.xpose.msra.mxu0 %v4647
        %4703 = vmatprep.subr.mxu0 0.0
        %4704 = vmatpush2.xpose.msra.mxu0 %v4644
        %4705 = vmatprep.subr.mxu0 0.0
        %4706 = vmatpush2.xpose.msra.mxu0 %v4641
        %4707 = vmatprep.subr.mxu0 0.0
        %4708 = vmatpush2.xpose.msra.mxu0 %v4638
        %4709 = vmatprep.subr.mxu0 0.0
        %4710 = vmatpush2.xpose.msra.mxu0 %v4635
        %4711 = vmatprep.subr.mxu0 0.0
        %4712 = vmatpush2.xpose.msra.mxu0 %v4632
        %4713 = vmatprep.subr.mxu0 0.0
        %4714 = vmatpush2.xpose.msra.mxu0 %v4629
        %4715 = vmatprep.subr.mxu0 0.0
        %4716 = vmatpush2.xpose.msra.mxu0 %v4626
        %4717 = vmatprep.subr.mxu0 0.0
        %4718 = vmatpush2.xpose.msra.mxu0 %v4623
        %4719 = vmatprep.subr.mxu0 0.0
        %4720 = vmatpush2.xpose.msra.mxu0 %v4620
        %4721 = vmatprep.subr.mxu0 0.0
        %4722 = vmatpush2.xpose.msra.mxu0 %v4617
        %4723 = vmatprep.subr.mxu0 0.0
        %4724 = vmatpush2.xpose.msra.mxu0 %v4614
        %4725 = vmatprep.mubr.f32.mxu0 0.0
        %4726 = vmatmul.mubr.f32.gmra.mxu0 %v4563
        %v4727 = vpop.f32.mrf.mxu0
        %v4728 = vadd.f32 0.0, %v4727
        %v4729 = vpop.f32.mrf.mxu0
        %v4730 = vadd.f32 0.0, %v4729
        %4731 = vdwg.mxu0
        %v4732 = vxor.u32 %v4728, 2147483648
        %v4733 = vxor.u32 %v4730, 2147483648
        %v4734 = vmul.f32 %v4732, 1.442695
        %v4735 = vpow.pop %v4734
        %v4736 = vmul.f32 %v4733, 1.442695
        %v4737 = vpow.pop %v4736
        %v4738 = vadd.f32 %v4735, 1.0
        %v4739 = vadd.f32 %v4737, 1.0
        %v4740 = vrcp.pop %v4738
        %v4741 = vmul.f32 1.0, %v4740
        %v4742 = vrcp.pop %v4739
        %v4743 = vmul.f32 1.0, %v4742
        %v4746 = vcombine.low %v4741, %v4743
        %v4748 = vunpack.c.l.s4 1966171168
        %v4749 = vunpack.c.0.s8 %v4748
        %v4750 = vlaneseq
        %v4751 = vshrl.u32 %v4750, 7
        %v4752 = vsub.s32 %v4749, %v4751
        %v4753 = vrot.slane %v4746, %v4752
        %v4755 = vunpack.c.l.s4 1966171168
        %v4756 = vunpack.c.0.s8 %v4755
        %v4757 = vlaneseq
        %v4758 = vshrl.u32 %v4757, 7
        %v4759 = vsub.s32 %v4756, %v4758
        %v4760 = vrot.slane %v4753, %v4759
        %v4762 = vlaneseq
        %vm4763 = vcmp.ge.s32.totalorder %v4762, 0
        %vm4764 = vcmp.lt.s32.totalorder %v4762, 256
        %vm4765 = vmand %vm4763, %vm4764
        %4766 = vst.msk [vmem:[%s304] sm:$0x3] %vm4765, %v4760
        %s4767 = sand.u32 %s191, 1
        %s4768 = scalar_lea.sflag [#allocation3], %s4767
        %s4769 = sand.u32 %s191, 1
        %s4770 = smul.addr %s4769, 2
        %s4771 = scalar_lea.vmem [#allocation2], %s4770
        // Predicated region
        $region49: #{tpu_custom_call.1} parent=47 // pred_check
          %p4772 = pneg %p201
        $region50: #{tpu_custom_call.1} parent=47 // pred_check_branch
          %4774 = sbr.rel (%p4772) target = $region52
        $region51: #{tpu_custom_call.1} parent=47 // pred_region
          %s4775 = smul.u32 2, %s21
          %s4777 = ssub.s32 32, 32
          %4778 = vsyncadd %s4768, %s4777
          %s4779 = smul.addr %s4775, 16
          %s4780 = scalar_lea.hbm %s7, %s4779
          %s4782 = sshll.u32 %s4771, 4
          %s4783 = int_to_ptr.vmem [resolvable:$true] %s4782
          %4785 = dma.vmem_to_hbm [thread:$0]  %s4783, 32, %s4780, %s4768
        $region52: #{tpu_custom_call.1} parent=47 // pred_fallthru
          _
      $region48: #{tpu_custom_call.1} parent=5 // pred_fallthru
        _
      %p4786 = scmp.le.s32.totalorder 2, %s16
      // Predicated region
      $region53: #{tpu_custom_call.1} parent=5 // pred_check
        %p4787 = pneg %p4786
      $region54: #{tpu_custom_call.1} parent=5 // pred_check_branch
        %4789 = sbr.rel (%p4787) target = $region56
      $region55: #{tpu_custom_call.1} parent=5 // pred_region
        %s4790 = ssub.s32 %s16, 2
        // Predicated region
        $region57: #{tpu_custom_call.1} parent=55 // pred_check
          %p4791 = pneg %p207
        $region58: #{tpu_custom_call.1} parent=55 // pred_check_branch
          %4793 = sbr.rel (%p4791) target = $region60
        $region59: #{tpu_custom_call.1} parent=55 // pred_region
          %s4794 = sand.u32 %s192, 1
          %s4795 = scalar_lea.sflag [#allocation3], %s4794
          %s4796 = sand.u32 %s192, 1
          %s4797 = smul.addr %s4796, 2
          %s4798 = scalar_lea.vmem [#allocation2], %s4797
          %4799 = dma.done %s4795, 32
        $region60: #{tpu_custom_call.1} parent=55 // pred_fallthru
          _
      $region56: #{tpu_custom_call.1} parent=5 // pred_fallthru
        _
    $region6: #{tpu_custom_call.1} parent=1 // loop_footer
      %s20 = sadd.s32 1, %s16
    $region7: #{tpu_custom_call.1} parent=1 // loop_footer_branch
      %15 = sbr.rel target = $region3
    $region8: #{tpu_custom_call.1} parent=1 // loop_exit
      _
    %4800 = vsyncpa [#allocation3], 1
    %s4801 = scalar_lea.sflag [#allocation3], 1
    %4802 = vsyncpa %s4801, 1

</llo_original>
